<compile_context>
chip_gen: v7x
topology: tpu7x:2x2x1
jax: 0.10.0
libtpu: 0.0.40
codegen_flags: <defaults>
</compile_context>

<pallas_src>
import jax
import jax.numpy as jnp
from jax import lax
from jax.experimental import pallas as pl
from jax.experimental.pallas import tpu as pltpu


def _round_up(x, m):
    return (x + m - 1) // m * m


# ----------------------------------------------------------------------------
# Pallas kernels
# ----------------------------------------------------------------------------
def _conv_pool_kernel(x_ref, w_ref, b_ref, o_ref):
    # x_ref: (4, tm, K) -- the 4 conv positions feeding one 2x2 max-pool
    # window, laid out as separate im2col groups.  Fused conv+bias+ReLU+pool.
    w = w_ref[...]
    a0 = jnp.dot(x_ref[0], w, preferred_element_type=jnp.float32)
    a1 = jnp.dot(x_ref[1], w, preferred_element_type=jnp.float32)
    a2 = jnp.dot(x_ref[2], w, preferred_element_type=jnp.float32)
    a3 = jnp.dot(x_ref[3], w, preferred_element_type=jnp.float32)
    m = jnp.maximum(jnp.maximum(a0, a1), jnp.maximum(a2, a3))
    o_ref[...] = jnp.maximum(m + b_ref[...], 0.0).astype(o_ref.dtype)


def _fc12_fused_kernel(x_ref, w1_ref, b1_ref, w2_ref, b2_ref, o_ref):
    # relu(relu(x @ W1 + b1) @ W2 + b2) -- hidden stays in VMEM/vregs.
    h = jnp.dot(x_ref[...], w1_ref[...], preferred_element_type=jnp.float32)
    h = jnp.maximum(h + b1_ref[...], 0.0).astype(jnp.bfloat16)
    o = jnp.dot(h, w2_ref[...], preferred_element_type=jnp.float32)
    o_ref[...] = jnp.maximum(o + b2_ref[...], 0.0)


# ----------------------------------------------------------------------------
# pallas_call wrappers (grid over rows, weights resident across the grid)
# ----------------------------------------------------------------------------
def conv_pool_matmul(groups, w, b, *, tile_m, out_dtype=jnp.bfloat16):
    """Fused conv(+bias+ReLU)+2x2 max-pool as 4 matmuls + elementwise max.

    groups: (4, M, K) bf16 im2col pool-groups, w: (K, N) bf16, b: (1, N) f32.
    Returns (M, N) pooled activations.
    """
    G, M, K = groups.shape
    N = w.shape[1]
    tm = min(tile_m, _round_up(M, 8))
    Mp = _round_up(M, tm)
    if Mp != M:                               # zero rows are harmless
        groups = jnp.pad(groups, ((0, 0), (0, Mp - M), (0, 0)))

    out = pl.pallas_call(
        _conv_pool_kernel,
        out_shape=jax.ShapeDtypeStruct((Mp, N), out_dtype),
        grid=(Mp // tm,),
        in_specs=[
            pl.BlockSpec((G, tm, K), lambda i: (0, i, 0)),   # patches: tiled over rows
            pl.BlockSpec((K, N), lambda i: (0, 0)),          # weights: resident
            pl.BlockSpec((1, N), lambda i: (0, 0)),          # bias: resident
        ],
        out_specs=pl.BlockSpec((tm, N), lambda i: (i, 0)),
        compiler_params=pltpu.CompilerParams(dimension_semantics=("parallel",)),
    )(groups, w, b)
    return out[:M] if Mp != M else out


def fc12_fused(flat, w1, b1, w2, b2, *, tile_m=256):
    """Fused fc1+fc2: relu(relu(flat@w1+b1)@w2+b2); lane-dense (M,128) output."""
    M, K = flat.shape
    H = w1.shape[1]
    N = w2.shape[1]
    tm = min(tile_m, _round_up(M, 8))
    Mp = _round_up(M, tm)
    if Mp != M:
        flat = jnp.pad(flat, ((0, Mp - M), (0, 0)))

    out = pl.pallas_call(
        _fc12_fused_kernel,
        out_shape=jax.ShapeDtypeStruct((Mp, N), jnp.float32),
        grid=(Mp // tm,),
        in_specs=[
            pl.BlockSpec((tm, K), lambda i: (i, 0)),
            pl.BlockSpec((K, H), lambda i: (0, 0)),
            pl.BlockSpec((1, H), lambda i: (0, 0)),
            pl.BlockSpec((H, N), lambda i: (0, 0)),
            pl.BlockSpec((1, N), lambda i: (0, 0)),
        ],
        out_specs=pl.BlockSpec((tm, N), lambda i: (i, 0)),
        compiler_params=pltpu.CompilerParams(dimension_semantics=("parallel",)),
    )(flat, w1, b1, w2, b2)
    return out[:M]


# ----------------------------------------------------------------------------
# One-time weight packing (outside the traced forward): casts to bf16, folds
# PyTorch's (C,kh,kw) conv flattening and the NCHW x.view(-1,800) flatten into
# the weight layouts, pads only fc2's N to 128 for a lane-dense final store.
# ----------------------------------------------------------------------------
def pack_params(params):
    bf16, f32 = jnp.bfloat16, jnp.float32
    # conv1: (20,1,5,5) -> (25,20); patch features ordered (kh,kw) (C==1).
    w1 = params["conv1_w"].reshape(20, 25).T.astype(bf16)
    b1 = params["conv1_b"].reshape(1, 20).astype(f32)
    # conv2: (50,20,5,5) -> (kh,kw,ic,oc) -> (500,50); matches NHWC im2col
    # feature order (kh,kw,C).
    w2 = params["conv2_w"].transpose(2, 3, 1, 0).reshape(500, 50).astype(bf16)
    b2 = params["conv2_b"].reshape(1, 50).astype(f32)
    # fc1: permute input features so it consumes the NHWC-flattened (B,4,4,50)
    # pooled activations directly (no NHWC->NCHW transpose in the forward).
    w3 = (params["fc1_w"].reshape(500, 50, 4, 4)
          .transpose(2, 3, 1, 0).reshape(800, 500).astype(bf16))
    b3 = params["fc1_b"].reshape(1, 500).astype(f32)
    # fc2: pad N 10 -> 128 so the kernel's final store is lane-dense.
    w4 = jnp.zeros((500, 128), bf16).at[:, :10].set(params["fc2_w"].T.astype(bf16))
    b4 = jnp.zeros((1, 128), f32).at[0, :10].set(params["fc2_b"].astype(f32))
    return {"w1": w1, "b1": b1, "w2": w2, "b2": b2,
            "w3": w3, "b3": b3, "w4": w4, "b4": b4}


# ----------------------------------------------------------------------------
# XLA glue: im2col "pool-group" extraction (valid conv, stride 1, then 2x2/2
# pool).  Group (di,dj) holds, for every pooled output position (i,j), the
# patch of the conv output position (2i+di, 2j+dj).
# ----------------------------------------------------------------------------
def _im2col_pool_groups_1ch(x, k, pool_out):
    """x: (B,H,W) -> (4, B*pool_out^2, k*k), feature order (kh,kw)."""
    B = x.shape[0]
    span = 2 * pool_out - 1
    groups = []
    for di in range(2):
        for dj in range(2):
            cols = [x[:, di + kh: di + kh + span: 2, dj + kw: dj + kw + span: 2]
                    for kh in range(k) for kw in range(k)]
            groups.append(jnp.stack(cols, axis=-1)
                          .reshape(B * pool_out * pool_out, k * k))
    return jnp.stack(groups, axis=0)


def _im2col_pool_groups_nhwc(x, k, pool_out):
    """x: (B,H,W,C) -> (4, B*pool_out^2, k*k*C), feature order (kh,kw,C)."""
    B, _, _, C = x.shape
    span = 2 * pool_out - 1
    groups = []
    for di in range(2):
        for dj in range(2):
            cols = [x[:, di + kh: di + kh + span: 2, dj + kw: dj + kw + span: 2, :]
                    for kh in range(k) for kw in range(k)]
            groups.append(jnp.concatenate(cols, axis=-1)
                          .reshape(B * pool_out * pool_out, k * k * C))
    return jnp.stack(groups, axis=0)


# ----------------------------------------------------------------------------
# LeNet forward (matches the PyTorch module, incl. the ReLU after fc2).
# ----------------------------------------------------------------------------
def lenet_forward(x, pk):
    B = x.shape[0]
    x = x.astype(jnp.bfloat16).reshape(B, 28, 28)               # single channel

    # conv1 (1->20, k=5) + relu + pool : 28x28 -> 24x24 -> 12x12
    g1 = _im2col_pool_groups_1ch(x, 5, 12)                      # (4, B*144, 25)
    y1 = conv_pool_matmul(g1, pk["w1"], pk["b1"], tile_m=1152)  # (B*144, 20) bf16
    y1 = y1.reshape(B, 12, 12, 20)                              # NHWC, pooled

    # conv2 (20->50, k=5) + relu + pool : 12x12 -> 8x8 -> 4x4
    g2 = _im2col_pool_groups_nhwc(y1, 5, 4)                     # (4, B*16, 500)
    y2 = conv_pool_matmul(g2, pk["w2"], pk["b2"], tile_m=512)   # (B*16, 50) bf16

    # NHWC flatten (fc1 weights are pre-permuted to accept this order), then
    # fused fc1+relu+fc2+relu; slice the lane-dense (B,128) output to 10.
    flat = y2.reshape(B, 800)
    out = fc12_fused(flat, pk["w3"], pk["b3"], pk["w4"], pk["b4"], tile_m=256)
    return out[:, :10]


# ----------------------------------------------------------------------------
# Pure-XLA reference (mirrors the PyTorch module) for correctness checking.
# Weights are pre-rounded to bf16 to match the kernel's operand precision.
# ----------------------------------------------------------------------------
def lenet_reference(x, params):
    r = lambda a: a.astype(jnp.bfloat16).astype(jnp.float32)

    def conv(x, w, b):
        y = lax.conv_general_dilated(x, w, (1, 1), "VALID",
                                     dimension_numbers=("NCHW", "OIHW", "NCHW"))
        return y + b.reshape(1, -1, 1, 1)

    def pool(x):
        return lax.reduce_window(x, -jnp.inf, lax.max,
                                 (1, 1, 2, 2), (1, 1, 2, 2), "VALID")

    x = r(x)
    y = pool(jnp.maximum(conv(x, r(params["conv1_w"]), params["conv1_b"]), 0.0))
    y = pool(jnp.maximum(conv(y, r(params["conv2_w"]), params["conv2_b"]), 0.0))
    y = y.reshape(y.shape[0], 800)
    y = jnp.maximum(y @ r(params["fc1_w"]).T + params["fc1_b"], 0.0)
    y = jnp.maximum(y @ r(params["fc2_w"]).T + params["fc2_b"], 0.0)
    return y


if __name__ == "__main__":
    key = jax.random.PRNGKey(0)
    keys = jax.random.split(key, 9)
    # Deterministic synthetic parameters (PyTorch shape conventions).
    params = {
        "conv1_w": 0.10 * jax.random.normal(keys[0], (20, 1, 5, 5), jnp.float32),
        "conv1_b": 0.10 * jax.random.normal(keys[1], (20,), jnp.float32),
        "conv2_w": 0.05 * jax.random.normal(keys[2], (50, 20, 5, 5), jnp.float32),
        "conv2_b": 0.05 * jax.random.normal(keys[3], (50,), jnp.float32),
        "fc1_w": 0.02 * jax.random.normal(keys[4], (500, 800), jnp.float32),
        "fc1_b": 0.02 * jax.random.normal(keys[5], (500,), jnp.float32),
        "fc2_w": 0.05 * jax.random.normal(keys[6], (10, 500), jnp.float32),
        "fc2_b": 0.05 * jax.random.normal(keys[7], (10,), jnp.float32),
    }
    packed = pack_params(params)          # one-time packing, outside the jit

    # MNIST-shaped input (28x28 is required by the 800-feature flatten).
    x = jax.random.normal(keys[8], (2, 1, 28, 28), jnp.float32)

    out = jax.jit(lenet_forward)(x, packed)
    jax.block_until_ready(out)
    assert out.shape == (2, 10)
    assert bool(jnp.all(out >= 0.0))      # final ReLU

    ref = lenet_reference(x, params)
    assert bool(jnp.allclose(out.astype(jnp.float32), ref, atol=3e-2, rtol=5e-2)), (
        "kernel output diverged from reference")

    print("KERNEL_OK")
</pallas_src>

<mosaic_0001>
module attributes {stable_mosaic.version = 11 : i64} {
  func.func @_conv_pool_kernel(%arg0: i32, %arg1: memref<4x288x25xbf16, #tpu.memory_space<vmem>>, %arg2: memref<25x20xbf16, #tpu.memory_space<vmem>>, %arg3: memref<1x20xf32, #tpu.memory_space<vmem>>, %arg4: memref<288x20xbf16, #tpu.memory_space<vmem>>) attributes {dimension_semantics = [#tpu.dimension_semantics<parallel>], iteration_bounds = array<i64: 1>, scalar_prefetch = 0 : i64, scratch_operands = 0 : i64, tpu.core_type = #tpu.core_type<tc>, window_params = [{transform_indices = @transform_0, window_bounds = array<i64: 4, 288, 25>}, {pipeline_mode = #tpu.pipeline_mode<synchronous>, transform_indices = @transform_1, window_bounds = array<i64: 25, 20>}, {pipeline_mode = #tpu.pipeline_mode<synchronous>, transform_indices = @transform_2, window_bounds = array<i64: 1, 20>}, {transform_indices = @transform_3, window_bounds = array<i64: 288, 20>}]} {
    %c0 = arith.constant 0 : index
    %c0_0 = arith.constant 0 : index
    %0 = vector.load %arg2[%c0, %c0_0] : memref<25x20xbf16, #tpu.memory_space<vmem>>, vector<25x20xbf16>
    %c0_1 = arith.constant 0 : index
    %c0_2 = arith.constant 0 : index
    %c0_3 = arith.constant 0 : index
    %1 = vector.load %arg1[%c0_1, %c0_2, %c0_3] : memref<4x288x25xbf16, #tpu.memory_space<vmem>>, vector<1x288x25xbf16>
    %2 = vector.shape_cast %1 : vector<1x288x25xbf16> to vector<288x25xbf16>
    %cst = arith.constant dense<0.000000e+00> : vector<288x20xf32>
    %3 = tpu.matmul %2, %0, %cst {dimension_numbers = #tpu.dot_dimension_numbers<[1], [0], [0], [1], [0, 0, 1, 1], [], []>} : vector<288x25xbf16>, vector<25x20xbf16>, vector<288x20xf32> -> vector<288x20xf32>
    %c1 = arith.constant 1 : index
    %c0_4 = arith.constant 0 : index
    %c0_5 = arith.constant 0 : index
    %4 = vector.load %arg1[%c1, %c0_4, %c0_5] : memref<4x288x25xbf16, #tpu.memory_space<vmem>>, vector<1x288x25xbf16>
    %5 = vector.shape_cast %4 : vector<1x288x25xbf16> to vector<288x25xbf16>
    %cst_6 = arith.constant dense<0.000000e+00> : vector<288x20xf32>
    %6 = tpu.matmul %5, %0, %cst_6 {dimension_numbers = #tpu.dot_dimension_numbers<[1], [0], [0], [1], [0, 0, 1, 1], [], []>} : vector<288x25xbf16>, vector<25x20xbf16>, vector<288x20xf32> -> vector<288x20xf32>
    %c2 = arith.constant 2 : index
    %c0_7 = arith.constant 0 : index
    %c0_8 = arith.constant 0 : index
    %7 = vector.load %arg1[%c2, %c0_7, %c0_8] : memref<4x288x25xbf16, #tpu.memory_space<vmem>>, vector<1x288x25xbf16>
    %8 = vector.shape_cast %7 : vector<1x288x25xbf16> to vector<288x25xbf16>
    %cst_9 = arith.constant dense<0.000000e+00> : vector<288x20xf32>
    %9 = tpu.matmul %8, %0, %cst_9 {dimension_numbers = #tpu.dot_dimension_numbers<[1], [0], [0], [1], [0, 0, 1, 1], [], []>} : vector<288x25xbf16>, vector<25x20xbf16>, vector<288x20xf32> -> vector<288x20xf32>
    %c3 = arith.constant 3 : index
    %c0_10 = arith.constant 0 : index
    %c0_11 = arith.constant 0 : index
    %10 = vector.load %arg1[%c3, %c0_10, %c0_11] : memref<4x288x25xbf16, #tpu.memory_space<vmem>>, vector<1x288x25xbf16>
    %11 = vector.shape_cast %10 : vector<1x288x25xbf16> to vector<288x25xbf16>
    %cst_12 = arith.constant dense<0.000000e+00> : vector<288x20xf32>
    %12 = tpu.matmul %11, %0, %cst_12 {dimension_numbers = #tpu.dot_dimension_numbers<[1], [0], [0], [1], [0, 0, 1, 1], [], []>} : vector<288x25xbf16>, vector<25x20xbf16>, vector<288x20xf32> -> vector<288x20xf32>
    %13 = arith.maximumf %3, %6 : vector<288x20xf32>
    %14 = arith.maximumf %9, %12 : vector<288x20xf32>
    %15 = arith.maximumf %13, %14 : vector<288x20xf32>
    %c0_13 = arith.constant 0 : index
    %c0_14 = arith.constant 0 : index
    %16 = vector.load %arg3[%c0_13, %c0_14] : memref<1x20xf32, #tpu.memory_space<vmem>>, vector<1x20xf32>
    %17 = vector.broadcast %16 : vector<1x20xf32> to vector<288x20xf32>
    %18 = arith.addf %15, %17 : vector<288x20xf32>
    %cst_15 = arith.constant 0.000000e+00 : f32
    %19 = vector.broadcast %cst_15 : f32 to vector<288x20xf32>
    %20 = arith.maximumf %18, %19 : vector<288x20xf32>
    %21 = arith.truncf %20 : vector<288x20xf32> to vector<288x20xbf16>
    %c0_16 = arith.constant 0 : index
    %c0_17 = arith.constant 0 : index
    %22 = vector.load %arg4[%c0_16, %c0_17] : memref<288x20xbf16, #tpu.memory_space<vmem>>, vector<288x20xbf16>
    tpu.vector_store %arg4[%c0_16, %c0_17], %21 {strides = array<i32>} : memref<288x20xbf16, #tpu.memory_space<vmem>>, vector<288x20xbf16>,
    return
  }
  func.func @transform_0(%arg0: i32) -> (i32, i32, i32) {
    %c0_i32 = arith.constant 0 : i32
    %c0_i32_0 = arith.constant 0 : i32
    %c0_i32_1 = arith.constant 0 : i32
    return %c0_i32, %arg0, %c0_i32_0 : i32, i32, i32
  }
  func.func @transform_1(%arg0: i32) -> (i32, i32) {
    %c0_i32 = arith.constant 0 : i32
    %c0_i32_0 = arith.constant 0 : i32
    %c0_i32_1 = arith.constant 0 : i32
    return %c0_i32, %c0_i32_0 : i32, i32
  }
  func.func @transform_2(%arg0: i32) -> (i32, i32) {
    %c0_i32 = arith.constant 0 : i32
    %c0_i32_0 = arith.constant 0 : i32
    %c0_i32_1 = arith.constant 0 : i32
    return %c0_i32, %c0_i32_0 : i32, i32
  }
  func.func @transform_3(%arg0: i32) -> (i32, i32) {
    %c0_i32 = arith.constant 0 : i32
    %c0_i32_0 = arith.constant 0 : i32
    return %arg0, %c0_i32 : i32, i32
  }
}

module attributes {stable_mosaic.version = 11 : i64} {
  func.func @_conv_pool_kernel(%arg0: i32, %arg1: memref<4x32x500xbf16, #tpu.memory_space<vmem>>, %arg2: memref<500x50xbf16, #tpu.memory_space<vmem>>, %arg3: memref<1x50xf32, #tpu.memory_space<vmem>>, %arg4: memref<32x50xbf16, #tpu.memory_space<vmem>>) attributes {dimension_semantics = [#tpu.dimension_semantics<parallel>], iteration_bounds = array<i64: 1>, scalar_prefetch = 0 : i64, scratch_operands = 0 : i64, tpu.core_type = #tpu.core_type<tc>, window_params = [{transform_indices = @transform_0, window_bounds = array<i64: 4, 32, 500>}, {pipeline_mode = #tpu.pipeline_mode<synchronous>, transform_indices = @transform_1, window_bounds = array<i64: 500, 50>}, {pipeline_mode = #tpu.pipeline_mode<synchronous>, transform_indices = @transform_2, window_bounds = array<i64: 1, 50>}, {transform_indices = @transform_3, window_bounds = array<i64: 32, 50>}]} {
    %c0 = arith.constant 0 : index
    %c0_0 = arith.constant 0 : index
    %0 = vector.load %arg2[%c0, %c0_0] : memref<500x50xbf16, #tpu.memory_space<vmem>>, vector<500x50xbf16>
    %c0_1 = arith.constant 0 : index
    %c0_2 = arith.constant 0 : index
    %c0_3 = arith.constant 0 : index
    %1 = vector.load %arg1[%c0_1, %c0_2, %c0_3] : memref<4x32x500xbf16, #tpu.memory_space<vmem>>, vector<1x32x500xbf16>
    %2 = vector.shape_cast %1 : vector<1x32x500xbf16> to vector<32x500xbf16>
    %cst = arith.constant dense<0.000000e+00> : vector<32x50xf32>
    %3 = tpu.matmul %2, %0, %cst {dimension_numbers = #tpu.dot_dimension_numbers<[1], [0], [0], [1], [0, 0, 1, 1], [], []>} : vector<32x500xbf16>, vector<500x50xbf16>, vector<32x50xf32> -> vector<32x50xf32>
    %c1 = arith.constant 1 : index
    %c0_4 = arith.constant 0 : index
    %c0_5 = arith.constant 0 : index
    %4 = vector.load %arg1[%c1, %c0_4, %c0_5] : memref<4x32x500xbf16, #tpu.memory_space<vmem>>, vector<1x32x500xbf16>
    %5 = vector.shape_cast %4 : vector<1x32x500xbf16> to vector<32x500xbf16>
    %cst_6 = arith.constant dense<0.000000e+00> : vector<32x50xf32>
    %6 = tpu.matmul %5, %0, %cst_6 {dimension_numbers = #tpu.dot_dimension_numbers<[1], [0], [0], [1], [0, 0, 1, 1], [], []>} : vector<32x500xbf16>, vector<500x50xbf16>, vector<32x50xf32> -> vector<32x50xf32>
    %c2 = arith.constant 2 : index
    %c0_7 = arith.constant 0 : index
    %c0_8 = arith.constant 0 : index
    %7 = vector.load %arg1[%c2, %c0_7, %c0_8] : memref<4x32x500xbf16, #tpu.memory_space<vmem>>, vector<1x32x500xbf16>
    %8 = vector.shape_cast %7 : vector<1x32x500xbf16> to vector<32x500xbf16>
    %cst_9 = arith.constant dense<0.000000e+00> : vector<32x50xf32>
    %9 = tpu.matmul %8, %0, %cst_9 {dimension_numbers = #tpu.dot_dimension_numbers<[1], [0], [0], [1], [0, 0, 1, 1], [], []>} : vector<32x500xbf16>, vector<500x50xbf16>, vector<32x50xf32> -> vector<32x50xf32>
    %c3 = arith.constant 3 : index
    %c0_10 = arith.constant 0 : index
    %c0_11 = arith.constant 0 : index
    %10 = vector.load %arg1[%c3, %c0_10, %c0_11] : memref<4x32x500xbf16, #tpu.memory_space<vmem>>, vector<1x32x500xbf16>
    %11 = vector.shape_cast %10 : vector<1x32x500xbf16> to vector<32x500xbf16>
    %cst_12 = arith.constant dense<0.000000e+00> : vector<32x50xf32>
    %12 = tpu.matmul %11, %0, %cst_12 {dimension_numbers = #tpu.dot_dimension_numbers<[1], [0], [0], [1], [0, 0, 1, 1], [], []>} : vector<32x500xbf16>, vector<500x50xbf16>, vector<32x50xf32> -> vector<32x50xf32>
    %13 = arith.maximumf %3, %6 : vector<32x50xf32>
    %14 = arith.maximumf %9, %12 : vector<32x50xf32>
    %15 = arith.maximumf %13, %14 : vector<32x50xf32>
    %c0_13 = arith.constant 0 : index
    %c0_14 = arith.constant 0 : index
    %16 = vector.load %arg3[%c0_13, %c0_14] : memref<1x50xf32, #tpu.memory_space<vmem>>, vector<1x50xf32>
    %17 = vector.broadcast %16 : vector<1x50xf32> to vector<32x50xf32>
    %18 = arith.addf %15, %17 : vector<32x50xf32>
    %cst_15 = arith.constant 0.000000e+00 : f32
    %19 = vector.broadcast %cst_15 : f32 to vector<32x50xf32>
    %20 = arith.maximumf %18, %19 : vector<32x50xf32>
    %21 = arith.truncf %20 : vector<32x50xf32> to vector<32x50xbf16>
    %c0_16 = arith.constant 0 : index
    %c0_17 = arith.constant 0 : index
    %22 = vector.load %arg4[%c0_16, %c0_17] : memref<32x50xbf16, #tpu.memory_space<vmem>>, vector<32x50xbf16>
    tpu.vector_store %arg4[%c0_16, %c0_17], %21 {strides = array<i32>} : memref<32x50xbf16, #tpu.memory_space<vmem>>, vector<32x50xbf16>,
    return
  }
  func.func @transform_0(%arg0: i32) -> (i32, i32, i32) {
    %c0_i32 = arith.constant 0 : i32
    %c0_i32_0 = arith.constant 0 : i32
    %c0_i32_1 = arith.constant 0 : i32
    return %c0_i32, %arg0, %c0_i32_0 : i32, i32, i32
  }
  func.func @transform_1(%arg0: i32) -> (i32, i32) {
    %c0_i32 = arith.constant 0 : i32
    %c0_i32_0 = arith.constant 0 : i32
    %c0_i32_1 = arith.constant 0 : i32
    return %c0_i32, %c0_i32_0 : i32, i32
  }
  func.func @transform_2(%arg0: i32) -> (i32, i32) {
    %c0_i32 = arith.constant 0 : i32
    %c0_i32_0 = arith.constant 0 : i32
    %c0_i32_1 = arith.constant 0 : i32
    return %c0_i32, %c0_i32_0 : i32, i32
  }
  func.func @transform_3(%arg0: i32) -> (i32, i32) {
    %c0_i32 = arith.constant 0 : i32
    %c0_i32_0 = arith.constant 0 : i32
    return %arg0, %c0_i32 : i32, i32
  }
}

module attributes {stable_mosaic.version = 11 : i64} {
  func.func @_fc12_fused_kernel(%arg0: i32, %arg1: memref<8x800xbf16, #tpu.memory_space<vmem>>, %arg2: memref<800x500xbf16, #tpu.memory_space<vmem>>, %arg3: memref<1x500xf32, #tpu.memory_space<vmem>>, %arg4: memref<500x128xbf16, #tpu.memory_space<vmem>>, %arg5: memref<1x128xf32, #tpu.memory_space<vmem>>, %arg6: memref<8x128xf32, #tpu.memory_space<vmem>>) attributes {dimension_semantics = [#tpu.dimension_semantics<parallel>], iteration_bounds = array<i64: 1>, scalar_prefetch = 0 : i64, scratch_operands = 0 : i64, tpu.core_type = #tpu.core_type<tc>, window_params = [{transform_indices = @transform_0, window_bounds = array<i64: 8, 800>}, {pipeline_mode = #tpu.pipeline_mode<synchronous>, transform_indices = @transform_1, window_bounds = array<i64: 800, 500>}, {pipeline_mode = #tpu.pipeline_mode<synchronous>, transform_indices = @transform_2, window_bounds = array<i64: 1, 500>}, {pipeline_mode = #tpu.pipeline_mode<synchronous>, transform_indices = @transform_3, window_bounds = array<i64: 500, 128>}, {pipeline_mode = #tpu.pipeline_mode<synchronous>, transform_indices = @transform_4, window_bounds = array<i64: 1, 128>}, {transform_indices = @transform_5, window_bounds = array<i64: 8, 128>}]} {
    %c0 = arith.constant 0 : index
    %c0_0 = arith.constant 0 : index
    %0 = vector.load %arg1[%c0, %c0_0] : memref<8x800xbf16, #tpu.memory_space<vmem>>, vector<8x800xbf16>
    %c0_1 = arith.constant 0 : index
    %c0_2 = arith.constant 0 : index
    %1 = vector.load %arg2[%c0_1, %c0_2] : memref<800x500xbf16, #tpu.memory_space<vmem>>, vector<800x500xbf16>
    %cst = arith.constant dense<0.000000e+00> : vector<8x500xf32>
    %2 = tpu.matmul %0, %1, %cst {dimension_numbers = #tpu.dot_dimension_numbers<[1], [0], [0], [1], [0, 0, 1, 1], [], []>} : vector<8x800xbf16>, vector<800x500xbf16>, vector<8x500xf32> -> vector<8x500xf32>
    %c0_3 = arith.constant 0 : index
    %c0_4 = arith.constant 0 : index
    %3 = vector.load %arg3[%c0_3, %c0_4] : memref<1x500xf32, #tpu.memory_space<vmem>>, vector<1x500xf32>
    %4 = vector.broadcast %3 : vector<1x500xf32> to vector<8x500xf32>
    %5 = arith.addf %2, %4 : vector<8x500xf32>
    %cst_5 = arith.constant 0.000000e+00 : f32
    %6 = vector.broadcast %cst_5 : f32 to vector<8x500xf32>
    %7 = arith.maximumf %5, %6 : vector<8x500xf32>
    %8 = arith.truncf %7 : vector<8x500xf32> to vector<8x500xbf16>
    %c0_6 = arith.constant 0 : index
    %c0_7 = arith.constant 0 : index
    %9 = vector.load %arg4[%c0_6, %c0_7] : memref<500x128xbf16, #tpu.memory_space<vmem>>, vector<500x128xbf16>
    %cst_8 = arith.constant dense<0.000000e+00> : vector<8x128xf32>
    %10 = tpu.matmul %8, %9, %cst_8 {dimension_numbers = #tpu.dot_dimension_numbers<[1], [0], [0], [1], [0, 0, 1, 1], [], []>} : vector<8x500xbf16>, vector<500x128xbf16>, vector<8x128xf32> -> vector<8x128xf32>
    %c0_9 = arith.constant 0 : index
    %c0_10 = arith.constant 0 : index
    %11 = vector.load %arg5[%c0_9, %c0_10] : memref<1x128xf32, #tpu.memory_space<vmem>>, vector<1x128xf32>
    %12 = vector.broadcast %11 : vector<1x128xf32> to vector<8x128xf32>
    %13 = arith.addf %10, %12 : vector<8x128xf32>
    %cst_11 = arith.constant 0.000000e+00 : f32
    %14 = vector.broadcast %cst_11 : f32 to vector<8x128xf32>
    %15 = arith.maximumf %13, %14 : vector<8x128xf32>
    %c0_12 = arith.constant 0 : index
    %c0_13 = arith.constant 0 : index
    %16 = vector.load %arg6[%c0_12, %c0_13] : memref<8x128xf32, #tpu.memory_space<vmem>>, vector<8x128xf32>
    tpu.vector_store %arg6[%c0_12, %c0_13], %15 {strides = array<i32>} : memref<8x128xf32, #tpu.memory_space<vmem>>, vector<8x128xf32>,
    return
  }
  func.func @transform_0(%arg0: i32) -> (i32, i32) {
    %c0_i32 = arith.constant 0 : i32
    %c0_i32_0 = arith.constant 0 : i32
    return %arg0, %c0_i32 : i32, i32
  }
  func.func @transform_1(%arg0: i32) -> (i32, i32) {
    %c0_i32 = arith.constant 0 : i32
    %c0_i32_0 = arith.constant 0 : i32
    %c0_i32_1 = arith.constant 0 : i32
    return %c0_i32, %c0_i32_0 : i32, i32
  }
  func.func @transform_2(%arg0: i32) -> (i32, i32) {
    %c0_i32 = arith.constant 0 : i32
    %c0_i32_0 = arith.constant 0 : i32
    %c0_i32_1 = arith.constant 0 : i32
    return %c0_i32, %c0_i32_0 : i32, i32
  }
  func.func @transform_3(%arg0: i32) -> (i32, i32) {
    %c0_i32 = arith.constant 0 : i32
    %c0_i32_0 = arith.constant 0 : i32
    %c0_i32_1 = arith.constant 0 : i32
    return %c0_i32, %c0_i32_0 : i32, i32
  }
  func.func @transform_4(%arg0: i32) -> (i32, i32) {
    %c0_i32 = arith.constant 0 : i32
    %c0_i32_0 = arith.constant 0 : i32
    %c0_i32_1 = arith.constant 0 : i32
    return %c0_i32, %c0_i32_0 : i32, i32
  }
  func.func @transform_5(%arg0: i32) -> (i32, i32) {
    %c0_i32 = arith.constant 0 : i32
    %c0_i32_0 = arith.constant 0 : i32
    return %arg0, %c0_i32 : i32, i32
  }
}

</mosaic_0001>

<llo_original>
// kernel: lenet_forward.3
$region0: #{lenet_forward.3}
  #allocation0 [shape = 'u32[]', space=smem, size = 0x4, offset = 0x4, fixed_abs, tag = 'smem constant byte address 0x4 - core index']
  #allocation1 [shape = 'u32[144,128]{1,0:T(1,128)}', space=vmem, size = 0x12000, scoped, tag = 'internal scratch']
  %s0 = inlined_call_operand.vmem [shape: bf16[4,288,25], index: 0, kind: input, shape index: {}]
  %s1 = inlined_call_operand.vmem [shape: bf16[25,20], index: 1, kind: input, shape index: {}]
  %s2 = inlined_call_operand.vmem [shape: f32[1,20], index: 2, kind: input, shape index: {}]
  %s3 = inlined_call_operand.vmem [shape: bf16[288,20], index: 3, kind: output, shape index: {}]
  %s4 = sld [smem:[#allocation0]]
  $region22: #{lenet_forward.3} parent=0
    _
  %s6 = ssub.s32 1, %s4
  %s7 = scalar_select 0, %s6, %s4
  // Predicated region
  $region2: #{lenet_forward.3} parent=0 // pred_check
    _
  $region3: #{lenet_forward.3} parent=0 // pred_check_branch
    %9 = sbr.rel (0) target = $region5
  $region4: #{lenet_forward.3} parent=0 // pred_region
    _
  $region5: #{lenet_forward.3} parent=0 // pred_fallthru
    _
  // Predicated region
  $region6: #{lenet_forward.3} parent=0 // pred_check
    _
  $region7: #{lenet_forward.3} parent=0 // pred_check_branch
    %11 = sbr.rel (0) target = $region9
  $region8: #{lenet_forward.3} parent=0 // pred_region
    _
  $region9: #{lenet_forward.3} parent=0 // pred_fallthru
    _
  // Predicated region
  $region10: #{lenet_forward.3} parent=0 // pred_check
    _
  $region11: #{lenet_forward.3} parent=0 // pred_check_branch
    %13 = sbr.rel (0) target = $region13
  $region12: #{lenet_forward.3} parent=0 // pred_region
    _
  $region13: #{lenet_forward.3} parent=0 // pred_fallthru
    _
  %v15 = vld [vmem:[%s1] sm:$0xf]
  %v16 = vld [vmem:[%s1 + $0x4] sm:$0xf]
  %v17 = vld [vmem:[%s1 + $0x8] sm:$0xf]
  %v18 = vld [vmem:[%s1 + $0xc] sm:$0x1]
  %v19 = vld [vmem:[%s0] sm:$0xf]
  %v20 = vld [vmem:[%s0 + $0x4] sm:$0xf]
  %v21 = vld [vmem:[%s0 + $0x8] sm:$0xf]
  %v22 = vld [vmem:[%s0 + $0xc] sm:$0xf]
  %v23 = vld [vmem:[%s0 + $0x10] sm:$0xf]
  %v24 = vld [vmem:[%s0 + $0x14] sm:$0xf]
  %v25 = vld [vmem:[%s0 + $0x18] sm:$0xf]
  %v26 = vld [vmem:[%s0 + $0x1c] sm:$0xf]
  %v27 = vld [vmem:[%s0 + $0x20] sm:$0xf]
  %v28 = vld [vmem:[%s0 + $0x24] sm:$0xf]
  %v29 = vld [vmem:[%s0 + $0x28] sm:$0xf]
  %v30 = vld [vmem:[%s0 + $0x2c] sm:$0xf]
  %v31 = vld [vmem:[%s0 + $0x30] sm:$0xf]
  %v32 = vld [vmem:[%s0 + $0x34] sm:$0xf]
  %v33 = vld [vmem:[%s0 + $0x38] sm:$0xf]
  %v34 = vld [vmem:[%s0 + $0x3c] sm:$0xf]
  %v35 = vld [vmem:[%s0 + $0x40] sm:$0xf]
  %v36 = vld [vmem:[%s0 + $0x44] sm:$0xf]
  %v37 = vld [vmem:[%s0 + $0x48] sm:$0xf]
  %v38 = vld [vmem:[%s0 + $0x4c] sm:$0xf]
  %v39 = vld [vmem:[%s0 + $0x50] sm:$0xf]
  %v40 = vld [vmem:[%s0 + $0x54] sm:$0xf]
  %v41 = vld [vmem:[%s0 + $0x58] sm:$0xf]
  %v42 = vld [vmem:[%s0 + $0x5c] sm:$0xf]
  %v43 = vld [vmem:[%s0 + $0x60] sm:$0xf]
  %v44 = vld [vmem:[%s0 + $0x64] sm:$0xf]
  %v45 = vld [vmem:[%s0 + $0x68] sm:$0xf]
  %v46 = vld [vmem:[%s0 + $0x6c] sm:$0xf]
  %v47 = vld [vmem:[%s0 + $0x70] sm:$0xf]
  %v48 = vld [vmem:[%s0 + $0x74] sm:$0xf]
  %v49 = vld [vmem:[%s0 + $0x78] sm:$0xf]
  %v50 = vld [vmem:[%s0 + $0x7c] sm:$0xf]
  %v51 = vld [vmem:[%s0 + $0x80] sm:$0xf]
  %v52 = vld [vmem:[%s0 + $0x84] sm:$0xf]
  %v53 = vld [vmem:[%s0 + $0x88] sm:$0xf]
  %v54 = vld [vmem:[%s0 + $0x8c] sm:$0xf]
  %v91 = vunpack.c.l.b16 %v19
  %v92 = vunpack.c.l.b16 %v20
  %v93 = vunpack.c.l.b16 %v21
  %v94 = vunpack.c.l.b16 %v22
  %v95 = vunpack.c.l.b16 %v23
  %v96 = vunpack.c.l.b16 %v24
  %v97 = vunpack.c.l.b16 %v25
  %v98 = vunpack.c.l.b16 %v26
  %v99 = vunpack.c.l.b16 %v27
  %v100 = vunpack.c.l.b16 %v28
  %v101 = vunpack.c.l.b16 %v29
  %v102 = vunpack.c.l.b16 %v30
  %v103 = vunpack.c.l.b16 %v31
  %v104 = vunpack.c.l.b16 %v32
  %v105 = vunpack.c.l.b16 %v33
  %v106 = vunpack.c.l.b16 %v34
  %v107 = vunpack.c.l.b16 %v35
  %v108 = vunpack.c.l.b16 %v36
  %v109 = vunpack.c.l.b16 %v37
  %v110 = vunpack.c.l.b16 %v38
  %v111 = vunpack.c.l.b16 %v39
  %v112 = vunpack.c.l.b16 %v40
  %v113 = vunpack.c.l.b16 %v41
  %v114 = vunpack.c.l.b16 %v42
  %v115 = vunpack.c.l.b16 %v43
  %v116 = vunpack.c.l.b16 %v44
  %v117 = vunpack.c.l.b16 %v45
  %v118 = vunpack.c.l.b16 %v46
  %v119 = vunpack.c.l.b16 %v47
  %v120 = vunpack.c.l.b16 %v48
  %v121 = vunpack.c.l.b16 %v49
  %v122 = vunpack.c.l.b16 %v50
  %v123 = vunpack.c.l.b16 %v51
  %v124 = vunpack.c.l.b16 %v52
  %v125 = vunpack.c.l.b16 %v53
  %v126 = vunpack.c.l.b16 %v54
  %v127 = vpack.c.b16 %v92, %v91
  %v128 = vpack.c.b16 %v94, %v93
  %v129 = vpack.c.b16 %v96, %v95
  %v130 = vpack.c.b16 %v98, %v97
  %v131 = vpack.c.b16 %v100, %v99
  %v132 = vpack.c.b16 %v102, %v101
  %v133 = vpack.c.b16 %v104, %v103
  %v134 = vpack.c.b16 %v106, %v105
  %v135 = vpack.c.b16 %v108, %v107
  %v136 = vpack.c.b16 %v110, %v109
  %v137 = vpack.c.b16 %v112, %v111
  %v138 = vpack.c.b16 %v114, %v113
  %v139 = vpack.c.b16 %v116, %v115
  %v140 = vpack.c.b16 %v118, %v117
  %v141 = vpack.c.b16 %v120, %v119
  %v142 = vpack.c.b16 %v122, %v121
  %v143 = vpack.c.b16 %v124, %v123
  %v144 = vpack.c.b16 %v126, %v125
  %v149 = vunpack.c.l.b16 %v15
  %v150 = vunpack.c.l.b16 %v16
  %v151 = vunpack.c.l.b16 %v17
  %v152 = vunpack.c.l.b16 %v18
  %v153 = vpack.c.b16 %v150, %v149
  %v154 = vpack.c.b16 %v152, %v151
  %vm156 = vcmask 203776
  %v158 = vsel %vm156, %v127, 0
  %v161 = vsel %vm156, %v128, 0
  %v164 = vsel %vm156, %v129, 0
  %v167 = vsel %vm156, %v130, 0
  %v170 = vsel %vm156, %v131, 0
  %v173 = vsel %vm156, %v132, 0
  %v176 = vsel %vm156, %v133, 0
  %v179 = vsel %vm156, %v134, 0
  %v182 = vsel %vm156, %v135, 0
  %v185 = vsel %vm156, %v136, 0
  %v188 = vsel %vm156, %v137, 0
  %v191 = vsel %vm156, %v138, 0
  %v194 = vsel %vm156, %v139, 0
  %v197 = vsel %vm156, %v140, 0
  %v200 = vsel %vm156, %v141, 0
  %v203 = vsel %vm156, %v142, 0
  %v206 = vsel %vm156, %v143, 0
  %v209 = vsel %vm156, %v144, 0
  %vm211 = vcmask 1043456
  %vm212 = vcmask 1044480
  %v213 = vsel %vm211, 4294967295, 65535
  %v214 = vsel %vm212, %v213, 0
  %v216 = vand.u32 %v154, %v214
  %218 = vmatprep.subr.bf16.mxu0 0
  %219 = vmatpush1.bf16.msra.mxu0 %v153
  %220 = vmatprep.subr.bf16.mxu0 0
  %221 = vmatpush1.bf16.msra.mxu0 %v216
  %222 = vmatprep.subr.bf16.mxu0 0
  %223 = vmatpush1.bf16.msra.mxu0 0
  %224 = vmatprep.subr.bf16.mxu0 0
  %225 = vmatpush1.bf16.msra.mxu0 0
  %226 = vmatprep.subr.bf16.mxu0 0
  %227 = vmatpush1.bf16.msra.mxu0 0
  %228 = vmatprep.subr.bf16.mxu0 0
  %229 = vmatpush1.bf16.msra.mxu0 0
  %230 = vmatprep.subr.bf16.mxu0 0
  %231 = vmatpush1.bf16.msra.mxu0 0
  %232 = vmatprep.subr.bf16.mxu0 0
  %233 = vmatpush1.bf16.msra.mxu0 0
  %234 = vmatprep.subr.bf16.mxu0 0
  %235 = vmatpush1.bf16.msra.mxu0 0
  %236 = vmatprep.subr.bf16.mxu0 0
  %237 = vmatpush1.bf16.msra.mxu0 0
  %238 = vmatprep.subr.bf16.mxu0 0
  %239 = vmatpush1.bf16.msra.mxu0 0
  %240 = vmatprep.subr.bf16.mxu0 0
  %241 = vmatpush1.bf16.msra.mxu0 0
  %242 = vmatprep.subr.bf16.mxu0 0
  %243 = vmatpush1.bf16.msra.mxu0 0
  %244 = vmatprep.subr.bf16.mxu0 0
  %245 = vmatpush1.bf16.msra.mxu0 0
  %246 = vmatprep.subr.bf16.mxu0 0
  %247 = vmatpush1.bf16.msra.mxu0 0
  %248 = vmatprep.subr.bf16.mxu0 0
  %249 = vmatpush1.bf16.msra.mxu0 0
  %250 = vmatprep.mubr.bf16.mxu0 0
  %251 = vmatmul.mubr.bf16.gmra.mrb[0].mxu0 %v158
  %v252 = vpop.f32.mrb[0].mxu0
  %v253 = vadd.f32 0.0, %v252
  %v254 = vpop.f32.mrb[0].mxu0
  %v255 = vpop.f32.mrb[0].mxu0
  %v256 = vadd.f32 0.0, %v255
  %v257 = vpop.f32.mrb[0].mxu0
  %258 = vmatprep.mubr.bf16.mxu0 0
  %259 = vmatmul.mubr.bf16.gmra.mrb[0].mxu0 %v161
  %v260 = vpop.f32.mrb[0].mxu0
  %v261 = vadd.f32 0.0, %v260
  %v262 = vpop.f32.mrb[0].mxu0
  %v263 = vpop.f32.mrb[0].mxu0
  %v264 = vadd.f32 0.0, %v263
  %v265 = vpop.f32.mrb[0].mxu0
  %266 = vmatprep.mubr.bf16.mxu0 0
  %267 = vmatmul.mubr.bf16.gmra.mrb[0].mxu0 %v164
  %v268 = vpop.f32.mrb[0].mxu0
  %v269 = vadd.f32 0.0, %v268
  %v270 = vpop.f32.mrb[0].mxu0
  %v271 = vpop.f32.mrb[0].mxu0
  %v272 = vadd.f32 0.0, %v271
  %v273 = vpop.f32.mrb[0].mxu0
  %274 = vmatprep.mubr.bf16.mxu0 0
  %275 = vmatmul.mubr.bf16.gmra.mrb[0].mxu0 %v167
  %v276 = vpop.f32.mrb[0].mxu0
  %v277 = vadd.f32 0.0, %v276
  %v278 = vpop.f32.mrb[0].mxu0
  %v279 = vpop.f32.mrb[0].mxu0
  %v280 = vadd.f32 0.0, %v279
  %v281 = vpop.f32.mrb[0].mxu0
  %282 = vmatprep.mubr.bf16.mxu0 0
  %283 = vmatmul.mubr.bf16.gmra.mrb[0].mxu0 %v170
  %v284 = vpop.f32.mrb[0].mxu0
  %v285 = vadd.f32 0.0, %v284
  %v286 = vpop.f32.mrb[0].mxu0
  %v287 = vpop.f32.mrb[0].mxu0
  %v288 = vadd.f32 0.0, %v287
  %v289 = vpop.f32.mrb[0].mxu0
  %290 = vmatprep.mubr.bf16.mxu0 0
  %291 = vmatmul.mubr.bf16.gmra.mrb[0].mxu0 %v173
  %v292 = vpop.f32.mrb[0].mxu0
  %v293 = vadd.f32 0.0, %v292
  %v294 = vpop.f32.mrb[0].mxu0
  %v295 = vpop.f32.mrb[0].mxu0
  %v296 = vadd.f32 0.0, %v295
  %v297 = vpop.f32.mrb[0].mxu0
  %298 = vmatprep.mubr.bf16.mxu0 0
  %299 = vmatmul.mubr.bf16.gmra.mrb[0].mxu0 %v176
  %v300 = vpop.f32.mrb[0].mxu0
  %v301 = vadd.f32 0.0, %v300
  %v302 = vpop.f32.mrb[0].mxu0
  %v303 = vpop.f32.mrb[0].mxu0
  %v304 = vadd.f32 0.0, %v303
  %v305 = vpop.f32.mrb[0].mxu0
  %306 = vmatprep.mubr.bf16.mxu0 0
  %307 = vmatmul.mubr.bf16.gmra.mrb[0].mxu0 %v179
  %v308 = vpop.f32.mrb[0].mxu0
  %v309 = vadd.f32 0.0, %v308
  %v310 = vpop.f32.mrb[0].mxu0
  %v311 = vpop.f32.mrb[0].mxu0
  %v312 = vadd.f32 0.0, %v311
  %v313 = vpop.f32.mrb[0].mxu0
  %314 = vmatprep.mubr.bf16.mxu0 0
  %315 = vmatmul.mubr.bf16.gmra.mrb[0].mxu0 %v182
  %v316 = vpop.f32.mrb[0].mxu0
  %v317 = vadd.f32 0.0, %v316
  %v318 = vpop.f32.mrb[0].mxu0
  %v319 = vpop.f32.mrb[0].mxu0
  %v320 = vadd.f32 0.0, %v319
  %v321 = vpop.f32.mrb[0].mxu0
  %322 = vmatprep.mubr.bf16.mxu0 0
  %323 = vmatmul.mubr.bf16.gmra.mrb[0].mxu0 %v185
  %v324 = vpop.f32.mrb[0].mxu0
  %v325 = vadd.f32 0.0, %v324
  %v326 = vpop.f32.mrb[0].mxu0
  %v327 = vpop.f32.mrb[0].mxu0
  %v328 = vadd.f32 0.0, %v327
  %v329 = vpop.f32.mrb[0].mxu0
  %330 = vmatprep.mubr.bf16.mxu0 0
  %331 = vmatmul.mubr.bf16.gmra.mrb[0].mxu0 %v188
  %v332 = vpop.f32.mrb[0].mxu0
  %v333 = vadd.f32 0.0, %v332
  %v334 = vpop.f32.mrb[0].mxu0
  %v335 = vpop.f32.mrb[0].mxu0
  %v336 = vadd.f32 0.0, %v335
  %v337 = vpop.f32.mrb[0].mxu0
  %338 = vmatprep.mubr.bf16.mxu0 0
  %339 = vmatmul.mubr.bf16.gmra.mrb[0].mxu0 %v191
  %v340 = vpop.f32.mrb[0].mxu0
  %v341 = vadd.f32 0.0, %v340
  %v342 = vpop.f32.mrb[0].mxu0
  %v343 = vpop.f32.mrb[0].mxu0
  %v344 = vadd.f32 0.0, %v343
  %v345 = vpop.f32.mrb[0].mxu0
  %346 = vmatprep.mubr.bf16.mxu0 0
  %347 = vmatmul.mubr.bf16.gmra.mrb[0].mxu0 %v194
  %v348 = vpop.f32.mrb[0].mxu0
  %v349 = vadd.f32 0.0, %v348
  %v350 = vpop.f32.mrb[0].mxu0
  %v351 = vpop.f32.mrb[0].mxu0
  %v352 = vadd.f32 0.0, %v351
  %v353 = vpop.f32.mrb[0].mxu0
  %354 = vmatprep.mubr.bf16.mxu0 0
  %355 = vmatmul.mubr.bf16.gmra.mrb[0].mxu0 %v197
  %v356 = vpop.f32.mrb[0].mxu0
  %v357 = vadd.f32 0.0, %v356
  %v358 = vpop.f32.mrb[0].mxu0
  %v359 = vpop.f32.mrb[0].mxu0
  %v360 = vadd.f32 0.0, %v359
  %v361 = vpop.f32.mrb[0].mxu0
  %362 = vmatprep.mubr.bf16.mxu0 0
  %363 = vmatmul.mubr.bf16.gmra.mrb[0].mxu0 %v200
  %v364 = vpop.f32.mrb[0].mxu0
  %v365 = vadd.f32 0.0, %v364
  %v366 = vpop.f32.mrb[0].mxu0
  %v367 = vpop.f32.mrb[0].mxu0
  %v368 = vadd.f32 0.0, %v367
  %v369 = vpop.f32.mrb[0].mxu0
  %370 = vmatprep.mubr.bf16.mxu0 0
  %371 = vmatmul.mubr.bf16.gmra.mrb[0].mxu0 %v203
  %v372 = vpop.f32.mrb[0].mxu0
  %v373 = vadd.f32 0.0, %v372
  %v374 = vpop.f32.mrb[0].mxu0
  %v375 = vpop.f32.mrb[0].mxu0
  %v376 = vadd.f32 0.0, %v375
  %v377 = vpop.f32.mrb[0].mxu0
  %378 = vmatprep.mubr.bf16.mxu0 0
  %379 = vmatmul.mubr.bf16.gmra.mrb[0].mxu0 %v206
  %v380 = vpop.f32.mrb[0].mxu0
  %v381 = vadd.f32 0.0, %v380
  %v382 = vpop.f32.mrb[0].mxu0
  %v383 = vpop.f32.mrb[0].mxu0
  %v384 = vadd.f32 0.0, %v383
  %v385 = vpop.f32.mrb[0].mxu0
  %386 = vmatprep.mubr.bf16.mxu0 0
  %387 = vmatmul.mubr.bf16.gmra.mrb[0].mxu0 %v209
  %v388 = vpop.f32.mrb[0].mxu0
  %v389 = vadd.f32 0.0, %v388
  %v390 = vpop.f32.mrb[0].mxu0
  %v391 = vpop.f32.mrb[0].mxu0
  %v392 = vadd.f32 0.0, %v391
  %v393 = vpop.f32.mrb[0].mxu0
  %394 = vdwg.mxu0
  %s395 = scalar_lea.vmem %s0, 144
  %v396 = vld [vmem:[%s395] sm:$0xf]
  %v397 = vld [vmem:[%s395 + $0x4] sm:$0xf]
  %v398 = vld [vmem:[%s395 + $0x8] sm:$0xf]
  %v399 = vld [vmem:[%s395 + $0xc] sm:$0xf]
  %v400 = vld [vmem:[%s395 + $0x10] sm:$0xf]
  %v401 = vld [vmem:[%s395 + $0x14] sm:$0xf]
  %v402 = vld [vmem:[%s395 + $0x18] sm:$0xf]
  %v403 = vld [vmem:[%s395 + $0x1c] sm:$0xf]
  %v404 = vld [vmem:[%s395 + $0x20] sm:$0xf]
  %v405 = vld [vmem:[%s395 + $0x24] sm:$0xf]
  %v406 = vld [vmem:[%s395 + $0x28] sm:$0xf]
  %v407 = vld [vmem:[%s395 + $0x2c] sm:$0xf]
  %v408 = vld [vmem:[%s395 + $0x30] sm:$0xf]
  %v409 = vld [vmem:[%s395 + $0x34] sm:$0xf]
  %v410 = vld [vmem:[%s395 + $0x38] sm:$0xf]
  %v411 = vld [vmem:[%s395 + $0x3c] sm:$0xf]
  %v412 = vld [vmem:[%s395 + $0x40] sm:$0xf]
  %v413 = vld [vmem:[%s395 + $0x44] sm:$0xf]
  %v414 = vld [vmem:[%s395 + $0x48] sm:$0xf]
  %v415 = vld [vmem:[%s395 + $0x4c] sm:$0xf]
  %v416 = vld [vmem:[%s395 + $0x50] sm:$0xf]
  %v417 = vld [vmem:[%s395 + $0x54] sm:$0xf]
  %v418 = vld [vmem:[%s395 + $0x58] sm:$0xf]
  %v419 = vld [vmem:[%s395 + $0x5c] sm:$0xf]
  %v420 = vld [vmem:[%s395 + $0x60] sm:$0xf]
  %v421 = vld [vmem:[%s395 + $0x64] sm:$0xf]
  %v422 = vld [vmem:[%s395 + $0x68] sm:$0xf]
  %v423 = vld [vmem:[%s395 + $0x6c] sm:$0xf]
  %v424 = vld [vmem:[%s395 + $0x70] sm:$0xf]
  %v425 = vld [vmem:[%s395 + $0x74] sm:$0xf]
  %v426 = vld [vmem:[%s395 + $0x78] sm:$0xf]
  %v427 = vld [vmem:[%s395 + $0x7c] sm:$0xf]
  %v428 = vld [vmem:[%s395 + $0x80] sm:$0xf]
  %v429 = vld [vmem:[%s395 + $0x84] sm:$0xf]
  %v430 = vld [vmem:[%s395 + $0x88] sm:$0xf]
  %v431 = vld [vmem:[%s395 + $0x8c] sm:$0xf]
  %v468 = vunpack.c.l.b16 %v396
  %v469 = vunpack.c.l.b16 %v397
  %v470 = vunpack.c.l.b16 %v398
  %v471 = vunpack.c.l.b16 %v399
  %v472 = vunpack.c.l.b16 %v400
  %v473 = vunpack.c.l.b16 %v401
  %v474 = vunpack.c.l.b16 %v402
  %v475 = vunpack.c.l.b16 %v403
  %v476 = vunpack.c.l.b16 %v404
  %v477 = vunpack.c.l.b16 %v405
  %v478 = vunpack.c.l.b16 %v406
  %v479 = vunpack.c.l.b16 %v407
  %v480 = vunpack.c.l.b16 %v408
  %v481 = vunpack.c.l.b16 %v409
  %v482 = vunpack.c.l.b16 %v410
  %v483 = vunpack.c.l.b16 %v411
  %v484 = vunpack.c.l.b16 %v412
  %v485 = vunpack.c.l.b16 %v413
  %v486 = vunpack.c.l.b16 %v414
  %v487 = vunpack.c.l.b16 %v415
  %v488 = vunpack.c.l.b16 %v416
  %v489 = vunpack.c.l.b16 %v417
  %v490 = vunpack.c.l.b16 %v418
  %v491 = vunpack.c.l.b16 %v419
  %v492 = vunpack.c.l.b16 %v420
  %v493 = vunpack.c.l.b16 %v421
  %v494 = vunpack.c.l.b16 %v422
  %v495 = vunpack.c.l.b16 %v423
  %v496 = vunpack.c.l.b16 %v424
  %v497 = vunpack.c.l.b16 %v425
  %v498 = vunpack.c.l.b16 %v426
  %v499 = vunpack.c.l.b16 %v427
  %v500 = vunpack.c.l.b16 %v428
  %v501 = vunpack.c.l.b16 %v429
  %v502 = vunpack.c.l.b16 %v430
  %v503 = vunpack.c.l.b16 %v431
  %v504 = vpack.c.b16 %v469, %v468
  %v505 = vpack.c.b16 %v471, %v470
  %v506 = vpack.c.b16 %v473, %v472
  %v507 = vpack.c.b16 %v475, %v474
  %v508 = vpack.c.b16 %v477, %v476
  %v509 = vpack.c.b16 %v479, %v478
  %v510 = vpack.c.b16 %v481, %v480
  %v511 = vpack.c.b16 %v483, %v482
  %v512 = vpack.c.b16 %v485, %v484
  %v513 = vpack.c.b16 %v487, %v486
  %v514 = vpack.c.b16 %v489, %v488
  %v515 = vpack.c.b16 %v491, %v490
  %v516 = vpack.c.b16 %v493, %v492
  %v517 = vpack.c.b16 %v495, %v494
  %v518 = vpack.c.b16 %v497, %v496
  %v519 = vpack.c.b16 %v499, %v498
  %v520 = vpack.c.b16 %v501, %v500
  %v521 = vpack.c.b16 %v503, %v502
  %v523 = vsel %vm156, %v504, 0
  %v526 = vsel %vm156, %v505, 0
  %v529 = vsel %vm156, %v506, 0
  %v532 = vsel %vm156, %v507, 0
  %v535 = vsel %vm156, %v508, 0
  %v538 = vsel %vm156, %v509, 0
  %v541 = vsel %vm156, %v510, 0
  %v544 = vsel %vm156, %v511, 0
  %v547 = vsel %vm156, %v512, 0
  %v550 = vsel %vm156, %v513, 0
  %v553 = vsel %vm156, %v514, 0
  %v556 = vsel %vm156, %v515, 0
  %v559 = vsel %vm156, %v516, 0
  %v562 = vsel %vm156, %v517, 0
  %v565 = vsel %vm156, %v518, 0
  %v568 = vsel %vm156, %v519, 0
  %v571 = vsel %vm156, %v520, 0
  %v574 = vsel %vm156, %v521, 0
  %576 = vmatprep.subr.bf16.mxu0 0
  %577 = vmatpush1.bf16.msra.mxu0 %v153
  %578 = vmatprep.subr.bf16.mxu0 0
  %579 = vmatpush1.bf16.msra.mxu0 %v216
  %580 = vmatprep.subr.bf16.mxu0 0
  %581 = vmatpush1.bf16.msra.mxu0 0
  %582 = vmatprep.subr.bf16.mxu0 0
  %583 = vmatpush1.bf16.msra.mxu0 0
  %584 = vmatprep.subr.bf16.mxu0 0
  %585 = vmatpush1.bf16.msra.mxu0 0
  %586 = vmatprep.subr.bf16.mxu0 0
  %587 = vmatpush1.bf16.msra.mxu0 0
  %588 = vmatprep.subr.bf16.mxu0 0
  %589 = vmatpush1.bf16.msra.mxu0 0
  %590 = vmatprep.subr.bf16.mxu0 0
  %591 = vmatpush1.bf16.msra.mxu0 0
  %592 = vmatprep.subr.bf16.mxu0 0
  %593 = vmatpush1.bf16.msra.mxu0 0
  %594 = vmatprep.subr.bf16.mxu0 0
  %595 = vmatpush1.bf16.msra.mxu0 0
  %596 = vmatprep.subr.bf16.mxu0 0
  %597 = vmatpush1.bf16.msra.mxu0 0
  %598 = vmatprep.subr.bf16.mxu0 0
  %599 = vmatpush1.bf16.msra.mxu0 0
  %600 = vmatprep.subr.bf16.mxu0 0
  %601 = vmatpush1.bf16.msra.mxu0 0
  %602 = vmatprep.subr.bf16.mxu0 0
  %603 = vmatpush1.bf16.msra.mxu0 0
  %604 = vmatprep.subr.bf16.mxu0 0
  %605 = vmatpush1.bf16.msra.mxu0 0
  %606 = vmatprep.subr.bf16.mxu0 0
  %607 = vmatpush1.bf16.msra.mxu0 0
  %608 = vmatprep.mubr.bf16.mxu0 0
  %609 = vmatmul.mubr.bf16.gmra.mrb[0].mxu0 %v523
  %v610 = vpop.f32.mrb[0].mxu0
  %v611 = vadd.f32 0.0, %v610
  %v612 = vpop.f32.mrb[0].mxu0
  %v613 = vpop.f32.mrb[0].mxu0
  %v614 = vadd.f32 0.0, %v613
  %v615 = vpop.f32.mrb[0].mxu0
  %616 = vmatprep.mubr.bf16.mxu0 0
  %617 = vmatmul.mubr.bf16.gmra.mrb[0].mxu0 %v526
  %v618 = vpop.f32.mrb[0].mxu0
  %v619 = vadd.f32 0.0, %v618
  %v620 = vpop.f32.mrb[0].mxu0
  %v621 = vpop.f32.mrb[0].mxu0
  %v622 = vadd.f32 0.0, %v621
  %v623 = vpop.f32.mrb[0].mxu0
  %624 = vmatprep.mubr.bf16.mxu0 0
  %625 = vmatmul.mubr.bf16.gmra.mrb[0].mxu0 %v529
  %v626 = vpop.f32.mrb[0].mxu0
  %v627 = vadd.f32 0.0, %v626
  %v628 = vpop.f32.mrb[0].mxu0
  %v629 = vpop.f32.mrb[0].mxu0
  %v630 = vadd.f32 0.0, %v629
  %v631 = vpop.f32.mrb[0].mxu0
  %632 = vmatprep.mubr.bf16.mxu0 0
  %633 = vmatmul.mubr.bf16.gmra.mrb[0].mxu0 %v532
  %v634 = vpop.f32.mrb[0].mxu0
  %v635 = vadd.f32 0.0, %v634
  %v636 = vpop.f32.mrb[0].mxu0
  %v637 = vpop.f32.mrb[0].mxu0
  %v638 = vadd.f32 0.0, %v637
  %v639 = vpop.f32.mrb[0].mxu0
  %640 = vmatprep.mubr.bf16.mxu0 0
  %641 = vmatmul.mubr.bf16.gmra.mrb[0].mxu0 %v535
  %v642 = vpop.f32.mrb[0].mxu0
  %v643 = vadd.f32 0.0, %v642
  %v644 = vpop.f32.mrb[0].mxu0
  %v645 = vpop.f32.mrb[0].mxu0
  %v646 = vadd.f32 0.0, %v645
  %v647 = vpop.f32.mrb[0].mxu0
  %648 = vmatprep.mubr.bf16.mxu0 0
  %649 = vmatmul.mubr.bf16.gmra.mrb[0].mxu0 %v538
  %v650 = vpop.f32.mrb[0].mxu0
  %v651 = vadd.f32 0.0, %v650
  %v652 = vpop.f32.mrb[0].mxu0
  %v653 = vpop.f32.mrb[0].mxu0
  %v654 = vadd.f32 0.0, %v653
  %v655 = vpop.f32.mrb[0].mxu0
  %656 = vmatprep.mubr.bf16.mxu0 0
  %657 = vmatmul.mubr.bf16.gmra.mrb[0].mxu0 %v541
  %v658 = vpop.f32.mrb[0].mxu0
  %v659 = vadd.f32 0.0, %v658
  %v660 = vpop.f32.mrb[0].mxu0
  %v661 = vpop.f32.mrb[0].mxu0
  %v662 = vadd.f32 0.0, %v661
  %v663 = vpop.f32.mrb[0].mxu0
  %664 = vmatprep.mubr.bf16.mxu0 0
  %665 = vmatmul.mubr.bf16.gmra.mrb[0].mxu0 %v544
  %v666 = vpop.f32.mrb[0].mxu0
  %v667 = vadd.f32 0.0, %v666
  %v668 = vpop.f32.mrb[0].mxu0
  %v669 = vpop.f32.mrb[0].mxu0
  %v670 = vadd.f32 0.0, %v669
  %v671 = vpop.f32.mrb[0].mxu0
  %672 = vmatprep.mubr.bf16.mxu0 0
  %673 = vmatmul.mubr.bf16.gmra.mrb[0].mxu0 %v547
  %v674 = vpop.f32.mrb[0].mxu0
  %v675 = vadd.f32 0.0, %v674
  %v676 = vpop.f32.mrb[0].mxu0
  %v677 = vpop.f32.mrb[0].mxu0
  %v678 = vadd.f32 0.0, %v677
  %v679 = vpop.f32.mrb[0].mxu0
  %680 = vmatprep.mubr.bf16.mxu0 0
  %681 = vmatmul.mubr.bf16.gmra.mrb[0].mxu0 %v550
  %v682 = vpop.f32.mrb[0].mxu0
  %v683 = vadd.f32 0.0, %v682
  %v684 = vpop.f32.mrb[0].mxu0
  %v685 = vpop.f32.mrb[0].mxu0
  %v686 = vadd.f32 0.0, %v685
  %v687 = vpop.f32.mrb[0].mxu0
  %688 = vmatprep.mubr.bf16.mxu0 0
  %689 = vmatmul.mubr.bf16.gmra.mrb[0].mxu0 %v553
  %v690 = vpop.f32.mrb[0].mxu0
  %v691 = vadd.f32 0.0, %v690
  %v692 = vpop.f32.mrb[0].mxu0
  %v693 = vpop.f32.mrb[0].mxu0
  %v694 = vadd.f32 0.0, %v693
  %v695 = vpop.f32.mrb[0].mxu0
  %696 = vmatprep.mubr.bf16.mxu0 0
  %697 = vmatmul.mubr.bf16.gmra.mrb[0].mxu0 %v556
  %v698 = vpop.f32.mrb[0].mxu0
  %v699 = vadd.f32 0.0, %v698
  %v700 = vpop.f32.mrb[0].mxu0
  %v701 = vpop.f32.mrb[0].mxu0
  %v702 = vadd.f32 0.0, %v701
  %v703 = vpop.f32.mrb[0].mxu0
  %704 = vmatprep.mubr.bf16.mxu0 0
  %705 = vmatmul.mubr.bf16.gmra.mrb[0].mxu0 %v559
  %v706 = vpop.f32.mrb[0].mxu0
  %v707 = vadd.f32 0.0, %v706
  %v708 = vpop.f32.mrb[0].mxu0
  %v709 = vpop.f32.mrb[0].mxu0
  %v710 = vadd.f32 0.0, %v709
  %v711 = vpop.f32.mrb[0].mxu0
  %712 = vmatprep.mubr.bf16.mxu0 0
  %713 = vmatmul.mubr.bf16.gmra.mrb[0].mxu0 %v562
  %v714 = vpop.f32.mrb[0].mxu0
  %v715 = vadd.f32 0.0, %v714
  %v716 = vpop.f32.mrb[0].mxu0
  %v717 = vpop.f32.mrb[0].mxu0
  %v718 = vadd.f32 0.0, %v717
  %v719 = vpop.f32.mrb[0].mxu0
  %720 = vmatprep.mubr.bf16.mxu0 0
  %721 = vmatmul.mubr.bf16.gmra.mrb[0].mxu0 %v565
  %v722 = vpop.f32.mrb[0].mxu0
  %v723 = vadd.f32 0.0, %v722
  %v724 = vpop.f32.mrb[0].mxu0
  %v725 = vpop.f32.mrb[0].mxu0
  %v726 = vadd.f32 0.0, %v725
  %v727 = vpop.f32.mrb[0].mxu0
  %728 = vmatprep.mubr.bf16.mxu0 0
  %729 = vmatmul.mubr.bf16.gmra.mrb[0].mxu0 %v568
  %v730 = vpop.f32.mrb[0].mxu0
  %v731 = vadd.f32 0.0, %v730
  %v732 = vpop.f32.mrb[0].mxu0
  %v733 = vpop.f32.mrb[0].mxu0
  %v734 = vadd.f32 0.0, %v733
  %v735 = vpop.f32.mrb[0].mxu0
  %736 = vmatprep.mubr.bf16.mxu0 0
  %737 = vmatmul.mubr.bf16.gmra.mrb[0].mxu0 %v571
  %v738 = vpop.f32.mrb[0].mxu0
  %v739 = vadd.f32 0.0, %v738
  %v740 = vpop.f32.mrb[0].mxu0
  %v741 = vpop.f32.mrb[0].mxu0
  %v742 = vadd.f32 0.0, %v741
  %v743 = vpop.f32.mrb[0].mxu0
  %744 = vmatprep.mubr.bf16.mxu0 0
  %745 = vmatmul.mubr.bf16.gmra.mrb[0].mxu0 %v574
  %v746 = vpop.f32.mrb[0].mxu0
  %v747 = vadd.f32 0.0, %v746
  %v748 = vpop.f32.mrb[0].mxu0
  %v749 = vpop.f32.mrb[0].mxu0
  %v750 = vadd.f32 0.0, %v749
  %v751 = vpop.f32.mrb[0].mxu0
  %752 = vdwg.mxu0
  %s753 = scalar_lea.vmem %s0, 288
  %v754 = vld [vmem:[%s753] sm:$0xf]
  %v755 = vld [vmem:[%s753 + $0x4] sm:$0xf]
  %v756 = vld [vmem:[%s753 + $0x8] sm:$0xf]
  %v757 = vld [vmem:[%s753 + $0xc] sm:$0xf]
  %v758 = vld [vmem:[%s753 + $0x10] sm:$0xf]
  %v759 = vld [vmem:[%s753 + $0x14] sm:$0xf]
  %v760 = vld [vmem:[%s753 + $0x18] sm:$0xf]
  %v761 = vld [vmem:[%s753 + $0x1c] sm:$0xf]
  %v762 = vld [vmem:[%s753 + $0x20] sm:$0xf]
  %v763 = vld [vmem:[%s753 + $0x24] sm:$0xf]
  %v764 = vld [vmem:[%s753 + $0x28] sm:$0xf]
  %v765 = vld [vmem:[%s753 + $0x2c] sm:$0xf]
  %v766 = vld [vmem:[%s753 + $0x30] sm:$0xf]
  %v767 = vld [vmem:[%s753 + $0x34] sm:$0xf]
  %v768 = vld [vmem:[%s753 + $0x38] sm:$0xf]
  %v769 = vld [vmem:[%s753 + $0x3c] sm:$0xf]
  %v770 = vld [vmem:[%s753 + $0x40] sm:$0xf]
  %v771 = vld [vmem:[%s753 + $0x44] sm:$0xf]
  %v772 = vld [vmem:[%s753 + $0x48] sm:$0xf]
  %v773 = vld [vmem:[%s753 + $0x4c] sm:$0xf]
  %v774 = vld [vmem:[%s753 + $0x50] sm:$0xf]
  %v775 = vld [vmem:[%s753 + $0x54] sm:$0xf]
  %v776 = vld [vmem:[%s753 + $0x58] sm:$0xf]
  %v777 = vld [vmem:[%s753 + $0x5c] sm:$0xf]
  %v778 = vld [vmem:[%s753 + $0x60] sm:$0xf]
  %v779 = vld [vmem:[%s753 + $0x64] sm:$0xf]
  %v780 = vld [vmem:[%s753 + $0x68] sm:$0xf]
  %v781 = vld [vmem:[%s753 + $0x6c] sm:$0xf]
  %v782 = vld [vmem:[%s753 + $0x70] sm:$0xf]
  %v783 = vld [vmem:[%s753 + $0x74] sm:$0xf]
  %v784 = vld [vmem:[%s753 + $0x78] sm:$0xf]
  %v785 = vld [vmem:[%s753 + $0x7c] sm:$0xf]
  %v786 = vld [vmem:[%s753 + $0x80] sm:$0xf]
  %v787 = vld [vmem:[%s753 + $0x84] sm:$0xf]
  %v788 = vld [vmem:[%s753 + $0x88] sm:$0xf]
  %v789 = vld [vmem:[%s753 + $0x8c] sm:$0xf]
  %v826 = vunpack.c.l.b16 %v754
  %v827 = vunpack.c.l.b16 %v755
  %v828 = vunpack.c.l.b16 %v756
  %v829 = vunpack.c.l.b16 %v757
  %v830 = vunpack.c.l.b16 %v758
  %v831 = vunpack.c.l.b16 %v759
  %v832 = vunpack.c.l.b16 %v760
  %v833 = vunpack.c.l.b16 %v761
  %v834 = vunpack.c.l.b16 %v762
  %v835 = vunpack.c.l.b16 %v763
  %v836 = vunpack.c.l.b16 %v764
  %v837 = vunpack.c.l.b16 %v765
  %v838 = vunpack.c.l.b16 %v766
  %v839 = vunpack.c.l.b16 %v767
  %v840 = vunpack.c.l.b16 %v768
  %v841 = vunpack.c.l.b16 %v769
  %v842 = vunpack.c.l.b16 %v770
  %v843 = vunpack.c.l.b16 %v771
  %v844 = vunpack.c.l.b16 %v772
  %v845 = vunpack.c.l.b16 %v773
  %v846 = vunpack.c.l.b16 %v774
  %v847 = vunpack.c.l.b16 %v775
  %v848 = vunpack.c.l.b16 %v776
  %v849 = vunpack.c.l.b16 %v777
  %v850 = vunpack.c.l.b16 %v778
  %v851 = vunpack.c.l.b16 %v779
  %v852 = vunpack.c.l.b16 %v780
  %v853 = vunpack.c.l.b16 %v781
  %v854 = vunpack.c.l.b16 %v782
  %v855 = vunpack.c.l.b16 %v783
  %v856 = vunpack.c.l.b16 %v784
  %v857 = vunpack.c.l.b16 %v785
  %v858 = vunpack.c.l.b16 %v786
  %v859 = vunpack.c.l.b16 %v787
  %v860 = vunpack.c.l.b16 %v788
  %v861 = vunpack.c.l.b16 %v789
  %v862 = vpack.c.b16 %v827, %v826
  %v863 = vpack.c.b16 %v829, %v828
  %v864 = vpack.c.b16 %v831, %v830
  %v865 = vpack.c.b16 %v833, %v832
  %v866 = vpack.c.b16 %v835, %v834
  %v867 = vpack.c.b16 %v837, %v836
  %v868 = vpack.c.b16 %v839, %v838
  %v869 = vpack.c.b16 %v841, %v840
  %v870 = vpack.c.b16 %v843, %v842
  %v871 = vpack.c.b16 %v845, %v844
  %v872 = vpack.c.b16 %v847, %v846
  %v873 = vpack.c.b16 %v849, %v848
  %v874 = vpack.c.b16 %v851, %v850
  %v875 = vpack.c.b16 %v853, %v852
  %v876 = vpack.c.b16 %v855, %v854
  %v877 = vpack.c.b16 %v857, %v856
  %v878 = vpack.c.b16 %v859, %v858
  %v879 = vpack.c.b16 %v861, %v860
  %v881 = vsel %vm156, %v862, 0
  %v884 = vsel %vm156, %v863, 0
  %v887 = vsel %vm156, %v864, 0
  %v890 = vsel %vm156, %v865, 0
  %v893 = vsel %vm156, %v866, 0
  %v896 = vsel %vm156, %v867, 0
  %v899 = vsel %vm156, %v868, 0
  %v902 = vsel %vm156, %v869, 0
  %v905 = vsel %vm156, %v870, 0
  %v908 = vsel %vm156, %v871, 0
  %v911 = vsel %vm156, %v872, 0
  %v914 = vsel %vm156, %v873, 0
  %v917 = vsel %vm156, %v874, 0
  %v920 = vsel %vm156, %v875, 0
  %v923 = vsel %vm156, %v876, 0
  %v926 = vsel %vm156, %v877, 0
  %v929 = vsel %vm156, %v878, 0
  %v932 = vsel %vm156, %v879, 0
  %934 = vmatprep.subr.bf16.mxu0 0
  %935 = vmatpush1.bf16.msra.mxu0 %v153
  %936 = vmatprep.subr.bf16.mxu0 0
  %937 = vmatpush1.bf16.msra.mxu0 %v216
  %938 = vmatprep.subr.bf16.mxu0 0
  %939 = vmatpush1.bf16.msra.mxu0 0
  %940 = vmatprep.subr.bf16.mxu0 0
  %941 = vmatpush1.bf16.msra.mxu0 0
  %942 = vmatprep.subr.bf16.mxu0 0
  %943 = vmatpush1.bf16.msra.mxu0 0
  %944 = vmatprep.subr.bf16.mxu0 0
  %945 = vmatpush1.bf16.msra.mxu0 0
  %946 = vmatprep.subr.bf16.mxu0 0
  %947 = vmatpush1.bf16.msra.mxu0 0
  %948 = vmatprep.subr.bf16.mxu0 0
  %949 = vmatpush1.bf16.msra.mxu0 0
  %950 = vmatprep.subr.bf16.mxu0 0
  %951 = vmatpush1.bf16.msra.mxu0 0
  %952 = vmatprep.subr.bf16.mxu0 0
  %953 = vmatpush1.bf16.msra.mxu0 0
  %954 = vmatprep.subr.bf16.mxu0 0
  %955 = vmatpush1.bf16.msra.mxu0 0
  %956 = vmatprep.subr.bf16.mxu0 0
  %957 = vmatpush1.bf16.msra.mxu0 0
  %958 = vmatprep.subr.bf16.mxu0 0
  %959 = vmatpush1.bf16.msra.mxu0 0
  %960 = vmatprep.subr.bf16.mxu0 0
  %961 = vmatpush1.bf16.msra.mxu0 0
  %962 = vmatprep.subr.bf16.mxu0 0
  %963 = vmatpush1.bf16.msra.mxu0 0
  %964 = vmatprep.subr.bf16.mxu0 0
  %965 = vmatpush1.bf16.msra.mxu0 0
  %966 = vmatprep.mubr.bf16.mxu0 0
  %967 = vmatmul.mubr.bf16.gmra.mrb[0].mxu0 %v881
  %v968 = vpop.f32.mrb[0].mxu0
  %v969 = vadd.f32 0.0, %v968
  %v970 = vpop.f32.mrb[0].mxu0
  %v971 = vpop.f32.mrb[0].mxu0
  %v972 = vadd.f32 0.0, %v971
  %v973 = vpop.f32.mrb[0].mxu0
  %974 = vmatprep.mubr.bf16.mxu0 0
  %975 = vmatmul.mubr.bf16.gmra.mrb[0].mxu0 %v884
  %v976 = vpop.f32.mrb[0].mxu0
  %v977 = vadd.f32 0.0, %v976
  %v978 = vpop.f32.mrb[0].mxu0
  %v979 = vpop.f32.mrb[0].mxu0
  %v980 = vadd.f32 0.0, %v979
  %v981 = vpop.f32.mrb[0].mxu0
  %982 = vmatprep.mubr.bf16.mxu0 0
  %983 = vmatmul.mubr.bf16.gmra.mrb[0].mxu0 %v887
  %v984 = vpop.f32.mrb[0].mxu0
  %v985 = vadd.f32 0.0, %v984
  %v986 = vpop.f32.mrb[0].mxu0
  %v987 = vpop.f32.mrb[0].mxu0
  %v988 = vadd.f32 0.0, %v987
  %v989 = vpop.f32.mrb[0].mxu0
  %990 = vmatprep.mubr.bf16.mxu0 0
  %991 = vmatmul.mubr.bf16.gmra.mrb[0].mxu0 %v890
  %v992 = vpop.f32.mrb[0].mxu0
  %v993 = vadd.f32 0.0, %v992
  %v994 = vpop.f32.mrb[0].mxu0
  %v995 = vpop.f32.mrb[0].mxu0
  %v996 = vadd.f32 0.0, %v995
  %v997 = vpop.f32.mrb[0].mxu0
  %998 = vmatprep.mubr.bf16.mxu0 0
  %999 = vmatmul.mubr.bf16.gmra.mrb[0].mxu0 %v893
  %v1000 = vpop.f32.mrb[0].mxu0
  %v1001 = vadd.f32 0.0, %v1000
  %v1002 = vpop.f32.mrb[0].mxu0
  %v1003 = vpop.f32.mrb[0].mxu0
  %v1004 = vadd.f32 0.0, %v1003
  %v1005 = vpop.f32.mrb[0].mxu0
  %1006 = vmatprep.mubr.bf16.mxu0 0
  %1007 = vmatmul.mubr.bf16.gmra.mrb[0].mxu0 %v896
  %v1008 = vpop.f32.mrb[0].mxu0
  %v1009 = vadd.f32 0.0, %v1008
  %v1010 = vpop.f32.mrb[0].mxu0
  %v1011 = vpop.f32.mrb[0].mxu0
  %v1012 = vadd.f32 0.0, %v1011
  %v1013 = vpop.f32.mrb[0].mxu0
  %1014 = vmatprep.mubr.bf16.mxu0 0
  %1015 = vmatmul.mubr.bf16.gmra.mrb[0].mxu0 %v899
  %v1016 = vpop.f32.mrb[0].mxu0
  %v1017 = vadd.f32 0.0, %v1016
  %v1018 = vpop.f32.mrb[0].mxu0
  %v1019 = vpop.f32.mrb[0].mxu0
  %v1020 = vadd.f32 0.0, %v1019
  %v1021 = vpop.f32.mrb[0].mxu0
  %1022 = vmatprep.mubr.bf16.mxu0 0
  %1023 = vmatmul.mubr.bf16.gmra.mrb[0].mxu0 %v902
  %v1024 = vpop.f32.mrb[0].mxu0
  %v1025 = vadd.f32 0.0, %v1024
  %v1026 = vpop.f32.mrb[0].mxu0
  %v1027 = vpop.f32.mrb[0].mxu0
  %v1028 = vadd.f32 0.0, %v1027
  %v1029 = vpop.f32.mrb[0].mxu0
  %1030 = vmatprep.mubr.bf16.mxu0 0
  %1031 = vmatmul.mubr.bf16.gmra.mrb[0].mxu0 %v905
  %v1032 = vpop.f32.mrb[0].mxu0
  %v1033 = vadd.f32 0.0, %v1032
  %v1034 = vpop.f32.mrb[0].mxu0
  %v1035 = vpop.f32.mrb[0].mxu0
  %v1036 = vadd.f32 0.0, %v1035
  %v1037 = vpop.f32.mrb[0].mxu0
  %1038 = vmatprep.mubr.bf16.mxu0 0
  %1039 = vmatmul.mubr.bf16.gmra.mrb[0].mxu0 %v908
  %v1040 = vpop.f32.mrb[0].mxu0
  %v1041 = vadd.f32 0.0, %v1040
  %v1042 = vpop.f32.mrb[0].mxu0
  %v1043 = vpop.f32.mrb[0].mxu0
  %v1044 = vadd.f32 0.0, %v1043
  %v1045 = vpop.f32.mrb[0].mxu0
  %1046 = vmatprep.mubr.bf16.mxu0 0
  %1047 = vmatmul.mubr.bf16.gmra.mrb[0].mxu0 %v911
  %v1048 = vpop.f32.mrb[0].mxu0
  %v1049 = vadd.f32 0.0, %v1048
  %v1050 = vpop.f32.mrb[0].mxu0
  %v1051 = vpop.f32.mrb[0].mxu0
  %v1052 = vadd.f32 0.0, %v1051
  %v1053 = vpop.f32.mrb[0].mxu0
  %1054 = vmatprep.mubr.bf16.mxu0 0
  %1055 = vmatmul.mubr.bf16.gmra.mrb[0].mxu0 %v914
  %v1056 = vpop.f32.mrb[0].mxu0
  %v1057 = vadd.f32 0.0, %v1056
  %v1058 = vpop.f32.mrb[0].mxu0
  %v1059 = vpop.f32.mrb[0].mxu0
  %v1060 = vadd.f32 0.0, %v1059
  %v1061 = vpop.f32.mrb[0].mxu0
  %1062 = vmatprep.mubr.bf16.mxu0 0
  %1063 = vmatmul.mubr.bf16.gmra.mrb[0].mxu0 %v917
  %v1064 = vpop.f32.mrb[0].mxu0
  %v1065 = vadd.f32 0.0, %v1064
  %v1066 = vpop.f32.mrb[0].mxu0
  %v1067 = vpop.f32.mrb[0].mxu0
  %v1068 = vadd.f32 0.0, %v1067
  %v1069 = vpop.f32.mrb[0].mxu0
  %1070 = vmatprep.mubr.bf16.mxu0 0
  %1071 = vmatmul.mubr.bf16.gmra.mrb[0].mxu0 %v920
  %v1072 = vpop.f32.mrb[0].mxu0
  %v1073 = vadd.f32 0.0, %v1072
  %v1074 = vpop.f32.mrb[0].mxu0
  %v1075 = vpop.f32.mrb[0].mxu0
  %v1076 = vadd.f32 0.0, %v1075
  %v1077 = vpop.f32.mrb[0].mxu0
  %1078 = vmatprep.mubr.bf16.mxu0 0
  %1079 = vmatmul.mubr.bf16.gmra.mrb[0].mxu0 %v923
  %v1080 = vpop.f32.mrb[0].mxu0
  %v1081 = vadd.f32 0.0, %v1080
  %v1082 = vpop.f32.mrb[0].mxu0
  %v1083 = vpop.f32.mrb[0].mxu0
  %v1084 = vadd.f32 0.0, %v1083
  %v1085 = vpop.f32.mrb[0].mxu0
  %1086 = vmatprep.mubr.bf16.mxu0 0
  %1087 = vmatmul.mubr.bf16.gmra.mrb[0].mxu0 %v926
  %v1088 = vpop.f32.mrb[0].mxu0
  %v1089 = vadd.f32 0.0, %v1088
  %v1090 = vpop.f32.mrb[0].mxu0
  %v1091 = vpop.f32.mrb[0].mxu0
  %v1092 = vadd.f32 0.0, %v1091
  %v1093 = vpop.f32.mrb[0].mxu0
  %1094 = vmatprep.mubr.bf16.mxu0 0
  %1095 = vmatmul.mubr.bf16.gmra.mrb[0].mxu0 %v929
  %v1096 = vpop.f32.mrb[0].mxu0
  %v1097 = vadd.f32 0.0, %v1096
  %v1098 = vpop.f32.mrb[0].mxu0
  %v1099 = vpop.f32.mrb[0].mxu0
  %v1100 = vadd.f32 0.0, %v1099
  %v1101 = vpop.f32.mrb[0].mxu0
  %1102 = vmatprep.mubr.bf16.mxu0 0
  %1103 = vmatmul.mubr.bf16.gmra.mrb[0].mxu0 %v932
  %v1104 = vpop.f32.mrb[0].mxu0
  %v1105 = vadd.f32 0.0, %v1104
  %v1106 = vpop.f32.mrb[0].mxu0
  %v1107 = vpop.f32.mrb[0].mxu0
  %v1108 = vadd.f32 0.0, %v1107
  %v1109 = vpop.f32.mrb[0].mxu0
  %1110 = vdwg.mxu0
  %s1111 = scalar_lea.vmem %s0, 432
  %v1112 = vld [vmem:[%s1111] sm:$0xf]
  %v1113 = vld [vmem:[%s1111 + $0x4] sm:$0xf]
  %v1114 = vld [vmem:[%s1111 + $0x8] sm:$0xf]
  %v1115 = vld [vmem:[%s1111 + $0xc] sm:$0xf]
  %v1116 = vld [vmem:[%s1111 + $0x10] sm:$0xf]
  %v1117 = vld [vmem:[%s1111 + $0x14] sm:$0xf]
  %v1118 = vld [vmem:[%s1111 + $0x18] sm:$0xf]
  %v1119 = vld [vmem:[%s1111 + $0x1c] sm:$0xf]
  %v1120 = vld [vmem:[%s1111 + $0x20] sm:$0xf]
  %v1121 = vld [vmem:[%s1111 + $0x24] sm:$0xf]
  %v1122 = vld [vmem:[%s1111 + $0x28] sm:$0xf]
  %v1123 = vld [vmem:[%s1111 + $0x2c] sm:$0xf]
  %v1124 = vld [vmem:[%s1111 + $0x30] sm:$0xf]
  %v1125 = vld [vmem:[%s1111 + $0x34] sm:$0xf]
  %v1126 = vld [vmem:[%s1111 + $0x38] sm:$0xf]
  %v1127 = vld [vmem:[%s1111 + $0x3c] sm:$0xf]
  %v1128 = vld [vmem:[%s1111 + $0x40] sm:$0xf]
  %v1129 = vld [vmem:[%s1111 + $0x44] sm:$0xf]
  %v1130 = vld [vmem:[%s1111 + $0x48] sm:$0xf]
  %v1131 = vld [vmem:[%s1111 + $0x4c] sm:$0xf]
  %v1132 = vld [vmem:[%s1111 + $0x50] sm:$0xf]
  %v1133 = vld [vmem:[%s1111 + $0x54] sm:$0xf]
  %v1134 = vld [vmem:[%s1111 + $0x58] sm:$0xf]
  %v1135 = vld [vmem:[%s1111 + $0x5c] sm:$0xf]
  %v1136 = vld [vmem:[%s1111 + $0x60] sm:$0xf]
  %v1137 = vld [vmem:[%s1111 + $0x64] sm:$0xf]
  %v1138 = vld [vmem:[%s1111 + $0x68] sm:$0xf]
  %v1139 = vld [vmem:[%s1111 + $0x6c] sm:$0xf]
  %v1140 = vld [vmem:[%s1111 + $0x70] sm:$0xf]
  %v1141 = vld [vmem:[%s1111 + $0x74] sm:$0xf]
  %v1142 = vld [vmem:[%s1111 + $0x78] sm:$0xf]
  %v1143 = vld [vmem:[%s1111 + $0x7c] sm:$0xf]
  %v1144 = vld [vmem:[%s1111 + $0x80] sm:$0xf]
  %v1145 = vld [vmem:[%s1111 + $0x84] sm:$0xf]
  %v1146 = vld [vmem:[%s1111 + $0x88] sm:$0xf]
  %v1147 = vld [vmem:[%s1111 + $0x8c] sm:$0xf]
  %v1184 = vunpack.c.l.b16 %v1112
  %v1185 = vunpack.c.l.b16 %v1113
  %v1186 = vunpack.c.l.b16 %v1114
  %v1187 = vunpack.c.l.b16 %v1115
  %v1188 = vunpack.c.l.b16 %v1116
  %v1189 = vunpack.c.l.b16 %v1117
  %v1190 = vunpack.c.l.b16 %v1118
  %v1191 = vunpack.c.l.b16 %v1119
  %v1192 = vunpack.c.l.b16 %v1120
  %v1193 = vunpack.c.l.b16 %v1121
  %v1194 = vunpack.c.l.b16 %v1122
  %v1195 = vunpack.c.l.b16 %v1123
  %v1196 = vunpack.c.l.b16 %v1124
  %v1197 = vunpack.c.l.b16 %v1125
  %v1198 = vunpack.c.l.b16 %v1126
  %v1199 = vunpack.c.l.b16 %v1127
  %v1200 = vunpack.c.l.b16 %v1128
  %v1201 = vunpack.c.l.b16 %v1129
  %v1202 = vunpack.c.l.b16 %v1130
  %v1203 = vunpack.c.l.b16 %v1131
  %v1204 = vunpack.c.l.b16 %v1132
  %v1205 = vunpack.c.l.b16 %v1133
  %v1206 = vunpack.c.l.b16 %v1134
  %v1207 = vunpack.c.l.b16 %v1135
  %v1208 = vunpack.c.l.b16 %v1136
  %v1209 = vunpack.c.l.b16 %v1137
  %v1210 = vunpack.c.l.b16 %v1138
  %v1211 = vunpack.c.l.b16 %v1139
  %v1212 = vunpack.c.l.b16 %v1140
  %v1213 = vunpack.c.l.b16 %v1141
  %v1214 = vunpack.c.l.b16 %v1142
  %v1215 = vunpack.c.l.b16 %v1143
  %v1216 = vunpack.c.l.b16 %v1144
  %v1217 = vunpack.c.l.b16 %v1145
  %v1218 = vunpack.c.l.b16 %v1146
  %v1219 = vunpack.c.l.b16 %v1147
  %v1220 = vpack.c.b16 %v1185, %v1184
  %v1221 = vpack.c.b16 %v1187, %v1186
  %v1222 = vpack.c.b16 %v1189, %v1188
  %v1223 = vpack.c.b16 %v1191, %v1190
  %v1224 = vpack.c.b16 %v1193, %v1192
  %v1225 = vpack.c.b16 %v1195, %v1194
  %v1226 = vpack.c.b16 %v1197, %v1196
  %v1227 = vpack.c.b16 %v1199, %v1198
  %v1228 = vpack.c.b16 %v1201, %v1200
  %v1229 = vpack.c.b16 %v1203, %v1202
  %v1230 = vpack.c.b16 %v1205, %v1204
  %v1231 = vpack.c.b16 %v1207, %v1206
  %v1232 = vpack.c.b16 %v1209, %v1208
  %v1233 = vpack.c.b16 %v1211, %v1210
  %v1234 = vpack.c.b16 %v1213, %v1212
  %v1235 = vpack.c.b16 %v1215, %v1214
  %v1236 = vpack.c.b16 %v1217, %v1216
  %v1237 = vpack.c.b16 %v1219, %v1218
  %v1239 = vsel %vm156, %v1220, 0
  %v1242 = vsel %vm156, %v1221, 0
  %v1245 = vsel %vm156, %v1222, 0
  %v1248 = vsel %vm156, %v1223, 0
  %v1251 = vsel %vm156, %v1224, 0
  %v1254 = vsel %vm156, %v1225, 0
  %v1257 = vsel %vm156, %v1226, 0
  %v1260 = vsel %vm156, %v1227, 0
  %v1263 = vsel %vm156, %v1228, 0
  %v1266 = vsel %vm156, %v1229, 0
  %v1269 = vsel %vm156, %v1230, 0
  %v1272 = vsel %vm156, %v1231, 0
  %v1275 = vsel %vm156, %v1232, 0
  %v1278 = vsel %vm156, %v1233, 0
  %v1281 = vsel %vm156, %v1234, 0
  %v1284 = vsel %vm156, %v1235, 0
  %v1287 = vsel %vm156, %v1236, 0
  %v1290 = vsel %vm156, %v1237, 0
  %1292 = vmatprep.subr.bf16.mxu0 0
  %1293 = vmatpush1.bf16.msra.mxu0 %v153
  %1294 = vmatprep.subr.bf16.mxu0 0
  %1295 = vmatpush1.bf16.msra.mxu0 %v216
  %1296 = vmatprep.subr.bf16.mxu0 0
  %1297 = vmatpush1.bf16.msra.mxu0 0
  %1298 = vmatprep.subr.bf16.mxu0 0
  %1299 = vmatpush1.bf16.msra.mxu0 0
  %1300 = vmatprep.subr.bf16.mxu0 0
  %1301 = vmatpush1.bf16.msra.mxu0 0
  %1302 = vmatprep.subr.bf16.mxu0 0
  %1303 = vmatpush1.bf16.msra.mxu0 0
  %1304 = vmatprep.subr.bf16.mxu0 0
  %1305 = vmatpush1.bf16.msra.mxu0 0
  %1306 = vmatprep.subr.bf16.mxu0 0
  %1307 = vmatpush1.bf16.msra.mxu0 0
  %1308 = vmatprep.subr.bf16.mxu0 0
  %1309 = vmatpush1.bf16.msra.mxu0 0
  %1310 = vmatprep.subr.bf16.mxu0 0
  %1311 = vmatpush1.bf16.msra.mxu0 0
  %1312 = vmatprep.subr.bf16.mxu0 0
  %1313 = vmatpush1.bf16.msra.mxu0 0
  %1314 = vmatprep.subr.bf16.mxu0 0
  %1315 = vmatpush1.bf16.msra.mxu0 0
  %1316 = vmatprep.subr.bf16.mxu0 0
  %1317 = vmatpush1.bf16.msra.mxu0 0
  %1318 = vmatprep.subr.bf16.mxu0 0
  %1319 = vmatpush1.bf16.msra.mxu0 0
  %1320 = vmatprep.subr.bf16.mxu0 0
  %1321 = vmatpush1.bf16.msra.mxu0 0
  %1322 = vmatprep.subr.bf16.mxu0 0
  %1323 = vmatpush1.bf16.msra.mxu0 0
  %1324 = vmatprep.mubr.bf16.mxu0 0
  %1325 = vmatmul.mubr.bf16.gmra.mrb[0].mxu0 %v1239
  %v1326 = vpop.f32.mrb[0].mxu0
  %v1327 = vadd.f32 0.0, %v1326
  %v1328 = vpop.f32.mrb[0].mxu0
  %v1329 = vpop.f32.mrb[0].mxu0
  %v1330 = vadd.f32 0.0, %v1329
  %v1331 = vpop.f32.mrb[0].mxu0
  %1332 = vmatprep.mubr.bf16.mxu0 0
  %1333 = vmatmul.mubr.bf16.gmra.mrb[0].mxu0 %v1242
  %v1334 = vpop.f32.mrb[0].mxu0
  %v1335 = vadd.f32 0.0, %v1334
  %v1336 = vpop.f32.mrb[0].mxu0
  %v1337 = vpop.f32.mrb[0].mxu0
  %v1338 = vadd.f32 0.0, %v1337
  %v1339 = vpop.f32.mrb[0].mxu0
  %1340 = vmatprep.mubr.bf16.mxu0 0
  %1341 = vmatmul.mubr.bf16.gmra.mrb[0].mxu0 %v1245
  %v1342 = vpop.f32.mrb[0].mxu0
  %v1343 = vadd.f32 0.0, %v1342
  %v1344 = vpop.f32.mrb[0].mxu0
  %v1345 = vpop.f32.mrb[0].mxu0
  %v1346 = vadd.f32 0.0, %v1345
  %v1347 = vpop.f32.mrb[0].mxu0
  %1348 = vmatprep.mubr.bf16.mxu0 0
  %1349 = vmatmul.mubr.bf16.gmra.mrb[0].mxu0 %v1248
  %v1350 = vpop.f32.mrb[0].mxu0
  %v1351 = vadd.f32 0.0, %v1350
  %v1352 = vpop.f32.mrb[0].mxu0
  %v1353 = vpop.f32.mrb[0].mxu0
  %v1354 = vadd.f32 0.0, %v1353
  %v1355 = vpop.f32.mrb[0].mxu0
  %1356 = vmatprep.mubr.bf16.mxu0 0
  %1357 = vmatmul.mubr.bf16.gmra.mrb[0].mxu0 %v1251
  %v1358 = vpop.f32.mrb[0].mxu0
  %v1359 = vadd.f32 0.0, %v1358
  %v1360 = vpop.f32.mrb[0].mxu0
  %v1361 = vpop.f32.mrb[0].mxu0
  %v1362 = vadd.f32 0.0, %v1361
  %v1363 = vpop.f32.mrb[0].mxu0
  %1364 = vmatprep.mubr.bf16.mxu0 0
  %1365 = vmatmul.mubr.bf16.gmra.mrb[0].mxu0 %v1254
  %v1366 = vpop.f32.mrb[0].mxu0
  %v1367 = vadd.f32 0.0, %v1366
  %v1368 = vpop.f32.mrb[0].mxu0
  %v1369 = vpop.f32.mrb[0].mxu0
  %v1370 = vadd.f32 0.0, %v1369
  %v1371 = vpop.f32.mrb[0].mxu0
  %1372 = vmatprep.mubr.bf16.mxu0 0
  %1373 = vmatmul.mubr.bf16.gmra.mrb[0].mxu0 %v1257
  %v1374 = vpop.f32.mrb[0].mxu0
  %v1375 = vadd.f32 0.0, %v1374
  %v1376 = vpop.f32.mrb[0].mxu0
  %v1377 = vpop.f32.mrb[0].mxu0
  %v1378 = vadd.f32 0.0, %v1377
  %v1379 = vpop.f32.mrb[0].mxu0
  %1380 = vmatprep.mubr.bf16.mxu0 0
  %1381 = vmatmul.mubr.bf16.gmra.mrb[0].mxu0 %v1260
  %v1382 = vpop.f32.mrb[0].mxu0
  %v1383 = vadd.f32 0.0, %v1382
  %v1384 = vpop.f32.mrb[0].mxu0
  %v1385 = vpop.f32.mrb[0].mxu0
  %v1386 = vadd.f32 0.0, %v1385
  %v1387 = vpop.f32.mrb[0].mxu0
  %1388 = vmatprep.mubr.bf16.mxu0 0
  %1389 = vmatmul.mubr.bf16.gmra.mrb[0].mxu0 %v1263
  %v1390 = vpop.f32.mrb[0].mxu0
  %v1391 = vadd.f32 0.0, %v1390
  %v1392 = vpop.f32.mrb[0].mxu0
  %v1393 = vpop.f32.mrb[0].mxu0
  %v1394 = vadd.f32 0.0, %v1393
  %v1395 = vpop.f32.mrb[0].mxu0
  %1396 = vmatprep.mubr.bf16.mxu0 0
  %1397 = vmatmul.mubr.bf16.gmra.mrb[0].mxu0 %v1266
  %v1398 = vpop.f32.mrb[0].mxu0
  %v1399 = vadd.f32 0.0, %v1398
  %v1400 = vpop.f32.mrb[0].mxu0
  %v1401 = vpop.f32.mrb[0].mxu0
  %v1402 = vadd.f32 0.0, %v1401
  %v1403 = vpop.f32.mrb[0].mxu0
  %1404 = vmatprep.mubr.bf16.mxu0 0
  %1405 = vmatmul.mubr.bf16.gmra.mrb[0].mxu0 %v1269
  %v1406 = vpop.f32.mrb[0].mxu0
  %v1407 = vadd.f32 0.0, %v1406
  %v1408 = vpop.f32.mrb[0].mxu0
  %v1409 = vpop.f32.mrb[0].mxu0
  %v1410 = vadd.f32 0.0, %v1409
  %v1411 = vpop.f32.mrb[0].mxu0
  %1412 = vmatprep.mubr.bf16.mxu0 0
  %1413 = vmatmul.mubr.bf16.gmra.mrb[0].mxu0 %v1272
  %v1414 = vpop.f32.mrb[0].mxu0
  %v1415 = vadd.f32 0.0, %v1414
  %v1416 = vpop.f32.mrb[0].mxu0
  %v1417 = vpop.f32.mrb[0].mxu0
  %v1418 = vadd.f32 0.0, %v1417
  %v1419 = vpop.f32.mrb[0].mxu0
  %1420 = vmatprep.mubr.bf16.mxu0 0
  %1421 = vmatmul.mubr.bf16.gmra.mrb[0].mxu0 %v1275
  %v1422 = vpop.f32.mrb[0].mxu0
  %v1423 = vadd.f32 0.0, %v1422
  %v1424 = vpop.f32.mrb[0].mxu0
  %v1425 = vpop.f32.mrb[0].mxu0
  %v1426 = vadd.f32 0.0, %v1425
  %v1427 = vpop.f32.mrb[0].mxu0
  %1428 = vmatprep.mubr.bf16.mxu0 0
  %1429 = vmatmul.mubr.bf16.gmra.mrb[0].mxu0 %v1278
  %v1430 = vpop.f32.mrb[0].mxu0
  %v1431 = vadd.f32 0.0, %v1430
  %v1432 = vpop.f32.mrb[0].mxu0
  %v1433 = vpop.f32.mrb[0].mxu0
  %v1434 = vadd.f32 0.0, %v1433
  %v1435 = vpop.f32.mrb[0].mxu0
  %1436 = vmatprep.mubr.bf16.mxu0 0
  %1437 = vmatmul.mubr.bf16.gmra.mrb[0].mxu0 %v1281
  %v1438 = vpop.f32.mrb[0].mxu0
  %v1439 = vadd.f32 0.0, %v1438
  %v1440 = vpop.f32.mrb[0].mxu0
  %v1441 = vpop.f32.mrb[0].mxu0
  %v1442 = vadd.f32 0.0, %v1441
  %v1443 = vpop.f32.mrb[0].mxu0
  %1444 = vmatprep.mubr.bf16.mxu0 0
  %1445 = vmatmul.mubr.bf16.gmra.mrb[0].mxu0 %v1284
  %v1446 = vpop.f32.mrb[0].mxu0
  %v1447 = vadd.f32 0.0, %v1446
  %v1448 = vpop.f32.mrb[0].mxu0
  %v1449 = vpop.f32.mrb[0].mxu0
  %v1450 = vadd.f32 0.0, %v1449
  %v1451 = vpop.f32.mrb[0].mxu0
  %1452 = vmatprep.mubr.bf16.mxu0 0
  %1453 = vmatmul.mubr.bf16.gmra.mrb[0].mxu0 %v1287
  %v1454 = vpop.f32.mrb[0].mxu0
  %v1455 = vadd.f32 0.0, %v1454
  %v1456 = vpop.f32.mrb[0].mxu0
  %v1457 = vpop.f32.mrb[0].mxu0
  %v1458 = vadd.f32 0.0, %v1457
  %v1459 = vpop.f32.mrb[0].mxu0
  %1460 = vmatprep.mubr.bf16.mxu0 0
  %1461 = vmatmul.mubr.bf16.gmra.mrb[0].mxu0 %v1290
  %v1462 = vpop.f32.mrb[0].mxu0
  %v1463 = vadd.f32 0.0, %v1462
  %v1464 = vpop.f32.mrb[0].mxu0
  %v1465 = vpop.f32.mrb[0].mxu0
  %v1466 = vadd.f32 0.0, %v1465
  %v1467 = vpop.f32.mrb[0].mxu0
  %1468 = vdwg.mxu0
  %v1469 = vmax.f32 %v253, %v611
  %v1470 = vmax.f32 %v256, %v614
  %v1471 = vmax.f32 %v261, %v619
  %v1472 = vmax.f32 %v264, %v622
  %v1473 = vmax.f32 %v269, %v627
  %v1474 = vmax.f32 %v272, %v630
  %v1475 = vmax.f32 %v277, %v635
  %v1476 = vmax.f32 %v280, %v638
  %v1477 = vmax.f32 %v285, %v643
  %v1478 = vmax.f32 %v288, %v646
  %v1479 = vmax.f32 %v293, %v651
  %v1480 = vmax.f32 %v296, %v654
  %v1481 = vmax.f32 %v301, %v659
  %v1482 = vmax.f32 %v304, %v662
  %v1483 = vmax.f32 %v309, %v667
  %v1484 = vmax.f32 %v312, %v670
  %v1485 = vmax.f32 %v317, %v675
  %v1486 = vmax.f32 %v320, %v678
  %v1487 = vmax.f32 %v325, %v683
  %v1488 = vmax.f32 %v328, %v686
  %v1489 = vmax.f32 %v333, %v691
  %v1490 = vmax.f32 %v336, %v694
  %v1491 = vmax.f32 %v341, %v699
  %v1492 = vmax.f32 %v344, %v702
  %v1493 = vmax.f32 %v349, %v707
  %v1494 = vmax.f32 %v352, %v710
  %v1495 = vmax.f32 %v357, %v715
  %v1496 = vmax.f32 %v360, %v718
  %v1497 = vmax.f32 %v365, %v723
  %v1498 = vmax.f32 %v368, %v726
  %v1499 = vmax.f32 %v373, %v731
  %v1500 = vmax.f32 %v376, %v734
  %v1501 = vmax.f32 %v381, %v739
  %v1502 = vmax.f32 %v384, %v742
  %v1503 = vmax.f32 %v389, %v747
  %v1504 = vmax.f32 %v392, %v750
  %v1505 = vmax.f32 %v969, %v1327
  %v1506 = vmax.f32 %v972, %v1330
  %v1507 = vmax.f32 %v977, %v1335
  %v1508 = vmax.f32 %v980, %v1338
  %v1509 = vmax.f32 %v985, %v1343
  %v1510 = vmax.f32 %v988, %v1346
  %v1511 = vmax.f32 %v993, %v1351
  %v1512 = vmax.f32 %v996, %v1354
  %v1513 = vmax.f32 %v1001, %v1359
  %v1514 = vmax.f32 %v1004, %v1362
  %v1515 = vmax.f32 %v1009, %v1367
  %v1516 = vmax.f32 %v1012, %v1370
  %v1517 = vmax.f32 %v1017, %v1375
  %v1518 = vmax.f32 %v1020, %v1378
  %v1519 = vmax.f32 %v1025, %v1383
  %v1520 = vmax.f32 %v1028, %v1386
  %v1521 = vmax.f32 %v1033, %v1391
  %v1522 = vmax.f32 %v1036, %v1394
  %v1523 = vmax.f32 %v1041, %v1399
  %v1524 = vmax.f32 %v1044, %v1402
  %v1525 = vmax.f32 %v1049, %v1407
  %v1526 = vmax.f32 %v1052, %v1410
  %v1527 = vmax.f32 %v1057, %v1415
  %v1528 = vmax.f32 %v1060, %v1418
  %v1529 = vmax.f32 %v1065, %v1423
  %v1530 = vmax.f32 %v1068, %v1426
  %v1531 = vmax.f32 %v1073, %v1431
  %v1532 = vmax.f32 %v1076, %v1434
  %v1533 = vmax.f32 %v1081, %v1439
  %v1534 = vmax.f32 %v1084, %v1442
  %v1535 = vmax.f32 %v1089, %v1447
  %v1536 = vmax.f32 %v1092, %v1450
  %v1537 = vmax.f32 %v1097, %v1455
  %v1538 = vmax.f32 %v1100, %v1458
  %v1539 = vmax.f32 %v1105, %v1463
  %v1540 = vmax.f32 %v1108, %v1466
  %v1541 = vmax.f32 %v1469, %v1505
  %v1542 = vmax.f32 %v1470, %v1506
  %v1543 = vmax.f32 %v1471, %v1507
  %v1544 = vmax.f32 %v1472, %v1508
  %v1545 = vmax.f32 %v1473, %v1509
  %v1546 = vmax.f32 %v1474, %v1510
  %v1547 = vmax.f32 %v1475, %v1511
  %v1548 = vmax.f32 %v1476, %v1512
  %v1549 = vmax.f32 %v1477, %v1513
  %v1550 = vmax.f32 %v1478, %v1514
  %v1551 = vmax.f32 %v1479, %v1515
  %v1552 = vmax.f32 %v1480, %v1516
  %v1553 = vmax.f32 %v1481, %v1517
  %v1554 = vmax.f32 %v1482, %v1518
  %v1555 = vmax.f32 %v1483, %v1519
  %v1556 = vmax.f32 %v1484, %v1520
  %v1557 = vmax.f32 %v1485, %v1521
  %v1558 = vmax.f32 %v1486, %v1522
  %v1559 = vmax.f32 %v1487, %v1523
  %v1560 = vmax.f32 %v1488, %v1524
  %v1561 = vmax.f32 %v1489, %v1525
  %v1562 = vmax.f32 %v1490, %v1526
  %v1563 = vmax.f32 %v1491, %v1527
  %v1564 = vmax.f32 %v1492, %v1528
  %v1565 = vmax.f32 %v1493, %v1529
  %v1566 = vmax.f32 %v1494, %v1530
  %v1567 = vmax.f32 %v1495, %v1531
  %v1568 = vmax.f32 %v1496, %v1532
  %v1569 = vmax.f32 %v1497, %v1533
  %v1570 = vmax.f32 %v1498, %v1534
  %v1571 = vmax.f32 %v1499, %v1535
  %v1572 = vmax.f32 %v1500, %v1536
  %v1573 = vmax.f32 %v1501, %v1537
  %v1574 = vmax.f32 %v1502, %v1538
  %v1575 = vmax.f32 %v1503, %v1539
  %v1576 = vmax.f32 %v1504, %v1540
  %v1577 = vld [vmem:[%s2] sm:$0x1]
  %v1579 = vlaneseq
  %v1580 = vshrl.u32 %v1579, 7
  %v1581 = vsub.s32 0, %v1580
  %v1582 = vrot.slane %v1577, %v1581
  %v1584 = vadd.f32 %v1541, %v1582
  %v1585 = vadd.f32 %v1542, %v1582
  %v1586 = vadd.f32 %v1543, %v1582
  %v1587 = vadd.f32 %v1544, %v1582
  %v1588 = vadd.f32 %v1545, %v1582
  %v1589 = vadd.f32 %v1546, %v1582
  %v1590 = vadd.f32 %v1547, %v1582
  %v1591 = vadd.f32 %v1548, %v1582
  %v1592 = vadd.f32 %v1549, %v1582
  %v1593 = vadd.f32 %v1550, %v1582
  %v1594 = vadd.f32 %v1551, %v1582
  %v1595 = vadd.f32 %v1552, %v1582
  %v1596 = vadd.f32 %v1553, %v1582
  %v1597 = vadd.f32 %v1554, %v1582
  %v1598 = vadd.f32 %v1555, %v1582
  %v1599 = vadd.f32 %v1556, %v1582
  %v1600 = vadd.f32 %v1557, %v1582
  %v1601 = vadd.f32 %v1558, %v1582
  %v1602 = vadd.f32 %v1559, %v1582
  %v1603 = vadd.f32 %v1560, %v1582
  %v1604 = vadd.f32 %v1561, %v1582
  %v1605 = vadd.f32 %v1562, %v1582
  %v1606 = vadd.f32 %v1563, %v1582
  %v1607 = vadd.f32 %v1564, %v1582
  %v1608 = vadd.f32 %v1565, %v1582
  %v1609 = vadd.f32 %v1566, %v1582
  %v1610 = vadd.f32 %v1567, %v1582
  %v1611 = vadd.f32 %v1568, %v1582
  %v1612 = vadd.f32 %v1569, %v1582
  %v1613 = vadd.f32 %v1570, %v1582
  %v1614 = vadd.f32 %v1571, %v1582
  %v1615 = vadd.f32 %v1572, %v1582
  %v1616 = vadd.f32 %v1573, %v1582
  %v1617 = vadd.f32 %v1574, %v1582
  %v1618 = vadd.f32 %v1575, %v1582
  %v1619 = vadd.f32 %v1576, %v1582
  %v1620 = vmax.f32 %v1584, 0.0
  %v1621 = vmax.f32 %v1585, 0.0
  %v1622 = vmax.f32 %v1586, 0.0
  %v1623 = vmax.f32 %v1587, 0.0
  %v1624 = vmax.f32 %v1588, 0.0
  %v1625 = vmax.f32 %v1589, 0.0
  %v1626 = vmax.f32 %v1590, 0.0
  %v1627 = vmax.f32 %v1591, 0.0
  %v1628 = vmax.f32 %v1592, 0.0
  %v1629 = vmax.f32 %v1593, 0.0
  %v1630 = vmax.f32 %v1594, 0.0
  %v1631 = vmax.f32 %v1595, 0.0
  %v1632 = vmax.f32 %v1596, 0.0
  %v1633 = vmax.f32 %v1597, 0.0
  %v1634 = vmax.f32 %v1598, 0.0
  %v1635 = vmax.f32 %v1599, 0.0
  %v1636 = vmax.f32 %v1600, 0.0
  %v1637 = vmax.f32 %v1601, 0.0
  %v1638 = vmax.f32 %v1602, 0.0
  %v1639 = vmax.f32 %v1603, 0.0
  %v1640 = vmax.f32 %v1604, 0.0
  %v1641 = vmax.f32 %v1605, 0.0
  %v1642 = vmax.f32 %v1606, 0.0
  %v1643 = vmax.f32 %v1607, 0.0
  %v1644 = vmax.f32 %v1608, 0.0
  %v1645 = vmax.f32 %v1609, 0.0
  %v1646 = vmax.f32 %v1610, 0.0
  %v1647 = vmax.f32 %v1611, 0.0
  %v1648 = vmax.f32 %v1612, 0.0
  %v1649 = vmax.f32 %v1613, 0.0
  %v1650 = vmax.f32 %v1614, 0.0
  %v1651 = vmax.f32 %v1615, 0.0
  %v1652 = vmax.f32 %v1616, 0.0
  %v1653 = vmax.f32 %v1617, 0.0
  %v1654 = vmax.f32 %v1618, 0.0
  %v1655 = vmax.f32 %v1619, 0.0
  %v1656 = vpack.c.bf16 %v1621, %v1620
  %v1657 = vpack.c.bf16 %v1623, %v1622
  %v1658 = vpack.c.bf16 %v1625, %v1624
  %v1659 = vpack.c.bf16 %v1627, %v1626
  %v1660 = vpack.c.bf16 %v1629, %v1628
  %v1661 = vpack.c.bf16 %v1631, %v1630
  %v1662 = vpack.c.bf16 %v1633, %v1632
  %v1663 = vpack.c.bf16 %v1635, %v1634
  %v1664 = vpack.c.bf16 %v1637, %v1636
  %v1665 = vpack.c.bf16 %v1639, %v1638
  %v1666 = vpack.c.bf16 %v1641, %v1640
  %v1667 = vpack.c.bf16 %v1643, %v1642
  %v1668 = vpack.c.bf16 %v1645, %v1644
  %v1669 = vpack.c.bf16 %v1647, %v1646
  %v1670 = vpack.c.bf16 %v1649, %v1648
  %v1671 = vpack.c.bf16 %v1651, %v1650
  %v1672 = vpack.c.bf16 %v1653, %v1652
  %v1673 = vpack.c.bf16 %v1655, %v1654
  %v1692 = vunpack.c.l.b16 %v1656
  %v1693 = vunpack.c.h.b16 %v1656
  %v1694 = vunpack.c.l.b16 %v1657
  %v1695 = vunpack.c.h.b16 %v1657
  %v1696 = vunpack.c.l.b16 %v1658
  %v1697 = vunpack.c.h.b16 %v1658
  %v1698 = vunpack.c.l.b16 %v1659
  %v1699 = vunpack.c.h.b16 %v1659
  %v1700 = vunpack.c.l.b16 %v1660
  %v1701 = vunpack.c.h.b16 %v1660
  %v1702 = vunpack.c.l.b16 %v1661
  %v1703 = vunpack.c.h.b16 %v1661
  %v1704 = vunpack.c.l.b16 %v1662
  %v1705 = vunpack.c.h.b16 %v1662
  %v1706 = vunpack.c.l.b16 %v1663
  %v1707 = vunpack.c.h.b16 %v1663
  %v1708 = vunpack.c.l.b16 %v1664
  %v1709 = vunpack.c.h.b16 %v1664
  %v1710 = vunpack.c.l.b16 %v1665
  %v1711 = vunpack.c.h.b16 %v1665
  %v1712 = vunpack.c.l.b16 %v1666
  %v1713 = vunpack.c.h.b16 %v1666
  %v1714 = vunpack.c.l.b16 %v1667
  %v1715 = vunpack.c.h.b16 %v1667
  %v1716 = vunpack.c.l.b16 %v1668
  %v1717 = vunpack.c.h.b16 %v1668
  %v1718 = vunpack.c.l.b16 %v1669
  %v1719 = vunpack.c.h.b16 %v1669
  %v1720 = vunpack.c.l.b16 %v1670
  %v1721 = vunpack.c.h.b16 %v1670
  %v1722 = vunpack.c.l.b16 %v1671
  %v1723 = vunpack.c.h.b16 %v1671
  %v1724 = vunpack.c.l.b16 %v1672
  %v1725 = vunpack.c.h.b16 %v1672
  %v1726 = vunpack.c.l.b16 %v1673
  %v1727 = vunpack.c.h.b16 %v1673
  %v1728 = vpack.c.b16 %v1692, %v1692
  %v1729 = vpack.c.b16 %v1693, %v1693
  %v1730 = vpack.c.b16 %v1694, %v1694
  %v1731 = vpack.c.b16 %v1695, %v1695
  %v1732 = vpack.c.b16 %v1696, %v1696
  %v1733 = vpack.c.b16 %v1697, %v1697
  %v1734 = vpack.c.b16 %v1698, %v1698
  %v1735 = vpack.c.b16 %v1699, %v1699
  %v1736 = vpack.c.b16 %v1700, %v1700
  %v1737 = vpack.c.b16 %v1701, %v1701
  %v1738 = vpack.c.b16 %v1702, %v1702
  %v1739 = vpack.c.b16 %v1703, %v1703
  %v1740 = vpack.c.b16 %v1704, %v1704
  %v1741 = vpack.c.b16 %v1705, %v1705
  %v1742 = vpack.c.b16 %v1706, %v1706
  %v1743 = vpack.c.b16 %v1707, %v1707
  %v1744 = vpack.c.b16 %v1708, %v1708
  %v1745 = vpack.c.b16 %v1709, %v1709
  %v1746 = vpack.c.b16 %v1710, %v1710
  %v1747 = vpack.c.b16 %v1711, %v1711
  %v1748 = vpack.c.b16 %v1712, %v1712
  %v1749 = vpack.c.b16 %v1713, %v1713
  %v1750 = vpack.c.b16 %v1714, %v1714
  %v1751 = vpack.c.b16 %v1715, %v1715
  %v1752 = vpack.c.b16 %v1716, %v1716
  %v1753 = vpack.c.b16 %v1717, %v1717
  %v1754 = vpack.c.b16 %v1718, %v1718
  %v1755 = vpack.c.b16 %v1719, %v1719
  %v1756 = vpack.c.b16 %v1720, %v1720
  %v1757 = vpack.c.b16 %v1721, %v1721
  %v1758 = vpack.c.b16 %v1722, %v1722
  %v1759 = vpack.c.b16 %v1723, %v1723
  %v1760 = vpack.c.b16 %v1724, %v1724
  %v1761 = vpack.c.b16 %v1725, %v1725
  %v1762 = vpack.c.b16 %v1726, %v1726
  %v1763 = vpack.c.b16 %v1727, %v1727
  %vm1800 = vcmask 158720
  %1801 = vst.msk [vmem:[%s3] sm:$0xf] %vm1800, %v1728
  %1802 = vst.msk [vmem:[%s3 + $0x4] sm:$0xf] %vm1800, %v1729
  %1803 = vst.msk [vmem:[%s3 + $0x8] sm:$0xf] %vm1800, %v1730
  %1804 = vst.msk [vmem:[%s3 + $0xc] sm:$0xf] %vm1800, %v1731
  %1805 = vst.msk [vmem:[%s3 + $0x10] sm:$0xf] %vm1800, %v1732
  %1806 = vst.msk [vmem:[%s3 + $0x14] sm:$0xf] %vm1800, %v1733
  %1807 = vst.msk [vmem:[%s3 + $0x18] sm:$0xf] %vm1800, %v1734
  %1808 = vst.msk [vmem:[%s3 + $0x1c] sm:$0xf] %vm1800, %v1735
  %1809 = vst.msk [vmem:[%s3 + $0x20] sm:$0xf] %vm1800, %v1736
  %1810 = vst.msk [vmem:[%s3 + $0x24] sm:$0xf] %vm1800, %v1737
  %1811 = vst.msk [vmem:[%s3 + $0x28] sm:$0xf] %vm1800, %v1738
  %1812 = vst.msk [vmem:[%s3 + $0x2c] sm:$0xf] %vm1800, %v1739
  %1813 = vst.msk [vmem:[%s3 + $0x30] sm:$0xf] %vm1800, %v1740
  %1814 = vst.msk [vmem:[%s3 + $0x34] sm:$0xf] %vm1800, %v1741
  %1815 = vst.msk [vmem:[%s3 + $0x38] sm:$0xf] %vm1800, %v1742
  %1816 = vst.msk [vmem:[%s3 + $0x3c] sm:$0xf] %vm1800, %v1743
  %1817 = vst.msk [vmem:[%s3 + $0x40] sm:$0xf] %vm1800, %v1744
  %1818 = vst.msk [vmem:[%s3 + $0x44] sm:$0xf] %vm1800, %v1745
  %1819 = vst.msk [vmem:[%s3 + $0x48] sm:$0xf] %vm1800, %v1746
  %1820 = vst.msk [vmem:[%s3 + $0x4c] sm:$0xf] %vm1800, %v1747
  %1821 = vst.msk [vmem:[%s3 + $0x50] sm:$0xf] %vm1800, %v1748
  %1822 = vst.msk [vmem:[%s3 + $0x54] sm:$0xf] %vm1800, %v1749
  %1823 = vst.msk [vmem:[%s3 + $0x58] sm:$0xf] %vm1800, %v1750
  %1824 = vst.msk [vmem:[%s3 + $0x5c] sm:$0xf] %vm1800, %v1751
  %1825 = vst.msk [vmem:[%s3 + $0x60] sm:$0xf] %vm1800, %v1752
  %1826 = vst.msk [vmem:[%s3 + $0x64] sm:$0xf] %vm1800, %v1753
  %1827 = vst.msk [vmem:[%s3 + $0x68] sm:$0xf] %vm1800, %v1754
  %1828 = vst.msk [vmem:[%s3 + $0x6c] sm:$0xf] %vm1800, %v1755
  %1829 = vst.msk [vmem:[%s3 + $0x70] sm:$0xf] %vm1800, %v1756
  %1830 = vst.msk [vmem:[%s3 + $0x74] sm:$0xf] %vm1800, %v1757
  %1831 = vst.msk [vmem:[%s3 + $0x78] sm:$0xf] %vm1800, %v1758
  %1832 = vst.msk [vmem:[%s3 + $0x7c] sm:$0xf] %vm1800, %v1759
  %1833 = vst.msk [vmem:[%s3 + $0x80] sm:$0xf] %vm1800, %v1760
  %1834 = vst.msk [vmem:[%s3 + $0x84] sm:$0xf] %vm1800, %v1761
  %1835 = vst.msk [vmem:[%s3 + $0x88] sm:$0xf] %vm1800, %v1762
  %1836 = vst.msk [vmem:[%s3 + $0x8c] sm:$0xf] %vm1800, %v1763
  // Predicated region
  $region14: #{lenet_forward.3} parent=0 // pred_check
    _
  $region15: #{lenet_forward.3} parent=0 // pred_check_branch
    %1838 = sbr.rel (0) target = $region17
  $region16: #{lenet_forward.3} parent=0 // pred_region
    _
  $region17: #{lenet_forward.3} parent=0 // pred_fallthru
    _
  // Predicated region
  $region18: #{lenet_forward.3} parent=0 // pred_check
    _
  $region19: #{lenet_forward.3} parent=0 // pred_check_branch
    %1840 = sbr.rel (0) target = $region21
  $region20: #{lenet_forward.3} parent=0 // pred_region
    _
  $region21: #{lenet_forward.3} parent=0 // pred_fallthru
    _

// kernel: lenet_forward.4
$region0: #{lenet_forward.4}
  #allocation0 [shape = 'u32[]', space=smem, size = 0x4, offset = 0x4, fixed_abs, tag = 'smem constant byte address 0x4 - core index']
  #allocation1 [shape = 'u32[144,128]{1,0:T(1,128)}', space=vmem, size = 0x12000, scoped, tag = 'internal scratch']
  %s0 = inlined_call_operand.vmem [shape: bf16[4,32,500], index: 0, kind: input, shape index: {}]
  %s1 = inlined_call_operand.vmem [shape: bf16[500,50], index: 1, kind: input, shape index: {}]
  %s2 = inlined_call_operand.vmem [shape: f32[1,50], index: 2, kind: input, shape index: {}]
  %s3 = inlined_call_operand.vmem [shape: bf16[32,50], index: 3, kind: output, shape index: {}]
  %s4 = sld [smem:[#allocation0]]
  $region22: #{lenet_forward.4} parent=0
    _
  %s6 = ssub.s32 1, %s4
  %s7 = scalar_select 0, %s6, %s4
  // Predicated region
  $region2: #{lenet_forward.4} parent=0 // pred_check
    _
  $region3: #{lenet_forward.4} parent=0 // pred_check_branch
    %9 = sbr.rel (0) target = $region5
  $region4: #{lenet_forward.4} parent=0 // pred_region
    _
  $region5: #{lenet_forward.4} parent=0 // pred_fallthru
    _
  // Predicated region
  $region6: #{lenet_forward.4} parent=0 // pred_check
    _
  $region7: #{lenet_forward.4} parent=0 // pred_check_branch
    %11 = sbr.rel (0) target = $region9
  $region8: #{lenet_forward.4} parent=0 // pred_region
    _
  $region9: #{lenet_forward.4} parent=0 // pred_fallthru
    _
  // Predicated region
  $region10: #{lenet_forward.4} parent=0 // pred_check
    _
  $region11: #{lenet_forward.4} parent=0 // pred_check_branch
    %13 = sbr.rel (0) target = $region13
  $region12: #{lenet_forward.4} parent=0 // pred_region
    _
  $region13: #{lenet_forward.4} parent=0 // pred_fallthru
    _
  %v15 = vld [vmem:[%s1] sm:$0xf]
  %v16 = vld [vmem:[%s1 + $0x4] sm:$0xf]
  %v17 = vld [vmem:[%s1 + $0x8] sm:$0xf]
  %v18 = vld [vmem:[%s1 + $0xc] sm:$0xf]
  %v19 = vld [vmem:[%s1 + $0x10] sm:$0xf]
  %v20 = vld [vmem:[%s1 + $0x14] sm:$0xf]
  %v21 = vld [vmem:[%s1 + $0x18] sm:$0xf]
  %v22 = vld [vmem:[%s1 + $0x1c] sm:$0xf]
  %v23 = vld [vmem:[%s1 + $0x20] sm:$0xf]
  %v24 = vld [vmem:[%s1 + $0x24] sm:$0xf]
  %v25 = vld [vmem:[%s1 + $0x28] sm:$0xf]
  %v26 = vld [vmem:[%s1 + $0x2c] sm:$0xf]
  %v27 = vld [vmem:[%s1 + $0x30] sm:$0xf]
  %v28 = vld [vmem:[%s1 + $0x34] sm:$0xf]
  %v29 = vld [vmem:[%s1 + $0x38] sm:$0xf]
  %v30 = vld [vmem:[%s1 + $0x3c] sm:$0xf]
  %v31 = vld [vmem:[%s1 + $0x40] sm:$0xf]
  %v32 = vld [vmem:[%s1 + $0x44] sm:$0xf]
  %v33 = vld [vmem:[%s1 + $0x48] sm:$0xf]
  %v34 = vld [vmem:[%s1 + $0x4c] sm:$0xf]
  %v35 = vld [vmem:[%s1 + $0x50] sm:$0xf]
  %v36 = vld [vmem:[%s1 + $0x54] sm:$0xf]
  %v37 = vld [vmem:[%s1 + $0x58] sm:$0xf]
  %v38 = vld [vmem:[%s1 + $0x5c] sm:$0xf]
  %v39 = vld [vmem:[%s1 + $0x60] sm:$0xf]
  %v40 = vld [vmem:[%s1 + $0x64] sm:$0xf]
  %v41 = vld [vmem:[%s1 + $0x68] sm:$0xf]
  %v42 = vld [vmem:[%s1 + $0x6c] sm:$0xf]
  %v43 = vld [vmem:[%s1 + $0x70] sm:$0xf]
  %v44 = vld [vmem:[%s1 + $0x74] sm:$0xf]
  %v45 = vld [vmem:[%s1 + $0x78] sm:$0xf]
  %v46 = vld [vmem:[%s1 + $0x7c] sm:$0xf]
  %v47 = vld [vmem:[%s1 + $0x80] sm:$0xf]
  %v48 = vld [vmem:[%s1 + $0x84] sm:$0xf]
  %v49 = vld [vmem:[%s1 + $0x88] sm:$0xf]
  %v50 = vld [vmem:[%s1 + $0x8c] sm:$0xf]
  %v51 = vld [vmem:[%s1 + $0x90] sm:$0xf]
  %v52 = vld [vmem:[%s1 + $0x94] sm:$0xf]
  %v53 = vld [vmem:[%s1 + $0x98] sm:$0xf]
  %v54 = vld [vmem:[%s1 + $0x9c] sm:$0xf]
  %v55 = vld [vmem:[%s1 + $0xa0] sm:$0xf]
  %v56 = vld [vmem:[%s1 + $0xa4] sm:$0xf]
  %v57 = vld [vmem:[%s1 + $0xa8] sm:$0xf]
  %v58 = vld [vmem:[%s1 + $0xac] sm:$0xf]
  %v59 = vld [vmem:[%s1 + $0xb0] sm:$0xf]
  %v60 = vld [vmem:[%s1 + $0xb4] sm:$0xf]
  %v61 = vld [vmem:[%s1 + $0xb8] sm:$0xf]
  %v62 = vld [vmem:[%s1 + $0xbc] sm:$0xf]
  %v63 = vld [vmem:[%s1 + $0xc0] sm:$0xf]
  %v64 = vld [vmem:[%s1 + $0xc4] sm:$0xf]
  %v65 = vld [vmem:[%s1 + $0xc8] sm:$0xf]
  %v66 = vld [vmem:[%s1 + $0xcc] sm:$0xf]
  %v67 = vld [vmem:[%s1 + $0xd0] sm:$0xf]
  %v68 = vld [vmem:[%s1 + $0xd4] sm:$0xf]
  %v69 = vld [vmem:[%s1 + $0xd8] sm:$0xf]
  %v70 = vld [vmem:[%s1 + $0xdc] sm:$0xf]
  %v71 = vld [vmem:[%s1 + $0xe0] sm:$0xf]
  %v72 = vld [vmem:[%s1 + $0xe4] sm:$0xf]
  %v73 = vld [vmem:[%s1 + $0xe8] sm:$0xf]
  %v74 = vld [vmem:[%s1 + $0xec] sm:$0xf]
  %v75 = vld [vmem:[%s1 + $0xf0] sm:$0xf]
  %v76 = vld [vmem:[%s1 + $0xf4] sm:$0xf]
  %v77 = vld [vmem:[%s1 + $0xf8] sm:$0x3]
  %v78 = vld [vmem:[%s0] sm:$0xff]
  %v79 = vld [vmem:[%s0 + $0x8] sm:$0xff]
  %v80 = vld [vmem:[%s0 + $0x10] sm:$0xff]
  %v81 = vld [vmem:[%s0 + $0x18] sm:$0xff]
  %v82 = vld [vmem:[%s0 + $0x20] sm:$0xff]
  %v83 = vld [vmem:[%s0 + $0x28] sm:$0xff]
  %v84 = vld [vmem:[%s0 + $0x30] sm:$0xff]
  %v85 = vld [vmem:[%s0 + $0x38] sm:$0xff]
  %v94 = vunpack.c.l.b16 %v78
  %v95 = vunpack.c.h.b16 %v78
  %v96 = vunpack.c.l.b16 %v79
  %v97 = vunpack.c.h.b16 %v79
  %v98 = vunpack.c.l.b16 %v80
  %v99 = vunpack.c.h.b16 %v80
  %v100 = vunpack.c.l.b16 %v81
  %v101 = vunpack.c.h.b16 %v81
  %v102 = vunpack.c.l.b16 %v82
  %v103 = vunpack.c.h.b16 %v82
  %v104 = vunpack.c.l.b16 %v83
  %v105 = vunpack.c.h.b16 %v83
  %v106 = vunpack.c.l.b16 %v84
  %v107 = vunpack.c.h.b16 %v84
  %v108 = vunpack.c.l.b16 %v85
  %v109 = vunpack.c.h.b16 %v85
  %v110 = vpack.c.b16 %v98, %v94
  %v111 = vpack.c.b16 %v99, %v95
  %v112 = vpack.c.b16 %v100, %v96
  %v113 = vpack.c.b16 %v101, %v97
  %v114 = vpack.c.b16 %v106, %v102
  %v115 = vpack.c.b16 %v107, %v103
  %v116 = vpack.c.b16 %v108, %v104
  %v117 = vpack.c.b16 %v109, %v105
  %v187 = vunpack.c.l.b16 %v15
  %v188 = vunpack.c.l.b16 %v16
  %v189 = vunpack.c.l.b16 %v17
  %v190 = vunpack.c.l.b16 %v18
  %v191 = vunpack.c.l.b16 %v19
  %v192 = vunpack.c.l.b16 %v20
  %v193 = vunpack.c.l.b16 %v21
  %v194 = vunpack.c.l.b16 %v22
  %v195 = vunpack.c.l.b16 %v23
  %v196 = vunpack.c.l.b16 %v24
  %v197 = vunpack.c.l.b16 %v25
  %v198 = vunpack.c.l.b16 %v26
  %v199 = vunpack.c.l.b16 %v27
  %v200 = vunpack.c.l.b16 %v28
  %v201 = vunpack.c.l.b16 %v29
  %v202 = vunpack.c.l.b16 %v30
  %v203 = vunpack.c.l.b16 %v31
  %v204 = vunpack.c.l.b16 %v32
  %v205 = vunpack.c.l.b16 %v33
  %v206 = vunpack.c.l.b16 %v34
  %v207 = vunpack.c.l.b16 %v35
  %v208 = vunpack.c.l.b16 %v36
  %v209 = vunpack.c.l.b16 %v37
  %v210 = vunpack.c.l.b16 %v38
  %v211 = vunpack.c.l.b16 %v39
  %v212 = vunpack.c.l.b16 %v40
  %v213 = vunpack.c.l.b16 %v41
  %v214 = vunpack.c.l.b16 %v42
  %v215 = vunpack.c.l.b16 %v43
  %v216 = vunpack.c.l.b16 %v44
  %v217 = vunpack.c.l.b16 %v45
  %v218 = vunpack.c.l.b16 %v46
  %v219 = vunpack.c.l.b16 %v47
  %v220 = vunpack.c.l.b16 %v48
  %v221 = vunpack.c.l.b16 %v49
  %v222 = vunpack.c.l.b16 %v50
  %v223 = vunpack.c.l.b16 %v51
  %v224 = vunpack.c.l.b16 %v52
  %v225 = vunpack.c.l.b16 %v53
  %v226 = vunpack.c.l.b16 %v54
  %v227 = vunpack.c.l.b16 %v55
  %v228 = vunpack.c.l.b16 %v56
  %v229 = vunpack.c.l.b16 %v57
  %v230 = vunpack.c.l.b16 %v58
  %v231 = vunpack.c.l.b16 %v59
  %v232 = vunpack.c.l.b16 %v60
  %v233 = vunpack.c.l.b16 %v61
  %v234 = vunpack.c.l.b16 %v62
  %v235 = vunpack.c.l.b16 %v63
  %v236 = vunpack.c.l.b16 %v64
  %v237 = vunpack.c.l.b16 %v65
  %v238 = vunpack.c.l.b16 %v66
  %v239 = vunpack.c.l.b16 %v67
  %v240 = vunpack.c.l.b16 %v68
  %v241 = vunpack.c.l.b16 %v69
  %v242 = vunpack.c.l.b16 %v70
  %v243 = vunpack.c.l.b16 %v71
  %v244 = vunpack.c.l.b16 %v72
  %v245 = vunpack.c.l.b16 %v73
  %v246 = vunpack.c.l.b16 %v74
  %v247 = vunpack.c.l.b16 %v75
  %v248 = vunpack.c.l.b16 %v76
  %v249 = vunpack.c.l.b16 %v77
  %v250 = vpack.c.b16 %v188, %v187
  %v251 = vpack.c.b16 %v190, %v189
  %v252 = vpack.c.b16 %v192, %v191
  %v253 = vpack.c.b16 %v194, %v193
  %v254 = vpack.c.b16 %v196, %v195
  %v255 = vpack.c.b16 %v198, %v197
  %v256 = vpack.c.b16 %v200, %v199
  %v257 = vpack.c.b16 %v202, %v201
  %v258 = vpack.c.b16 %v204, %v203
  %v259 = vpack.c.b16 %v206, %v205
  %v260 = vpack.c.b16 %v208, %v207
  %v261 = vpack.c.b16 %v210, %v209
  %v262 = vpack.c.b16 %v212, %v211
  %v263 = vpack.c.b16 %v214, %v213
  %v264 = vpack.c.b16 %v216, %v215
  %v265 = vpack.c.b16 %v218, %v217
  %v266 = vpack.c.b16 %v220, %v219
  %v267 = vpack.c.b16 %v222, %v221
  %v268 = vpack.c.b16 %v224, %v223
  %v269 = vpack.c.b16 %v226, %v225
  %v270 = vpack.c.b16 %v228, %v227
  %v271 = vpack.c.b16 %v230, %v229
  %v272 = vpack.c.b16 %v232, %v231
  %v273 = vpack.c.b16 %v234, %v233
  %v274 = vpack.c.b16 %v236, %v235
  %v275 = vpack.c.b16 %v238, %v237
  %v276 = vpack.c.b16 %v240, %v239
  %v277 = vpack.c.b16 %v242, %v241
  %v278 = vpack.c.b16 %v244, %v243
  %v279 = vpack.c.b16 %v246, %v245
  %v280 = vpack.c.b16 %v248, %v247
  %v281 = vpack.c.b16 %v249, %v249
  %vm313 = vcmask 949248
  %v315 = vsel %vm313, %v113, 0
  %v318 = vsel %vm313, %v117, 0
  %vm320 = vcmask 1041408
  %v322 = vsel %vm320, %v281, 0
  %324 = vmatprep.subr.bf16.mxu0 0
  %325 = vmatpush1.bf16.msra.mxu0 %v250
  %326 = vmatprep.subr.bf16.mxu0 0
  %327 = vmatpush1.bf16.msra.mxu0 %v251
  %328 = vmatprep.subr.bf16.mxu0 0
  %329 = vmatpush1.bf16.msra.mxu0 %v252
  %330 = vmatprep.subr.bf16.mxu0 0
  %331 = vmatpush1.bf16.msra.mxu0 %v253
  %332 = vmatprep.subr.bf16.mxu0 0
  %333 = vmatpush1.bf16.msra.mxu0 %v254
  %334 = vmatprep.subr.bf16.mxu0 0
  %335 = vmatpush1.bf16.msra.mxu0 %v255
  %336 = vmatprep.subr.bf16.mxu0 0
  %337 = vmatpush1.bf16.msra.mxu0 %v256
  %338 = vmatprep.subr.bf16.mxu0 0
  %339 = vmatpush1.bf16.msra.mxu0 %v257
  %340 = vmatprep.subr.bf16.mxu0 0
  %341 = vmatpush1.bf16.msra.mxu0 %v258
  %342 = vmatprep.subr.bf16.mxu0 0
  %343 = vmatpush1.bf16.msra.mxu0 %v259
  %344 = vmatprep.subr.bf16.mxu0 0
  %345 = vmatpush1.bf16.msra.mxu0 %v260
  %346 = vmatprep.subr.bf16.mxu0 0
  %347 = vmatpush1.bf16.msra.mxu0 %v261
  %348 = vmatprep.subr.bf16.mxu0 0
  %349 = vmatpush1.bf16.msra.mxu0 %v262
  %350 = vmatprep.subr.bf16.mxu0 0
  %351 = vmatpush1.bf16.msra.mxu0 %v263
  %352 = vmatprep.subr.bf16.mxu0 0
  %353 = vmatpush1.bf16.msra.mxu0 %v264
  %354 = vmatprep.subr.bf16.mxu0 0
  %355 = vmatpush1.bf16.msra.mxu0 %v265
  %356 = vmatprep.mubr.bf16.mxu0 %v111
  %357 = vmatmul.mubr.bf16.gmra.mrb[0].mxu0 %v110
  %v358 = vpop.f32.mrb[0].mxu0
  %v359 = vadd.f32 0.0, %v358
  %v360 = vpop.f32.mrb[0].mxu0
  %v361 = vpop.f32.mrb[0].mxu0
  %v362 = vadd.f32 0.0, %v361
  %v363 = vpop.f32.mrb[0].mxu0
  %364 = vmatprep.mubr.bf16.mxu0 %v115
  %365 = vmatmul.mubr.bf16.gmra.mrb[0].mxu0 %v114
  %v366 = vpop.f32.mrb[0].mxu0
  %v367 = vadd.f32 0.0, %v366
  %v368 = vpop.f32.mrb[0].mxu0
  %v369 = vpop.f32.mrb[0].mxu0
  %v370 = vadd.f32 0.0, %v369
  %v371 = vpop.f32.mrb[0].mxu0
  %372 = vdwg.mxu0
  %373 = vmatprep.subr.bf16.mxu0 0
  %374 = vmatpush1.bf16.msra.mxu0 %v266
  %375 = vmatprep.subr.bf16.mxu0 0
  %376 = vmatpush1.bf16.msra.mxu0 %v267
  %377 = vmatprep.subr.bf16.mxu0 0
  %378 = vmatpush1.bf16.msra.mxu0 %v268
  %379 = vmatprep.subr.bf16.mxu0 0
  %380 = vmatpush1.bf16.msra.mxu0 %v269
  %381 = vmatprep.subr.bf16.mxu0 0
  %382 = vmatpush1.bf16.msra.mxu0 %v270
  %383 = vmatprep.subr.bf16.mxu0 0
  %384 = vmatpush1.bf16.msra.mxu0 %v271
  %385 = vmatprep.subr.bf16.mxu0 0
  %386 = vmatpush1.bf16.msra.mxu0 %v272
  %387 = vmatprep.subr.bf16.mxu0 0
  %388 = vmatpush1.bf16.msra.mxu0 %v273
  %389 = vmatprep.subr.bf16.mxu0 0
  %390 = vmatpush1.bf16.msra.mxu0 %v274
  %391 = vmatprep.subr.bf16.mxu0 0
  %392 = vmatpush1.bf16.msra.mxu0 %v275
  %393 = vmatprep.subr.bf16.mxu0 0
  %394 = vmatpush1.bf16.msra.mxu0 %v276
  %395 = vmatprep.subr.bf16.mxu0 0
  %396 = vmatpush1.bf16.msra.mxu0 %v277
  %397 = vmatprep.subr.bf16.mxu0 0
  %398 = vmatpush1.bf16.msra.mxu0 %v278
  %399 = vmatprep.subr.bf16.mxu0 0
  %400 = vmatpush1.bf16.msra.mxu0 %v279
  %401 = vmatprep.subr.bf16.mxu0 0
  %402 = vmatpush1.bf16.msra.mxu0 %v280
  %403 = vmatprep.subr.bf16.mxu0 0
  %404 = vmatpush1.bf16.msra.mxu0 %v322
  %405 = vmatprep.mubr.bf16.mxu0 %v315
  %406 = vmatmul.mubr.bf16.gmra.mrb[0].mxu0 %v112
  %v407 = vpop.f32.mrb[0].mxu0
  %v408 = vadd.f32 %v359, %v407
  %v409 = vpop.f32.mrb[0].mxu0
  %v410 = vpop.f32.mrb[0].mxu0
  %v411 = vadd.f32 %v362, %v410
  %v412 = vpop.f32.mrb[0].mxu0
  %413 = vmatprep.mubr.bf16.mxu0 %v318
  %414 = vmatmul.mubr.bf16.gmra.mrb[0].mxu0 %v116
  %v415 = vpop.f32.mrb[0].mxu0
  %v416 = vadd.f32 %v367, %v415
  %v417 = vpop.f32.mrb[0].mxu0
  %v418 = vpop.f32.mrb[0].mxu0
  %v419 = vadd.f32 %v370, %v418
  %v420 = vpop.f32.mrb[0].mxu0
  %421 = vdwg.mxu0
  %s422 = scalar_lea.vmem %s0, 64
  %v423 = vld [vmem:[%s422] sm:$0xff]
  %v424 = vld [vmem:[%s422 + $0x8] sm:$0xff]
  %v425 = vld [vmem:[%s422 + $0x10] sm:$0xff]
  %v426 = vld [vmem:[%s422 + $0x18] sm:$0xff]
  %v427 = vld [vmem:[%s422 + $0x20] sm:$0xff]
  %v428 = vld [vmem:[%s422 + $0x28] sm:$0xff]
  %v429 = vld [vmem:[%s422 + $0x30] sm:$0xff]
  %v430 = vld [vmem:[%s422 + $0x38] sm:$0xff]
  %v439 = vunpack.c.l.b16 %v423
  %v440 = vunpack.c.h.b16 %v423
  %v441 = vunpack.c.l.b16 %v424
  %v442 = vunpack.c.h.b16 %v424
  %v443 = vunpack.c.l.b16 %v425
  %v444 = vunpack.c.h.b16 %v425
  %v445 = vunpack.c.l.b16 %v426
  %v446 = vunpack.c.h.b16 %v426
  %v447 = vunpack.c.l.b16 %v427
  %v448 = vunpack.c.h.b16 %v427
  %v449 = vunpack.c.l.b16 %v428
  %v450 = vunpack.c.h.b16 %v428
  %v451 = vunpack.c.l.b16 %v429
  %v452 = vunpack.c.h.b16 %v429
  %v453 = vunpack.c.l.b16 %v430
  %v454 = vunpack.c.h.b16 %v430
  %v455 = vpack.c.b16 %v443, %v439
  %v456 = vpack.c.b16 %v444, %v440
  %v457 = vpack.c.b16 %v445, %v441
  %v458 = vpack.c.b16 %v446, %v442
  %v459 = vpack.c.b16 %v451, %v447
  %v460 = vpack.c.b16 %v452, %v448
  %v461 = vpack.c.b16 %v453, %v449
  %v462 = vpack.c.b16 %v454, %v450
  %v470 = vsel %vm313, %v458, 0
  %v473 = vsel %vm313, %v462, 0
  %475 = vmatprep.subr.bf16.mxu0 0
  %476 = vmatpush1.bf16.msra.mxu0 %v250
  %477 = vmatprep.subr.bf16.mxu0 0
  %478 = vmatpush1.bf16.msra.mxu0 %v251
  %479 = vmatprep.subr.bf16.mxu0 0
  %480 = vmatpush1.bf16.msra.mxu0 %v252
  %481 = vmatprep.subr.bf16.mxu0 0
  %482 = vmatpush1.bf16.msra.mxu0 %v253
  %483 = vmatprep.subr.bf16.mxu0 0
  %484 = vmatpush1.bf16.msra.mxu0 %v254
  %485 = vmatprep.subr.bf16.mxu0 0
  %486 = vmatpush1.bf16.msra.mxu0 %v255
  %487 = vmatprep.subr.bf16.mxu0 0
  %488 = vmatpush1.bf16.msra.mxu0 %v256
  %489 = vmatprep.subr.bf16.mxu0 0
  %490 = vmatpush1.bf16.msra.mxu0 %v257
  %491 = vmatprep.subr.bf16.mxu0 0
  %492 = vmatpush1.bf16.msra.mxu0 %v258
  %493 = vmatprep.subr.bf16.mxu0 0
  %494 = vmatpush1.bf16.msra.mxu0 %v259
  %495 = vmatprep.subr.bf16.mxu0 0
  %496 = vmatpush1.bf16.msra.mxu0 %v260
  %497 = vmatprep.subr.bf16.mxu0 0
  %498 = vmatpush1.bf16.msra.mxu0 %v261
  %499 = vmatprep.subr.bf16.mxu0 0
  %500 = vmatpush1.bf16.msra.mxu0 %v262
  %501 = vmatprep.subr.bf16.mxu0 0
  %502 = vmatpush1.bf16.msra.mxu0 %v263
  %503 = vmatprep.subr.bf16.mxu0 0
  %504 = vmatpush1.bf16.msra.mxu0 %v264
  %505 = vmatprep.subr.bf16.mxu0 0
  %506 = vmatpush1.bf16.msra.mxu0 %v265
  %507 = vmatprep.mubr.bf16.mxu0 %v456
  %508 = vmatmul.mubr.bf16.gmra.mrb[0].mxu0 %v455
  %v509 = vpop.f32.mrb[0].mxu0
  %v510 = vadd.f32 0.0, %v509
  %v511 = vpop.f32.mrb[0].mxu0
  %v512 = vpop.f32.mrb[0].mxu0
  %v513 = vadd.f32 0.0, %v512
  %v514 = vpop.f32.mrb[0].mxu0
  %515 = vmatprep.mubr.bf16.mxu0 %v460
  %516 = vmatmul.mubr.bf16.gmra.mrb[0].mxu0 %v459
  %v517 = vpop.f32.mrb[0].mxu0
  %v518 = vadd.f32 0.0, %v517
  %v519 = vpop.f32.mrb[0].mxu0
  %v520 = vpop.f32.mrb[0].mxu0
  %v521 = vadd.f32 0.0, %v520
  %v522 = vpop.f32.mrb[0].mxu0
  %523 = vdwg.mxu0
  %524 = vmatprep.subr.bf16.mxu0 0
  %525 = vmatpush1.bf16.msra.mxu0 %v266
  %526 = vmatprep.subr.bf16.mxu0 0
  %527 = vmatpush1.bf16.msra.mxu0 %v267
  %528 = vmatprep.subr.bf16.mxu0 0
  %529 = vmatpush1.bf16.msra.mxu0 %v268
  %530 = vmatprep.subr.bf16.mxu0 0
  %531 = vmatpush1.bf16.msra.mxu0 %v269
  %532 = vmatprep.subr.bf16.mxu0 0
  %533 = vmatpush1.bf16.msra.mxu0 %v270
  %534 = vmatprep.subr.bf16.mxu0 0
  %535 = vmatpush1.bf16.msra.mxu0 %v271
  %536 = vmatprep.subr.bf16.mxu0 0
  %537 = vmatpush1.bf16.msra.mxu0 %v272
  %538 = vmatprep.subr.bf16.mxu0 0
  %539 = vmatpush1.bf16.msra.mxu0 %v273
  %540 = vmatprep.subr.bf16.mxu0 0
  %541 = vmatpush1.bf16.msra.mxu0 %v274
  %542 = vmatprep.subr.bf16.mxu0 0
  %543 = vmatpush1.bf16.msra.mxu0 %v275
  %544 = vmatprep.subr.bf16.mxu0 0
  %545 = vmatpush1.bf16.msra.mxu0 %v276
  %546 = vmatprep.subr.bf16.mxu0 0
  %547 = vmatpush1.bf16.msra.mxu0 %v277
  %548 = vmatprep.subr.bf16.mxu0 0
  %549 = vmatpush1.bf16.msra.mxu0 %v278
  %550 = vmatprep.subr.bf16.mxu0 0
  %551 = vmatpush1.bf16.msra.mxu0 %v279
  %552 = vmatprep.subr.bf16.mxu0 0
  %553 = vmatpush1.bf16.msra.mxu0 %v280
  %554 = vmatprep.subr.bf16.mxu0 0
  %555 = vmatpush1.bf16.msra.mxu0 %v322
  %556 = vmatprep.mubr.bf16.mxu0 %v470
  %557 = vmatmul.mubr.bf16.gmra.mrb[0].mxu0 %v457
  %v558 = vpop.f32.mrb[0].mxu0
  %v559 = vadd.f32 %v510, %v558
  %v560 = vpop.f32.mrb[0].mxu0
  %v561 = vpop.f32.mrb[0].mxu0
  %v562 = vadd.f32 %v513, %v561
  %v563 = vpop.f32.mrb[0].mxu0
  %564 = vmatprep.mubr.bf16.mxu0 %v473
  %565 = vmatmul.mubr.bf16.gmra.mrb[0].mxu0 %v461
  %v566 = vpop.f32.mrb[0].mxu0
  %v567 = vadd.f32 %v518, %v566
  %v568 = vpop.f32.mrb[0].mxu0
  %v569 = vpop.f32.mrb[0].mxu0
  %v570 = vadd.f32 %v521, %v569
  %v571 = vpop.f32.mrb[0].mxu0
  %572 = vdwg.mxu0
  %s573 = scalar_lea.vmem %s0, 128
  %v574 = vld [vmem:[%s573] sm:$0xff]
  %v575 = vld [vmem:[%s573 + $0x8] sm:$0xff]
  %v576 = vld [vmem:[%s573 + $0x10] sm:$0xff]
  %v577 = vld [vmem:[%s573 + $0x18] sm:$0xff]
  %v578 = vld [vmem:[%s573 + $0x20] sm:$0xff]
  %v579 = vld [vmem:[%s573 + $0x28] sm:$0xff]
  %v580 = vld [vmem:[%s573 + $0x30] sm:$0xff]
  %v581 = vld [vmem:[%s573 + $0x38] sm:$0xff]
  %v590 = vunpack.c.l.b16 %v574
  %v591 = vunpack.c.h.b16 %v574
  %v592 = vunpack.c.l.b16 %v575
  %v593 = vunpack.c.h.b16 %v575
  %v594 = vunpack.c.l.b16 %v576
  %v595 = vunpack.c.h.b16 %v576
  %v596 = vunpack.c.l.b16 %v577
  %v597 = vunpack.c.h.b16 %v577
  %v598 = vunpack.c.l.b16 %v578
  %v599 = vunpack.c.h.b16 %v578
  %v600 = vunpack.c.l.b16 %v579
  %v601 = vunpack.c.h.b16 %v579
  %v602 = vunpack.c.l.b16 %v580
  %v603 = vunpack.c.h.b16 %v580
  %v604 = vunpack.c.l.b16 %v581
  %v605 = vunpack.c.h.b16 %v581
  %v606 = vpack.c.b16 %v594, %v590
  %v607 = vpack.c.b16 %v595, %v591
  %v608 = vpack.c.b16 %v596, %v592
  %v609 = vpack.c.b16 %v597, %v593
  %v610 = vpack.c.b16 %v602, %v598
  %v611 = vpack.c.b16 %v603, %v599
  %v612 = vpack.c.b16 %v604, %v600
  %v613 = vpack.c.b16 %v605, %v601
  %v621 = vsel %vm313, %v609, 0
  %v624 = vsel %vm313, %v613, 0
  %626 = vmatprep.subr.bf16.mxu0 0
  %627 = vmatpush1.bf16.msra.mxu0 %v250
  %628 = vmatprep.subr.bf16.mxu0 0
  %629 = vmatpush1.bf16.msra.mxu0 %v251
  %630 = vmatprep.subr.bf16.mxu0 0
  %631 = vmatpush1.bf16.msra.mxu0 %v252
  %632 = vmatprep.subr.bf16.mxu0 0
  %633 = vmatpush1.bf16.msra.mxu0 %v253
  %634 = vmatprep.subr.bf16.mxu0 0
  %635 = vmatpush1.bf16.msra.mxu0 %v254
  %636 = vmatprep.subr.bf16.mxu0 0
  %637 = vmatpush1.bf16.msra.mxu0 %v255
  %638 = vmatprep.subr.bf16.mxu0 0
  %639 = vmatpush1.bf16.msra.mxu0 %v256
  %640 = vmatprep.subr.bf16.mxu0 0
  %641 = vmatpush1.bf16.msra.mxu0 %v257
  %642 = vmatprep.subr.bf16.mxu0 0
  %643 = vmatpush1.bf16.msra.mxu0 %v258
  %644 = vmatprep.subr.bf16.mxu0 0
  %645 = vmatpush1.bf16.msra.mxu0 %v259
  %646 = vmatprep.subr.bf16.mxu0 0
  %647 = vmatpush1.bf16.msra.mxu0 %v260
  %648 = vmatprep.subr.bf16.mxu0 0
  %649 = vmatpush1.bf16.msra.mxu0 %v261
  %650 = vmatprep.subr.bf16.mxu0 0
  %651 = vmatpush1.bf16.msra.mxu0 %v262
  %652 = vmatprep.subr.bf16.mxu0 0
  %653 = vmatpush1.bf16.msra.mxu0 %v263
  %654 = vmatprep.subr.bf16.mxu0 0
  %655 = vmatpush1.bf16.msra.mxu0 %v264
  %656 = vmatprep.subr.bf16.mxu0 0
  %657 = vmatpush1.bf16.msra.mxu0 %v265
  %658 = vmatprep.mubr.bf16.mxu0 %v607
  %659 = vmatmul.mubr.bf16.gmra.mrb[0].mxu0 %v606
  %v660 = vpop.f32.mrb[0].mxu0
  %v661 = vadd.f32 0.0, %v660
  %v662 = vpop.f32.mrb[0].mxu0
  %v663 = vpop.f32.mrb[0].mxu0
  %v664 = vadd.f32 0.0, %v663
  %v665 = vpop.f32.mrb[0].mxu0
  %666 = vmatprep.mubr.bf16.mxu0 %v611
  %667 = vmatmul.mubr.bf16.gmra.mrb[0].mxu0 %v610
  %v668 = vpop.f32.mrb[0].mxu0
  %v669 = vadd.f32 0.0, %v668
  %v670 = vpop.f32.mrb[0].mxu0
  %v671 = vpop.f32.mrb[0].mxu0
  %v672 = vadd.f32 0.0, %v671
  %v673 = vpop.f32.mrb[0].mxu0
  %674 = vdwg.mxu0
  %675 = vmatprep.subr.bf16.mxu0 0
  %676 = vmatpush1.bf16.msra.mxu0 %v266
  %677 = vmatprep.subr.bf16.mxu0 0
  %678 = vmatpush1.bf16.msra.mxu0 %v267
  %679 = vmatprep.subr.bf16.mxu0 0
  %680 = vmatpush1.bf16.msra.mxu0 %v268
  %681 = vmatprep.subr.bf16.mxu0 0
  %682 = vmatpush1.bf16.msra.mxu0 %v269
  %683 = vmatprep.subr.bf16.mxu0 0
  %684 = vmatpush1.bf16.msra.mxu0 %v270
  %685 = vmatprep.subr.bf16.mxu0 0
  %686 = vmatpush1.bf16.msra.mxu0 %v271
  %687 = vmatprep.subr.bf16.mxu0 0
  %688 = vmatpush1.bf16.msra.mxu0 %v272
  %689 = vmatprep.subr.bf16.mxu0 0
  %690 = vmatpush1.bf16.msra.mxu0 %v273
  %691 = vmatprep.subr.bf16.mxu0 0
  %692 = vmatpush1.bf16.msra.mxu0 %v274
  %693 = vmatprep.subr.bf16.mxu0 0
  %694 = vmatpush1.bf16.msra.mxu0 %v275
  %695 = vmatprep.subr.bf16.mxu0 0
  %696 = vmatpush1.bf16.msra.mxu0 %v276
  %697 = vmatprep.subr.bf16.mxu0 0
  %698 = vmatpush1.bf16.msra.mxu0 %v277
  %699 = vmatprep.subr.bf16.mxu0 0
  %700 = vmatpush1.bf16.msra.mxu0 %v278
  %701 = vmatprep.subr.bf16.mxu0 0
  %702 = vmatpush1.bf16.msra.mxu0 %v279
  %703 = vmatprep.subr.bf16.mxu0 0
  %704 = vmatpush1.bf16.msra.mxu0 %v280
  %705 = vmatprep.subr.bf16.mxu0 0
  %706 = vmatpush1.bf16.msra.mxu0 %v322
  %707 = vmatprep.mubr.bf16.mxu0 %v621
  %708 = vmatmul.mubr.bf16.gmra.mrb[0].mxu0 %v608
  %v709 = vpop.f32.mrb[0].mxu0
  %v710 = vadd.f32 %v661, %v709
  %v711 = vpop.f32.mrb[0].mxu0
  %v712 = vpop.f32.mrb[0].mxu0
  %v713 = vadd.f32 %v664, %v712
  %v714 = vpop.f32.mrb[0].mxu0
  %715 = vmatprep.mubr.bf16.mxu0 %v624
  %716 = vmatmul.mubr.bf16.gmra.mrb[0].mxu0 %v612
  %v717 = vpop.f32.mrb[0].mxu0
  %v718 = vadd.f32 %v669, %v717
  %v719 = vpop.f32.mrb[0].mxu0
  %v720 = vpop.f32.mrb[0].mxu0
  %v721 = vadd.f32 %v672, %v720
  %v722 = vpop.f32.mrb[0].mxu0
  %723 = vdwg.mxu0
  %s724 = scalar_lea.vmem %s0, 192
  %v725 = vld [vmem:[%s724] sm:$0xff]
  %v726 = vld [vmem:[%s724 + $0x8] sm:$0xff]
  %v727 = vld [vmem:[%s724 + $0x10] sm:$0xff]
  %v728 = vld [vmem:[%s724 + $0x18] sm:$0xff]
  %v729 = vld [vmem:[%s724 + $0x20] sm:$0xff]
  %v730 = vld [vmem:[%s724 + $0x28] sm:$0xff]
  %v731 = vld [vmem:[%s724 + $0x30] sm:$0xff]
  %v732 = vld [vmem:[%s724 + $0x38] sm:$0xff]
  %v741 = vunpack.c.l.b16 %v725
  %v742 = vunpack.c.h.b16 %v725
  %v743 = vunpack.c.l.b16 %v726
  %v744 = vunpack.c.h.b16 %v726
  %v745 = vunpack.c.l.b16 %v727
  %v746 = vunpack.c.h.b16 %v727
  %v747 = vunpack.c.l.b16 %v728
  %v748 = vunpack.c.h.b16 %v728
  %v749 = vunpack.c.l.b16 %v729
  %v750 = vunpack.c.h.b16 %v729
  %v751 = vunpack.c.l.b16 %v730
  %v752 = vunpack.c.h.b16 %v730
  %v753 = vunpack.c.l.b16 %v731
  %v754 = vunpack.c.h.b16 %v731
  %v755 = vunpack.c.l.b16 %v732
  %v756 = vunpack.c.h.b16 %v732
  %v757 = vpack.c.b16 %v745, %v741
  %v758 = vpack.c.b16 %v746, %v742
  %v759 = vpack.c.b16 %v747, %v743
  %v760 = vpack.c.b16 %v748, %v744
  %v761 = vpack.c.b16 %v753, %v749
  %v762 = vpack.c.b16 %v754, %v750
  %v763 = vpack.c.b16 %v755, %v751
  %v764 = vpack.c.b16 %v756, %v752
  %v772 = vsel %vm313, %v760, 0
  %v775 = vsel %vm313, %v764, 0
  %777 = vmatprep.subr.bf16.mxu0 0
  %778 = vmatpush1.bf16.msra.mxu0 %v250
  %779 = vmatprep.subr.bf16.mxu0 0
  %780 = vmatpush1.bf16.msra.mxu0 %v251
  %781 = vmatprep.subr.bf16.mxu0 0
  %782 = vmatpush1.bf16.msra.mxu0 %v252
  %783 = vmatprep.subr.bf16.mxu0 0
  %784 = vmatpush1.bf16.msra.mxu0 %v253
  %785 = vmatprep.subr.bf16.mxu0 0
  %786 = vmatpush1.bf16.msra.mxu0 %v254
  %787 = vmatprep.subr.bf16.mxu0 0
  %788 = vmatpush1.bf16.msra.mxu0 %v255
  %789 = vmatprep.subr.bf16.mxu0 0
  %790 = vmatpush1.bf16.msra.mxu0 %v256
  %791 = vmatprep.subr.bf16.mxu0 0
  %792 = vmatpush1.bf16.msra.mxu0 %v257
  %793 = vmatprep.subr.bf16.mxu0 0
  %794 = vmatpush1.bf16.msra.mxu0 %v258
  %795 = vmatprep.subr.bf16.mxu0 0
  %796 = vmatpush1.bf16.msra.mxu0 %v259
  %797 = vmatprep.subr.bf16.mxu0 0
  %798 = vmatpush1.bf16.msra.mxu0 %v260
  %799 = vmatprep.subr.bf16.mxu0 0
  %800 = vmatpush1.bf16.msra.mxu0 %v261
  %801 = vmatprep.subr.bf16.mxu0 0
  %802 = vmatpush1.bf16.msra.mxu0 %v262
  %803 = vmatprep.subr.bf16.mxu0 0
  %804 = vmatpush1.bf16.msra.mxu0 %v263
  %805 = vmatprep.subr.bf16.mxu0 0
  %806 = vmatpush1.bf16.msra.mxu0 %v264
  %807 = vmatprep.subr.bf16.mxu0 0
  %808 = vmatpush1.bf16.msra.mxu0 %v265
  %809 = vmatprep.mubr.bf16.mxu0 %v758
  %810 = vmatmul.mubr.bf16.gmra.mrb[0].mxu0 %v757
  %v811 = vpop.f32.mrb[0].mxu0
  %v812 = vadd.f32 0.0, %v811
  %v813 = vpop.f32.mrb[0].mxu0
  %v814 = vpop.f32.mrb[0].mxu0
  %v815 = vadd.f32 0.0, %v814
  %v816 = vpop.f32.mrb[0].mxu0
  %817 = vmatprep.mubr.bf16.mxu0 %v762
  %818 = vmatmul.mubr.bf16.gmra.mrb[0].mxu0 %v761
  %v819 = vpop.f32.mrb[0].mxu0
  %v820 = vadd.f32 0.0, %v819
  %v821 = vpop.f32.mrb[0].mxu0
  %v822 = vpop.f32.mrb[0].mxu0
  %v823 = vadd.f32 0.0, %v822
  %v824 = vpop.f32.mrb[0].mxu0
  %825 = vdwg.mxu0
  %826 = vmatprep.subr.bf16.mxu0 0
  %827 = vmatpush1.bf16.msra.mxu0 %v266
  %828 = vmatprep.subr.bf16.mxu0 0
  %829 = vmatpush1.bf16.msra.mxu0 %v267
  %830 = vmatprep.subr.bf16.mxu0 0
  %831 = vmatpush1.bf16.msra.mxu0 %v268
  %832 = vmatprep.subr.bf16.mxu0 0
  %833 = vmatpush1.bf16.msra.mxu0 %v269
  %834 = vmatprep.subr.bf16.mxu0 0
  %835 = vmatpush1.bf16.msra.mxu0 %v270
  %836 = vmatprep.subr.bf16.mxu0 0
  %837 = vmatpush1.bf16.msra.mxu0 %v271
  %838 = vmatprep.subr.bf16.mxu0 0
  %839 = vmatpush1.bf16.msra.mxu0 %v272
  %840 = vmatprep.subr.bf16.mxu0 0
  %841 = vmatpush1.bf16.msra.mxu0 %v273
  %842 = vmatprep.subr.bf16.mxu0 0
  %843 = vmatpush1.bf16.msra.mxu0 %v274
  %844 = vmatprep.subr.bf16.mxu0 0
  %845 = vmatpush1.bf16.msra.mxu0 %v275
  %846 = vmatprep.subr.bf16.mxu0 0
  %847 = vmatpush1.bf16.msra.mxu0 %v276
  %848 = vmatprep.subr.bf16.mxu0 0
  %849 = vmatpush1.bf16.msra.mxu0 %v277
  %850 = vmatprep.subr.bf16.mxu0 0
  %851 = vmatpush1.bf16.msra.mxu0 %v278
  %852 = vmatprep.subr.bf16.mxu0 0
  %853 = vmatpush1.bf16.msra.mxu0 %v279
  %854 = vmatprep.subr.bf16.mxu0 0
  %855 = vmatpush1.bf16.msra.mxu0 %v280
  %856 = vmatprep.subr.bf16.mxu0 0
  %857 = vmatpush1.bf16.msra.mxu0 %v322
  %858 = vmatprep.mubr.bf16.mxu0 %v772
  %859 = vmatmul.mubr.bf16.gmra.mrb[0].mxu0 %v759
  %v860 = vpop.f32.mrb[0].mxu0
  %v861 = vadd.f32 %v812, %v860
  %v862 = vpop.f32.mrb[0].mxu0
  %v863 = vpop.f32.mrb[0].mxu0
  %v864 = vadd.f32 %v815, %v863
  %v865 = vpop.f32.mrb[0].mxu0
  %866 = vmatprep.mubr.bf16.mxu0 %v775
  %867 = vmatmul.mubr.bf16.gmra.mrb[0].mxu0 %v763
  %v868 = vpop.f32.mrb[0].mxu0
  %v869 = vadd.f32 %v820, %v868
  %v870 = vpop.f32.mrb[0].mxu0
  %v871 = vpop.f32.mrb[0].mxu0
  %v872 = vadd.f32 %v823, %v871
  %v873 = vpop.f32.mrb[0].mxu0
  %874 = vdwg.mxu0
  %v875 = vmax.f32 %v408, %v559
  %v876 = vmax.f32 %v411, %v562
  %v877 = vmax.f32 %v416, %v567
  %v878 = vmax.f32 %v419, %v570
  %v879 = vmax.f32 %v710, %v861
  %v880 = vmax.f32 %v713, %v864
  %v881 = vmax.f32 %v718, %v869
  %v882 = vmax.f32 %v721, %v872
  %v883 = vmax.f32 %v875, %v879
  %v884 = vmax.f32 %v876, %v880
  %v885 = vmax.f32 %v877, %v881
  %v886 = vmax.f32 %v878, %v882
  %v887 = vld [vmem:[%s2] sm:$0x1]
  %v889 = vlaneseq
  %v890 = vshrl.u32 %v889, 7
  %v891 = vsub.s32 0, %v890
  %v892 = vrot.slane %v887, %v891
  %v894 = vadd.f32 %v883, %v892
  %v895 = vadd.f32 %v884, %v892
  %v896 = vadd.f32 %v885, %v892
  %v897 = vadd.f32 %v886, %v892
  %v898 = vmax.f32 %v894, 0.0
  %v899 = vmax.f32 %v895, 0.0
  %v900 = vmax.f32 %v896, 0.0
  %v901 = vmax.f32 %v897, 0.0
  %v902 = vpack.c.bf16 %v899, %v898
  %v903 = vpack.c.bf16 %v901, %v900
  %v906 = vunpack.c.l.b16 %v902
  %v907 = vunpack.c.h.b16 %v902
  %v908 = vunpack.c.l.b16 %v903
  %v909 = vunpack.c.h.b16 %v903
  %v910 = vpack.c.b16 %v906, %v906
  %v911 = vpack.c.b16 %v907, %v907
  %v912 = vpack.c.b16 %v908, %v908
  %v913 = vpack.c.b16 %v909, %v909
  %vm918 = vcmask 404480
  %919 = vst.msk [vmem:[%s3] sm:$0xf] %vm918, %v910
  %920 = vst.msk [vmem:[%s3 + $0x4] sm:$0xf] %vm918, %v911
  %921 = vst.msk [vmem:[%s3 + $0x8] sm:$0xf] %vm918, %v912
  %922 = vst.msk [vmem:[%s3 + $0xc] sm:$0xf] %vm918, %v913
  // Predicated region
  $region14: #{lenet_forward.4} parent=0 // pred_check
    _
  $region15: #{lenet_forward.4} parent=0 // pred_check_branch
    %924 = sbr.rel (0) target = $region17
  $region16: #{lenet_forward.4} parent=0 // pred_region
    _
  $region17: #{lenet_forward.4} parent=0 // pred_fallthru
    _
  // Predicated region
  $region18: #{lenet_forward.4} parent=0 // pred_check
    _
  $region19: #{lenet_forward.4} parent=0 // pred_check_branch
    %926 = sbr.rel (0) target = $region21
  $region20: #{lenet_forward.4} parent=0 // pred_region
    _
  $region21: #{lenet_forward.4} parent=0 // pred_fallthru
    _

// kernel: lenet_forward.5
$region0: #{lenet_forward.5}
  #allocation0 [shape = 'u32[]', space=smem, size = 0x4, offset = 0x4, fixed_abs, tag = 'smem constant byte address 0x4 - core index']
  #allocation1 [shape = 'u32[144,128]{1,0:T(1,128)}', space=vmem, size = 0x12000, scoped, tag = 'internal scratch']
  %s0 = inlined_call_operand.vmem [shape: bf16[8,800], index: 0, kind: input, shape index: {}]
  %s1 = inlined_call_operand.vmem [shape: bf16[800,500], index: 1, kind: input, shape index: {}]
  %s2 = inlined_call_operand.vmem [shape: f32[1,500], index: 2, kind: input, shape index: {}]
  %s3 = inlined_call_operand.vmem [shape: bf16[500,128], index: 3, kind: input, shape index: {}]
  %s4 = inlined_call_operand.vmem [shape: f32[1,128], index: 4, kind: input, shape index: {}]
  %s5 = inlined_call_operand.vmem [shape: f32[8,128], index: 5, kind: output, shape index: {}]
  %s6 = sld [smem:[#allocation0]]
  $region30: #{lenet_forward.5} parent=0
    _
  %s8 = ssub.s32 1, %s6
  %s9 = scalar_select 0, %s8, %s6
  // Predicated region
  $region2: #{lenet_forward.5} parent=0 // pred_check
    _
  $region3: #{lenet_forward.5} parent=0 // pred_check_branch
    %11 = sbr.rel (0) target = $region5
  $region4: #{lenet_forward.5} parent=0 // pred_region
    _
  $region5: #{lenet_forward.5} parent=0 // pred_fallthru
    _
  // Predicated region
  $region6: #{lenet_forward.5} parent=0 // pred_check
    _
  $region7: #{lenet_forward.5} parent=0 // pred_check_branch
    %13 = sbr.rel (0) target = $region9
  $region8: #{lenet_forward.5} parent=0 // pred_region
    _
  $region9: #{lenet_forward.5} parent=0 // pred_fallthru
    _
  // Predicated region
  $region10: #{lenet_forward.5} parent=0 // pred_check
    _
  $region11: #{lenet_forward.5} parent=0 // pred_check_branch
    %15 = sbr.rel (0) target = $region13
  $region12: #{lenet_forward.5} parent=0 // pred_region
    _
  $region13: #{lenet_forward.5} parent=0 // pred_fallthru
    _
  // Predicated region
  $region14: #{lenet_forward.5} parent=0 // pred_check
    _
  $region15: #{lenet_forward.5} parent=0 // pred_check_branch
    %17 = sbr.rel (0) target = $region17
  $region16: #{lenet_forward.5} parent=0 // pred_region
    _
  $region17: #{lenet_forward.5} parent=0 // pred_fallthru
    _
  // Predicated region
  $region18: #{lenet_forward.5} parent=0 // pred_check
    _
  $region19: #{lenet_forward.5} parent=0 // pred_check_branch
    %19 = sbr.rel (0) target = $region21
  $region20: #{lenet_forward.5} parent=0 // pred_region
    _
  $region21: #{lenet_forward.5} parent=0 // pred_fallthru
    _
  %v21 = vld [vmem:[%s0] sm:$0xff]
  %v22 = vld [vmem:[%s0 + $0x8] sm:$0xff]
  %v23 = vld [vmem:[%s0 + $0x10] sm:$0xff]
  %v24 = vld [vmem:[%s0 + $0x18] sm:$0xf]
  %v25 = vld [vmem:[%s1] sm:$0xff]
  %v26 = vld [vmem:[%s1 + $0x8] sm:$0xff]
  %v27 = vld [vmem:[%s1 + $0x10] sm:$0xff]
  %v28 = vld [vmem:[%s1 + $0x18] sm:$0xff]
  %v29 = vld [vmem:[%s1 + $0x20] sm:$0xff]
  %v30 = vld [vmem:[%s1 + $0x28] sm:$0xff]
  %v31 = vld [vmem:[%s1 + $0x30] sm:$0xff]
  %v32 = vld [vmem:[%s1 + $0x38] sm:$0xff]
  %v33 = vld [vmem:[%s1 + $0x40] sm:$0xff]
  %v34 = vld [vmem:[%s1 + $0x48] sm:$0xff]
  %v35 = vld [vmem:[%s1 + $0x50] sm:$0xff]
  %v36 = vld [vmem:[%s1 + $0x58] sm:$0xff]
  %v37 = vld [vmem:[%s1 + $0x60] sm:$0xff]
  %v38 = vld [vmem:[%s1 + $0x68] sm:$0xff]
  %v39 = vld [vmem:[%s1 + $0x70] sm:$0xff]
  %v40 = vld [vmem:[%s1 + $0x78] sm:$0xff]
  %v41 = vld [vmem:[%s1 + $0x80] sm:$0xff]
  %v42 = vld [vmem:[%s1 + $0x88] sm:$0xff]
  %v43 = vld [vmem:[%s1 + $0x90] sm:$0xff]
  %v44 = vld [vmem:[%s1 + $0x98] sm:$0xff]
  %v45 = vld [vmem:[%s1 + $0xa0] sm:$0xff]
  %v46 = vld [vmem:[%s1 + $0xa8] sm:$0xff]
  %v47 = vld [vmem:[%s1 + $0xb0] sm:$0xff]
  %v48 = vld [vmem:[%s1 + $0xb8] sm:$0xff]
  %v49 = vld [vmem:[%s1 + $0xc0] sm:$0xff]
  %v50 = vld [vmem:[%s1 + $0xc8] sm:$0xff]
  %v51 = vld [vmem:[%s1 + $0xd0] sm:$0xff]
  %v52 = vld [vmem:[%s1 + $0xd8] sm:$0xff]
  %v53 = vld [vmem:[%s1 + $0xe0] sm:$0xff]
  %v54 = vld [vmem:[%s1 + $0xe8] sm:$0xff]
  %v55 = vld [vmem:[%s1 + $0xf0] sm:$0xff]
  %v56 = vld [vmem:[%s1 + $0xf8] sm:$0xff]
  %v57 = vld [vmem:[%s1 + $0x100] sm:$0xff]
  %v58 = vld [vmem:[%s1 + $0x108] sm:$0xff]
  %v59 = vld [vmem:[%s1 + $0x110] sm:$0xff]
  %v60 = vld [vmem:[%s1 + $0x118] sm:$0xff]
  %v61 = vld [vmem:[%s1 + $0x120] sm:$0xff]
  %v62 = vld [vmem:[%s1 + $0x128] sm:$0xff]
  %v63 = vld [vmem:[%s1 + $0x130] sm:$0xff]
  %v64 = vld [vmem:[%s1 + $0x138] sm:$0xff]
  %v65 = vld [vmem:[%s1 + $0x140] sm:$0xff]
  %v66 = vld [vmem:[%s1 + $0x148] sm:$0xff]
  %v67 = vld [vmem:[%s1 + $0x150] sm:$0xff]
  %v68 = vld [vmem:[%s1 + $0x158] sm:$0xff]
  %v69 = vld [vmem:[%s1 + $0x160] sm:$0xff]
  %v70 = vld [vmem:[%s1 + $0x168] sm:$0xff]
  %v71 = vld [vmem:[%s1 + $0x170] sm:$0xff]
  %v72 = vld [vmem:[%s1 + $0x178] sm:$0xff]
  %v73 = vld [vmem:[%s1 + $0x180] sm:$0xff]
  %v74 = vld [vmem:[%s1 + $0x188] sm:$0xff]
  %v75 = vld [vmem:[%s1 + $0x190] sm:$0xff]
  %v76 = vld [vmem:[%s1 + $0x198] sm:$0xff]
  %v77 = vld [vmem:[%s1 + $0x1a0] sm:$0xff]
  %v78 = vld [vmem:[%s1 + $0x1a8] sm:$0xff]
  %v79 = vld [vmem:[%s1 + $0x1b0] sm:$0xff]
  %v80 = vld [vmem:[%s1 + $0x1b8] sm:$0xff]
  %v81 = vld [vmem:[%s1 + $0x1c0] sm:$0xff]
  %v82 = vld [vmem:[%s1 + $0x1c8] sm:$0xff]
  %v83 = vld [vmem:[%s1 + $0x1d0] sm:$0xff]
  %v84 = vld [vmem:[%s1 + $0x1d8] sm:$0xff]
  %v85 = vld [vmem:[%s1 + $0x1e0] sm:$0xff]
  %v86 = vld [vmem:[%s1 + $0x1e8] sm:$0xff]
  %v87 = vld [vmem:[%s1 + $0x1f0] sm:$0xff]
  %v88 = vld [vmem:[%s1 + $0x1f8] sm:$0xff]
  %v89 = vld [vmem:[%s1 + $0x200] sm:$0xff]
  %v90 = vld [vmem:[%s1 + $0x208] sm:$0xff]
  %v91 = vld [vmem:[%s1 + $0x210] sm:$0xff]
  %v92 = vld [vmem:[%s1 + $0x218] sm:$0xff]
  %v93 = vld [vmem:[%s1 + $0x220] sm:$0xff]
  %v94 = vld [vmem:[%s1 + $0x228] sm:$0xff]
  %v95 = vld [vmem:[%s1 + $0x230] sm:$0xff]
  %v96 = vld [vmem:[%s1 + $0x238] sm:$0xff]
  %v97 = vld [vmem:[%s1 + $0x240] sm:$0xff]
  %v98 = vld [vmem:[%s1 + $0x248] sm:$0xff]
  %v99 = vld [vmem:[%s1 + $0x250] sm:$0xff]
  %v100 = vld [vmem:[%s1 + $0x258] sm:$0xff]
  %v101 = vld [vmem:[%s1 + $0x260] sm:$0xff]
  %v102 = vld [vmem:[%s1 + $0x268] sm:$0xff]
  %v103 = vld [vmem:[%s1 + $0x270] sm:$0xff]
  %v104 = vld [vmem:[%s1 + $0x278] sm:$0xff]
  %v105 = vld [vmem:[%s1 + $0x280] sm:$0xff]
  %v106 = vld [vmem:[%s1 + $0x288] sm:$0xff]
  %v107 = vld [vmem:[%s1 + $0x290] sm:$0xff]
  %v108 = vld [vmem:[%s1 + $0x298] sm:$0xff]
  %v109 = vld [vmem:[%s1 + $0x2a0] sm:$0xff]
  %v110 = vld [vmem:[%s1 + $0x2a8] sm:$0xff]
  %v111 = vld [vmem:[%s1 + $0x2b0] sm:$0xff]
  %v112 = vld [vmem:[%s1 + $0x2b8] sm:$0xff]
  %v113 = vld [vmem:[%s1 + $0x2c0] sm:$0xff]
  %v114 = vld [vmem:[%s1 + $0x2c8] sm:$0xff]
  %v115 = vld [vmem:[%s1 + $0x2d0] sm:$0xff]
  %v116 = vld [vmem:[%s1 + $0x2d8] sm:$0xff]
  %v117 = vld [vmem:[%s1 + $0x2e0] sm:$0xff]
  %v118 = vld [vmem:[%s1 + $0x2e8] sm:$0xff]
  %v119 = vld [vmem:[%s1 + $0x2f0] sm:$0xff]
  %v120 = vld [vmem:[%s1 + $0x2f8] sm:$0xff]
  %v121 = vld [vmem:[%s1 + $0x300] sm:$0xff]
  %v122 = vld [vmem:[%s1 + $0x308] sm:$0xff]
  %v123 = vld [vmem:[%s1 + $0x310] sm:$0xff]
  %v124 = vld [vmem:[%s1 + $0x318] sm:$0xff]
  %v125 = vld [vmem:[%s1 + $0x320] sm:$0xff]
  %v126 = vld [vmem:[%s1 + $0x328] sm:$0xff]
  %v127 = vld [vmem:[%s1 + $0x330] sm:$0xff]
  %v128 = vld [vmem:[%s1 + $0x338] sm:$0xff]
  %v129 = vld [vmem:[%s1 + $0x340] sm:$0xff]
  %v130 = vld [vmem:[%s1 + $0x348] sm:$0xff]
  %v131 = vld [vmem:[%s1 + $0x350] sm:$0xff]
  %v132 = vld [vmem:[%s1 + $0x358] sm:$0xff]
  %v133 = vld [vmem:[%s1 + $0x360] sm:$0xff]
  %v134 = vld [vmem:[%s1 + $0x368] sm:$0xff]
  %v135 = vld [vmem:[%s1 + $0x370] sm:$0xff]
  %v136 = vld [vmem:[%s1 + $0x378] sm:$0xff]
  %v137 = vld [vmem:[%s1 + $0x380] sm:$0xff]
  %v138 = vld [vmem:[%s1 + $0x388] sm:$0xff]
  %v139 = vld [vmem:[%s1 + $0x390] sm:$0xff]
  %v140 = vld [vmem:[%s1 + $0x398] sm:$0xff]
  %v141 = vld [vmem:[%s1 + $0x3a0] sm:$0xff]
  %v142 = vld [vmem:[%s1 + $0x3a8] sm:$0xff]
  %v143 = vld [vmem:[%s1 + $0x3b0] sm:$0xff]
  %v144 = vld [vmem:[%s1 + $0x3b8] sm:$0xff]
  %v145 = vld [vmem:[%s1 + $0x3c0] sm:$0xff]
  %v146 = vld [vmem:[%s1 + $0x3c8] sm:$0xff]
  %v147 = vld [vmem:[%s1 + $0x3d0] sm:$0xff]
  %v148 = vld [vmem:[%s1 + $0x3d8] sm:$0xff]
  %v149 = vld [vmem:[%s1 + $0x3e0] sm:$0xff]
  %v150 = vld [vmem:[%s1 + $0x3e8] sm:$0xff]
  %v151 = vld [vmem:[%s1 + $0x3f0] sm:$0xff]
  %v152 = vld [vmem:[%s1 + $0x3f8] sm:$0xff]
  %v153 = vld [vmem:[%s1 + $0x400] sm:$0xff]
  %v154 = vld [vmem:[%s1 + $0x408] sm:$0xff]
  %v155 = vld [vmem:[%s1 + $0x410] sm:$0xff]
  %v156 = vld [vmem:[%s1 + $0x418] sm:$0xff]
  %v157 = vld [vmem:[%s1 + $0x420] sm:$0xff]
  %v158 = vld [vmem:[%s1 + $0x428] sm:$0xff]
  %v159 = vld [vmem:[%s1 + $0x430] sm:$0xff]
  %v160 = vld [vmem:[%s1 + $0x438] sm:$0xff]
  %v161 = vld [vmem:[%s1 + $0x440] sm:$0xff]
  %v162 = vld [vmem:[%s1 + $0x448] sm:$0xff]
  %v163 = vld [vmem:[%s1 + $0x450] sm:$0xff]
  %v164 = vld [vmem:[%s1 + $0x458] sm:$0xff]
  %v165 = vld [vmem:[%s1 + $0x460] sm:$0xff]
  %v166 = vld [vmem:[%s1 + $0x468] sm:$0xff]
  %v167 = vld [vmem:[%s1 + $0x470] sm:$0xff]
  %v168 = vld [vmem:[%s1 + $0x478] sm:$0xff]
  %v169 = vld [vmem:[%s1 + $0x480] sm:$0xff]
  %v170 = vld [vmem:[%s1 + $0x488] sm:$0xff]
  %v171 = vld [vmem:[%s1 + $0x490] sm:$0xff]
  %v172 = vld [vmem:[%s1 + $0x498] sm:$0xff]
  %v173 = vld [vmem:[%s1 + $0x4a0] sm:$0xff]
  %v174 = vld [vmem:[%s1 + $0x4a8] sm:$0xff]
  %v175 = vld [vmem:[%s1 + $0x4b0] sm:$0xff]
  %v176 = vld [vmem:[%s1 + $0x4b8] sm:$0xff]
  %v177 = vld [vmem:[%s1 + $0x4c0] sm:$0xff]
  %v178 = vld [vmem:[%s1 + $0x4c8] sm:$0xff]
  %v179 = vld [vmem:[%s1 + $0x4d0] sm:$0xff]
  %v180 = vld [vmem:[%s1 + $0x4d8] sm:$0xff]
  %v181 = vld [vmem:[%s1 + $0x4e0] sm:$0xff]
  %v182 = vld [vmem:[%s1 + $0x4e8] sm:$0xff]
  %v183 = vld [vmem:[%s1 + $0x4f0] sm:$0xff]
  %v184 = vld [vmem:[%s1 + $0x4f8] sm:$0xff]
  %v185 = vld [vmem:[%s1 + $0x500] sm:$0xff]
  %v186 = vld [vmem:[%s1 + $0x508] sm:$0xff]
  %v187 = vld [vmem:[%s1 + $0x510] sm:$0xff]
  %v188 = vld [vmem:[%s1 + $0x518] sm:$0xff]
  %v189 = vld [vmem:[%s1 + $0x520] sm:$0xff]
  %v190 = vld [vmem:[%s1 + $0x528] sm:$0xff]
  %v191 = vld [vmem:[%s1 + $0x530] sm:$0xff]
  %v192 = vld [vmem:[%s1 + $0x538] sm:$0xff]
  %v193 = vld [vmem:[%s1 + $0x540] sm:$0xff]
  %v194 = vld [vmem:[%s1 + $0x548] sm:$0xff]
  %v195 = vld [vmem:[%s1 + $0x550] sm:$0xff]
  %v196 = vld [vmem:[%s1 + $0x558] sm:$0xff]
  %v197 = vld [vmem:[%s1 + $0x560] sm:$0xff]
  %v198 = vld [vmem:[%s1 + $0x568] sm:$0xff]
  %v199 = vld [vmem:[%s1 + $0x570] sm:$0xff]
  %v200 = vld [vmem:[%s1 + $0x578] sm:$0xff]
  %v201 = vld [vmem:[%s1 + $0x580] sm:$0xff]
  %v202 = vld [vmem:[%s1 + $0x588] sm:$0xff]
  %v203 = vld [vmem:[%s1 + $0x590] sm:$0xff]
  %v204 = vld [vmem:[%s1 + $0x598] sm:$0xff]
  %v205 = vld [vmem:[%s1 + $0x5a0] sm:$0xff]
  %v206 = vld [vmem:[%s1 + $0x5a8] sm:$0xff]
  %v207 = vld [vmem:[%s1 + $0x5b0] sm:$0xff]
  %v208 = vld [vmem:[%s1 + $0x5b8] sm:$0xff]
  %v209 = vld [vmem:[%s1 + $0x5c0] sm:$0xff]
  %v210 = vld [vmem:[%s1 + $0x5c8] sm:$0xff]
  %v211 = vld [vmem:[%s1 + $0x5d0] sm:$0xff]
  %v212 = vld [vmem:[%s1 + $0x5d8] sm:$0xff]
  %v213 = vld [vmem:[%s1 + $0x5e0] sm:$0xff]
  %v214 = vld [vmem:[%s1 + $0x5e8] sm:$0xff]
  %v215 = vld [vmem:[%s1 + $0x5f0] sm:$0xff]
  %v216 = vld [vmem:[%s1 + $0x5f8] sm:$0xff]
  %v217 = vld [vmem:[%s1 + $0x600] sm:$0xff]
  %v218 = vld [vmem:[%s1 + $0x608] sm:$0xff]
  %v219 = vld [vmem:[%s1 + $0x610] sm:$0xff]
  %v220 = vld [vmem:[%s1 + $0x618] sm:$0xff]
  %v221 = vld [vmem:[%s1 + $0x620] sm:$0xff]
  %v222 = vld [vmem:[%s1 + $0x628] sm:$0xff]
  %v223 = vld [vmem:[%s1 + $0x630] sm:$0xff]
  %v224 = vld [vmem:[%s1 + $0x638] sm:$0xff]
  %v225 = vld [vmem:[%s2] sm:$0xf]
  %v227 = vlaneseq
  %v228 = vshrl.u32 %v227, 7
  %v229 = vsub.s32 0, %v228
  %v230 = vrot.slane %v225, %v229
  %v231 = vlaneseq
  %v232 = vshrl.u32 %v231, 7
  %v233 = vsub.s32 1, %v232
  %v234 = vrot.slane %v225, %v233
  %v235 = vlaneseq
  %v236 = vshrl.u32 %v235, 7
  %v237 = vsub.s32 2, %v236
  %v238 = vrot.slane %v225, %v237
  %v239 = vlaneseq
  %v240 = vshrl.u32 %v239, 7
  %v241 = vsub.s32 3, %v240
  %v242 = vrot.slane %v225, %v241
  %v251 = vunpack.c.l.b16 %v21
  %v252 = vunpack.c.h.b16 %v21
  %v253 = vunpack.c.l.b16 %v22
  %v254 = vunpack.c.h.b16 %v22
  %v255 = vunpack.c.l.b16 %v23
  %v256 = vunpack.c.h.b16 %v23
  %v257 = vunpack.c.l.b16 %v24
  %v258 = vpack.c.b16 %v251, %v251
  %v259 = vpack.c.b16 %v252, %v252
  %v260 = vpack.c.b16 %v253, %v253
  %v261 = vpack.c.b16 %v254, %v254
  %v262 = vpack.c.b16 %v255, %v255
  %v263 = vpack.c.b16 %v256, %v256
  %v264 = vpack.c.b16 %v257, %v257
  %v471 = vunpack.c.l.b16 %v25
  %v472 = vunpack.c.h.b16 %v25
  %v473 = vunpack.c.l.b16 %v26
  %v474 = vunpack.c.h.b16 %v26
  %v475 = vunpack.c.l.b16 %v27
  %v476 = vunpack.c.h.b16 %v27
  %v477 = vunpack.c.l.b16 %v28
  %v478 = vunpack.c.h.b16 %v28
  %v479 = vunpack.c.l.b16 %v29
  %v480 = vunpack.c.h.b16 %v29
  %v481 = vunpack.c.l.b16 %v30
  %v482 = vunpack.c.h.b16 %v30
  %v483 = vunpack.c.l.b16 %v31
  %v484 = vunpack.c.h.b16 %v31
  %v485 = vunpack.c.l.b16 %v32
  %v486 = vunpack.c.h.b16 %v32
  %v487 = vunpack.c.l.b16 %v33
  %v488 = vunpack.c.h.b16 %v33
  %v489 = vunpack.c.l.b16 %v34
  %v490 = vunpack.c.h.b16 %v34
  %v491 = vunpack.c.l.b16 %v35
  %v492 = vunpack.c.h.b16 %v35
  %v493 = vunpack.c.l.b16 %v36
  %v494 = vunpack.c.h.b16 %v36
  %v495 = vunpack.c.l.b16 %v37
  %v496 = vunpack.c.h.b16 %v37
  %v497 = vunpack.c.l.b16 %v38
  %v498 = vunpack.c.h.b16 %v38
  %v499 = vunpack.c.l.b16 %v39
  %v500 = vunpack.c.h.b16 %v39
  %v501 = vunpack.c.l.b16 %v40
  %v502 = vunpack.c.h.b16 %v40
  %v503 = vunpack.c.l.b16 %v41
  %v504 = vunpack.c.h.b16 %v41
  %v505 = vunpack.c.l.b16 %v42
  %v506 = vunpack.c.h.b16 %v42
  %v507 = vunpack.c.l.b16 %v43
  %v508 = vunpack.c.h.b16 %v43
  %v509 = vunpack.c.l.b16 %v44
  %v510 = vunpack.c.h.b16 %v44
  %v511 = vunpack.c.l.b16 %v45
  %v512 = vunpack.c.h.b16 %v45
  %v513 = vunpack.c.l.b16 %v46
  %v514 = vunpack.c.h.b16 %v46
  %v515 = vunpack.c.l.b16 %v47
  %v516 = vunpack.c.h.b16 %v47
  %v517 = vunpack.c.l.b16 %v48
  %v518 = vunpack.c.h.b16 %v48
  %v519 = vunpack.c.l.b16 %v49
  %v520 = vunpack.c.h.b16 %v49
  %v521 = vunpack.c.l.b16 %v50
  %v522 = vunpack.c.h.b16 %v50
  %v523 = vunpack.c.l.b16 %v51
  %v524 = vunpack.c.h.b16 %v51
  %v525 = vunpack.c.l.b16 %v52
  %v526 = vunpack.c.h.b16 %v52
  %v527 = vunpack.c.l.b16 %v53
  %v528 = vunpack.c.h.b16 %v53
  %v529 = vunpack.c.l.b16 %v54
  %v530 = vunpack.c.h.b16 %v54
  %v531 = vunpack.c.l.b16 %v55
  %v532 = vunpack.c.h.b16 %v55
  %v533 = vunpack.c.l.b16 %v56
  %v534 = vunpack.c.h.b16 %v56
  %v535 = vunpack.c.l.b16 %v57
  %v536 = vunpack.c.h.b16 %v57
  %v537 = vunpack.c.l.b16 %v58
  %v538 = vunpack.c.h.b16 %v58
  %v539 = vunpack.c.l.b16 %v59
  %v540 = vunpack.c.h.b16 %v59
  %v541 = vunpack.c.l.b16 %v60
  %v542 = vunpack.c.h.b16 %v60
  %v543 = vunpack.c.l.b16 %v61
  %v544 = vunpack.c.h.b16 %v61
  %v545 = vunpack.c.l.b16 %v62
  %v546 = vunpack.c.h.b16 %v62
  %v547 = vunpack.c.l.b16 %v63
  %v548 = vunpack.c.h.b16 %v63
  %v549 = vunpack.c.l.b16 %v64
  %v550 = vunpack.c.h.b16 %v64
  %v551 = vunpack.c.l.b16 %v65
  %v552 = vunpack.c.h.b16 %v65
  %v553 = vunpack.c.l.b16 %v66
  %v554 = vunpack.c.h.b16 %v66
  %v555 = vunpack.c.l.b16 %v67
  %v556 = vunpack.c.h.b16 %v67
  %v557 = vunpack.c.l.b16 %v68
  %v558 = vunpack.c.h.b16 %v68
  %v559 = vunpack.c.l.b16 %v69
  %v560 = vunpack.c.h.b16 %v69
  %v561 = vunpack.c.l.b16 %v70
  %v562 = vunpack.c.h.b16 %v70
  %v563 = vunpack.c.l.b16 %v71
  %v564 = vunpack.c.h.b16 %v71
  %v565 = vunpack.c.l.b16 %v72
  %v566 = vunpack.c.h.b16 %v72
  %v567 = vunpack.c.l.b16 %v73
  %v568 = vunpack.c.h.b16 %v73
  %v569 = vunpack.c.l.b16 %v74
  %v570 = vunpack.c.h.b16 %v74
  %v571 = vunpack.c.l.b16 %v75
  %v572 = vunpack.c.h.b16 %v75
  %v573 = vunpack.c.l.b16 %v76
  %v574 = vunpack.c.h.b16 %v76
  %v575 = vunpack.c.l.b16 %v77
  %v576 = vunpack.c.h.b16 %v77
  %v577 = vunpack.c.l.b16 %v78
  %v578 = vunpack.c.h.b16 %v78
  %v579 = vunpack.c.l.b16 %v79
  %v580 = vunpack.c.h.b16 %v79
  %v581 = vunpack.c.l.b16 %v80
  %v582 = vunpack.c.h.b16 %v80
  %v583 = vunpack.c.l.b16 %v81
  %v584 = vunpack.c.h.b16 %v81
  %v585 = vunpack.c.l.b16 %v82
  %v586 = vunpack.c.h.b16 %v82
  %v587 = vunpack.c.l.b16 %v83
  %v588 = vunpack.c.h.b16 %v83
  %v589 = vunpack.c.l.b16 %v84
  %v590 = vunpack.c.h.b16 %v84
  %v591 = vunpack.c.l.b16 %v85
  %v592 = vunpack.c.h.b16 %v85
  %v593 = vunpack.c.l.b16 %v86
  %v594 = vunpack.c.h.b16 %v86
  %v595 = vunpack.c.l.b16 %v87
  %v596 = vunpack.c.h.b16 %v87
  %v597 = vunpack.c.l.b16 %v88
  %v598 = vunpack.c.h.b16 %v88
  %v599 = vunpack.c.l.b16 %v89
  %v600 = vunpack.c.h.b16 %v89
  %v601 = vunpack.c.l.b16 %v90
  %v602 = vunpack.c.h.b16 %v90
  %v603 = vunpack.c.l.b16 %v91
  %v604 = vunpack.c.h.b16 %v91
  %v605 = vunpack.c.l.b16 %v92
  %v606 = vunpack.c.h.b16 %v92
  %v607 = vunpack.c.l.b16 %v93
  %v608 = vunpack.c.h.b16 %v93
  %v609 = vunpack.c.l.b16 %v94
  %v610 = vunpack.c.h.b16 %v94
  %v611 = vunpack.c.l.b16 %v95
  %v612 = vunpack.c.h.b16 %v95
  %v613 = vunpack.c.l.b16 %v96
  %v614 = vunpack.c.h.b16 %v96
  %v615 = vunpack.c.l.b16 %v97
  %v616 = vunpack.c.h.b16 %v97
  %v617 = vunpack.c.l.b16 %v98
  %v618 = vunpack.c.h.b16 %v98
  %v619 = vunpack.c.l.b16 %v99
  %v620 = vunpack.c.h.b16 %v99
  %v621 = vunpack.c.l.b16 %v100
  %v622 = vunpack.c.h.b16 %v100
  %v623 = vunpack.c.l.b16 %v101
  %v624 = vunpack.c.h.b16 %v101
  %v625 = vunpack.c.l.b16 %v102
  %v626 = vunpack.c.h.b16 %v102
  %v627 = vunpack.c.l.b16 %v103
  %v628 = vunpack.c.h.b16 %v103
  %v629 = vunpack.c.l.b16 %v104
  %v630 = vunpack.c.h.b16 %v104
  %v631 = vunpack.c.l.b16 %v105
  %v632 = vunpack.c.h.b16 %v105
  %v633 = vunpack.c.l.b16 %v106
  %v634 = vunpack.c.h.b16 %v106
  %v635 = vunpack.c.l.b16 %v107
  %v636 = vunpack.c.h.b16 %v107
  %v637 = vunpack.c.l.b16 %v108
  %v638 = vunpack.c.h.b16 %v108
  %v639 = vunpack.c.l.b16 %v109
  %v640 = vunpack.c.h.b16 %v109
  %v641 = vunpack.c.l.b16 %v110
  %v642 = vunpack.c.h.b16 %v110
  %v643 = vunpack.c.l.b16 %v111
  %v644 = vunpack.c.h.b16 %v111
  %v645 = vunpack.c.l.b16 %v112
  %v646 = vunpack.c.h.b16 %v112
  %v647 = vunpack.c.l.b16 %v113
  %v648 = vunpack.c.h.b16 %v113
  %v649 = vunpack.c.l.b16 %v114
  %v650 = vunpack.c.h.b16 %v114
  %v651 = vunpack.c.l.b16 %v115
  %v652 = vunpack.c.h.b16 %v115
  %v653 = vunpack.c.l.b16 %v116
  %v654 = vunpack.c.h.b16 %v116
  %v655 = vunpack.c.l.b16 %v117
  %v656 = vunpack.c.h.b16 %v117
  %v657 = vunpack.c.l.b16 %v118
  %v658 = vunpack.c.h.b16 %v118
  %v659 = vunpack.c.l.b16 %v119
  %v660 = vunpack.c.h.b16 %v119
  %v661 = vunpack.c.l.b16 %v120
  %v662 = vunpack.c.h.b16 %v120
  %v663 = vunpack.c.l.b16 %v121
  %v664 = vunpack.c.h.b16 %v121
  %v665 = vunpack.c.l.b16 %v122
  %v666 = vunpack.c.h.b16 %v122
  %v667 = vunpack.c.l.b16 %v123
  %v668 = vunpack.c.h.b16 %v123
  %v669 = vunpack.c.l.b16 %v124
  %v670 = vunpack.c.h.b16 %v124
  %v671 = vunpack.c.l.b16 %v125
  %v672 = vunpack.c.h.b16 %v125
  %v673 = vunpack.c.l.b16 %v126
  %v674 = vunpack.c.h.b16 %v126
  %v675 = vunpack.c.l.b16 %v127
  %v676 = vunpack.c.h.b16 %v127
  %v677 = vunpack.c.l.b16 %v128
  %v678 = vunpack.c.h.b16 %v128
  %v679 = vunpack.c.l.b16 %v129
  %v680 = vunpack.c.h.b16 %v129
  %v681 = vunpack.c.l.b16 %v130
  %v682 = vunpack.c.h.b16 %v130
  %v683 = vunpack.c.l.b16 %v131
  %v684 = vunpack.c.h.b16 %v131
  %v685 = vunpack.c.l.b16 %v132
  %v686 = vunpack.c.h.b16 %v132
  %v687 = vunpack.c.l.b16 %v133
  %v688 = vunpack.c.h.b16 %v133
  %v689 = vunpack.c.l.b16 %v134
  %v690 = vunpack.c.h.b16 %v134
  %v691 = vunpack.c.l.b16 %v135
  %v692 = vunpack.c.h.b16 %v135
  %v693 = vunpack.c.l.b16 %v136
  %v694 = vunpack.c.h.b16 %v136
  %v695 = vunpack.c.l.b16 %v137
  %v696 = vunpack.c.h.b16 %v137
  %v697 = vunpack.c.l.b16 %v138
  %v698 = vunpack.c.h.b16 %v138
  %v699 = vunpack.c.l.b16 %v139
  %v700 = vunpack.c.h.b16 %v139
  %v701 = vunpack.c.l.b16 %v140
  %v702 = vunpack.c.h.b16 %v140
  %v703 = vunpack.c.l.b16 %v141
  %v704 = vunpack.c.h.b16 %v141
  %v705 = vunpack.c.l.b16 %v142
  %v706 = vunpack.c.h.b16 %v142
  %v707 = vunpack.c.l.b16 %v143
  %v708 = vunpack.c.h.b16 %v143
  %v709 = vunpack.c.l.b16 %v144
  %v710 = vunpack.c.h.b16 %v144
  %v711 = vunpack.c.l.b16 %v145
  %v712 = vunpack.c.h.b16 %v145
  %v713 = vunpack.c.l.b16 %v146
  %v714 = vunpack.c.h.b16 %v146
  %v715 = vunpack.c.l.b16 %v147
  %v716 = vunpack.c.h.b16 %v147
  %v717 = vunpack.c.l.b16 %v148
  %v718 = vunpack.c.h.b16 %v148
  %v719 = vunpack.c.l.b16 %v149
  %v720 = vunpack.c.h.b16 %v149
  %v721 = vunpack.c.l.b16 %v150
  %v722 = vunpack.c.h.b16 %v150
  %v723 = vunpack.c.l.b16 %v151
  %v724 = vunpack.c.h.b16 %v151
  %v725 = vunpack.c.l.b16 %v152
  %v726 = vunpack.c.h.b16 %v152
  %v727 = vunpack.c.l.b16 %v153
  %v728 = vunpack.c.h.b16 %v153
  %v729 = vunpack.c.l.b16 %v154
  %v730 = vunpack.c.h.b16 %v154
  %v731 = vunpack.c.l.b16 %v155
  %v732 = vunpack.c.h.b16 %v155
  %v733 = vunpack.c.l.b16 %v156
  %v734 = vunpack.c.h.b16 %v156
  %v735 = vunpack.c.l.b16 %v157
  %v736 = vunpack.c.h.b16 %v157
  %v737 = vunpack.c.l.b16 %v158
  %v738 = vunpack.c.h.b16 %v158
  %v739 = vunpack.c.l.b16 %v159
  %v740 = vunpack.c.h.b16 %v159
  %v741 = vunpack.c.l.b16 %v160
  %v742 = vunpack.c.h.b16 %v160
  %v743 = vunpack.c.l.b16 %v161
  %v744 = vunpack.c.h.b16 %v161
  %v745 = vunpack.c.l.b16 %v162
  %v746 = vunpack.c.h.b16 %v162
  %v747 = vunpack.c.l.b16 %v163
  %v748 = vunpack.c.h.b16 %v163
  %v749 = vunpack.c.l.b16 %v164
  %v750 = vunpack.c.h.b16 %v164
  %v751 = vunpack.c.l.b16 %v165
  %v752 = vunpack.c.h.b16 %v165
  %v753 = vunpack.c.l.b16 %v166
  %v754 = vunpack.c.h.b16 %v166
  %v755 = vunpack.c.l.b16 %v167
  %v756 = vunpack.c.h.b16 %v167
  %v757 = vunpack.c.l.b16 %v168
  %v758 = vunpack.c.h.b16 %v168
  %v759 = vunpack.c.l.b16 %v169
  %v760 = vunpack.c.h.b16 %v169
  %v761 = vunpack.c.l.b16 %v170
  %v762 = vunpack.c.h.b16 %v170
  %v763 = vunpack.c.l.b16 %v171
  %v764 = vunpack.c.h.b16 %v171
  %v765 = vunpack.c.l.b16 %v172
  %v766 = vunpack.c.h.b16 %v172
  %v767 = vunpack.c.l.b16 %v173
  %v768 = vunpack.c.h.b16 %v173
  %v769 = vunpack.c.l.b16 %v174
  %v770 = vunpack.c.h.b16 %v174
  %v771 = vunpack.c.l.b16 %v175
  %v772 = vunpack.c.h.b16 %v175
  %v773 = vunpack.c.l.b16 %v176
  %v774 = vunpack.c.h.b16 %v176
  %v775 = vunpack.c.l.b16 %v177
  %v776 = vunpack.c.h.b16 %v177
  %v777 = vunpack.c.l.b16 %v178
  %v778 = vunpack.c.h.b16 %v178
  %v779 = vunpack.c.l.b16 %v179
  %v780 = vunpack.c.h.b16 %v179
  %v781 = vunpack.c.l.b16 %v180
  %v782 = vunpack.c.h.b16 %v180
  %v783 = vunpack.c.l.b16 %v181
  %v784 = vunpack.c.h.b16 %v181
  %v785 = vunpack.c.l.b16 %v182
  %v786 = vunpack.c.h.b16 %v182
  %v787 = vunpack.c.l.b16 %v183
  %v788 = vunpack.c.h.b16 %v183
  %v789 = vunpack.c.l.b16 %v184
  %v790 = vunpack.c.h.b16 %v184
  %v791 = vunpack.c.l.b16 %v185
  %v792 = vunpack.c.h.b16 %v185
  %v793 = vunpack.c.l.b16 %v186
  %v794 = vunpack.c.h.b16 %v186
  %v795 = vunpack.c.l.b16 %v187
  %v796 = vunpack.c.h.b16 %v187
  %v797 = vunpack.c.l.b16 %v188
  %v798 = vunpack.c.h.b16 %v188
  %v799 = vunpack.c.l.b16 %v189
  %v800 = vunpack.c.h.b16 %v189
  %v801 = vunpack.c.l.b16 %v190
  %v802 = vunpack.c.h.b16 %v190
  %v803 = vunpack.c.l.b16 %v191
  %v804 = vunpack.c.h.b16 %v191
  %v805 = vunpack.c.l.b16 %v192
  %v806 = vunpack.c.h.b16 %v192
  %v807 = vunpack.c.l.b16 %v193
  %v808 = vunpack.c.h.b16 %v193
  %v809 = vunpack.c.l.b16 %v194
  %v810 = vunpack.c.h.b16 %v194
  %v811 = vunpack.c.l.b16 %v195
  %v812 = vunpack.c.h.b16 %v195
  %v813 = vunpack.c.l.b16 %v196
  %v814 = vunpack.c.h.b16 %v196
  %v815 = vunpack.c.l.b16 %v197
  %v816 = vunpack.c.h.b16 %v197
  %v817 = vunpack.c.l.b16 %v198
  %v818 = vunpack.c.h.b16 %v198
  %v819 = vunpack.c.l.b16 %v199
  %v820 = vunpack.c.h.b16 %v199
  %v821 = vunpack.c.l.b16 %v200
  %v822 = vunpack.c.h.b16 %v200
  %v823 = vunpack.c.l.b16 %v201
  %v824 = vunpack.c.h.b16 %v201
  %v825 = vunpack.c.l.b16 %v202
  %v826 = vunpack.c.h.b16 %v202
  %v827 = vunpack.c.l.b16 %v203
  %v828 = vunpack.c.h.b16 %v203
  %v829 = vunpack.c.l.b16 %v204
  %v830 = vunpack.c.h.b16 %v204
  %v831 = vunpack.c.l.b16 %v205
  %v832 = vunpack.c.h.b16 %v205
  %v833 = vunpack.c.l.b16 %v206
  %v834 = vunpack.c.h.b16 %v206
  %v835 = vunpack.c.l.b16 %v207
  %v836 = vunpack.c.h.b16 %v207
  %v837 = vunpack.c.l.b16 %v208
  %v838 = vunpack.c.h.b16 %v208
  %v839 = vunpack.c.l.b16 %v209
  %v840 = vunpack.c.h.b16 %v209
  %v841 = vunpack.c.l.b16 %v210
  %v842 = vunpack.c.h.b16 %v210
  %v843 = vunpack.c.l.b16 %v211
  %v844 = vunpack.c.h.b16 %v211
  %v845 = vunpack.c.l.b16 %v212
  %v846 = vunpack.c.h.b16 %v212
  %v847 = vunpack.c.l.b16 %v213
  %v848 = vunpack.c.h.b16 %v213
  %v849 = vunpack.c.l.b16 %v214
  %v850 = vunpack.c.h.b16 %v214
  %v851 = vunpack.c.l.b16 %v215
  %v852 = vunpack.c.h.b16 %v215
  %v853 = vunpack.c.l.b16 %v216
  %v854 = vunpack.c.h.b16 %v216
  %v855 = vunpack.c.l.b16 %v217
  %v856 = vunpack.c.h.b16 %v217
  %v857 = vunpack.c.l.b16 %v218
  %v858 = vunpack.c.h.b16 %v218
  %v859 = vunpack.c.l.b16 %v219
  %v860 = vunpack.c.h.b16 %v219
  %v861 = vunpack.c.l.b16 %v220
  %v862 = vunpack.c.h.b16 %v220
  %v863 = vunpack.c.l.b16 %v221
  %v864 = vunpack.c.h.b16 %v221
  %v865 = vunpack.c.l.b16 %v222
  %v866 = vunpack.c.h.b16 %v222
  %v867 = vunpack.c.l.b16 %v223
  %v868 = vunpack.c.h.b16 %v223
  %v869 = vunpack.c.l.b16 %v224
  %v870 = vunpack.c.h.b16 %v224
  %v871 = vpack.c.b16 %v475, %v471
  %v872 = vpack.c.b16 %v476, %v472
  %v873 = vpack.c.b16 %v477, %v473
  %v874 = vpack.c.b16 %v478, %v474
  %v875 = vpack.c.b16 %v483, %v479
  %v876 = vpack.c.b16 %v484, %v480
  %v877 = vpack.c.b16 %v485, %v481
  %v878 = vpack.c.b16 %v486, %v482
  %v879 = vpack.c.b16 %v491, %v487
  %v880 = vpack.c.b16 %v492, %v488
  %v881 = vpack.c.b16 %v493, %v489
  %v882 = vpack.c.b16 %v494, %v490
  %v883 = vpack.c.b16 %v499, %v495
  %v884 = vpack.c.b16 %v500, %v496
  %v885 = vpack.c.b16 %v501, %v497
  %v886 = vpack.c.b16 %v502, %v498
  %v887 = vpack.c.b16 %v507, %v503
  %v888 = vpack.c.b16 %v508, %v504
  %v889 = vpack.c.b16 %v509, %v505
  %v890 = vpack.c.b16 %v510, %v506
  %v891 = vpack.c.b16 %v515, %v511
  %v892 = vpack.c.b16 %v516, %v512
  %v893 = vpack.c.b16 %v517, %v513
  %v894 = vpack.c.b16 %v518, %v514
  %v895 = vpack.c.b16 %v523, %v519
  %v896 = vpack.c.b16 %v524, %v520
  %v897 = vpack.c.b16 %v525, %v521
  %v898 = vpack.c.b16 %v526, %v522
  %v899 = vpack.c.b16 %v531, %v527
  %v900 = vpack.c.b16 %v532, %v528
  %v901 = vpack.c.b16 %v533, %v529
  %v902 = vpack.c.b16 %v534, %v530
  %v903 = vpack.c.b16 %v539, %v535
  %v904 = vpack.c.b16 %v540, %v536
  %v905 = vpack.c.b16 %v541, %v537
  %v906 = vpack.c.b16 %v542, %v538
  %v907 = vpack.c.b16 %v547, %v543
  %v908 = vpack.c.b16 %v548, %v544
  %v909 = vpack.c.b16 %v549, %v545
  %v910 = vpack.c.b16 %v550, %v546
  %v911 = vpack.c.b16 %v555, %v551
  %v912 = vpack.c.b16 %v556, %v552
  %v913 = vpack.c.b16 %v557, %v553
  %v914 = vpack.c.b16 %v558, %v554
  %v915 = vpack.c.b16 %v563, %v559
  %v916 = vpack.c.b16 %v564, %v560
  %v917 = vpack.c.b16 %v565, %v561
  %v918 = vpack.c.b16 %v566, %v562
  %v919 = vpack.c.b16 %v571, %v567
  %v920 = vpack.c.b16 %v572, %v568
  %v921 = vpack.c.b16 %v573, %v569
  %v922 = vpack.c.b16 %v574, %v570
  %v923 = vpack.c.b16 %v579, %v575
  %v924 = vpack.c.b16 %v580, %v576
  %v925 = vpack.c.b16 %v581, %v577
  %v926 = vpack.c.b16 %v582, %v578
  %v927 = vpack.c.b16 %v587, %v583
  %v928 = vpack.c.b16 %v588, %v584
  %v929 = vpack.c.b16 %v589, %v585
  %v930 = vpack.c.b16 %v590, %v586
  %v931 = vpack.c.b16 %v595, %v591
  %v932 = vpack.c.b16 %v596, %v592
  %v933 = vpack.c.b16 %v597, %v593
  %v934 = vpack.c.b16 %v598, %v594
  %v935 = vpack.c.b16 %v603, %v599
  %v936 = vpack.c.b16 %v604, %v600
  %v937 = vpack.c.b16 %v605, %v601
  %v938 = vpack.c.b16 %v606, %v602
  %v939 = vpack.c.b16 %v611, %v607
  %v940 = vpack.c.b16 %v612, %v608
  %v941 = vpack.c.b16 %v613, %v609
  %v942 = vpack.c.b16 %v614, %v610
  %v943 = vpack.c.b16 %v619, %v615
  %v944 = vpack.c.b16 %v620, %v616
  %v945 = vpack.c.b16 %v621, %v617
  %v946 = vpack.c.b16 %v622, %v618
  %v947 = vpack.c.b16 %v627, %v623
  %v948 = vpack.c.b16 %v628, %v624
  %v949 = vpack.c.b16 %v629, %v625
  %v950 = vpack.c.b16 %v630, %v626
  %v951 = vpack.c.b16 %v635, %v631
  %v952 = vpack.c.b16 %v636, %v632
  %v953 = vpack.c.b16 %v637, %v633
  %v954 = vpack.c.b16 %v638, %v634
  %v955 = vpack.c.b16 %v643, %v639
  %v956 = vpack.c.b16 %v644, %v640
  %v957 = vpack.c.b16 %v645, %v641
  %v958 = vpack.c.b16 %v646, %v642
  %v959 = vpack.c.b16 %v651, %v647
  %v960 = vpack.c.b16 %v652, %v648
  %v961 = vpack.c.b16 %v653, %v649
  %v962 = vpack.c.b16 %v654, %v650
  %v963 = vpack.c.b16 %v659, %v655
  %v964 = vpack.c.b16 %v660, %v656
  %v965 = vpack.c.b16 %v661, %v657
  %v966 = vpack.c.b16 %v662, %v658
  %v967 = vpack.c.b16 %v667, %v663
  %v968 = vpack.c.b16 %v668, %v664
  %v969 = vpack.c.b16 %v669, %v665
  %v970 = vpack.c.b16 %v670, %v666
  %v971 = vpack.c.b16 %v675, %v671
  %v972 = vpack.c.b16 %v676, %v672
  %v973 = vpack.c.b16 %v677, %v673
  %v974 = vpack.c.b16 %v678, %v674
  %v975 = vpack.c.b16 %v683, %v679
  %v976 = vpack.c.b16 %v684, %v680
  %v977 = vpack.c.b16 %v685, %v681
  %v978 = vpack.c.b16 %v686, %v682
  %v979 = vpack.c.b16 %v691, %v687
  %v980 = vpack.c.b16 %v692, %v688
  %v981 = vpack.c.b16 %v693, %v689
  %v982 = vpack.c.b16 %v694, %v690
  %v983 = vpack.c.b16 %v699, %v695
  %v984 = vpack.c.b16 %v700, %v696
  %v985 = vpack.c.b16 %v701, %v697
  %v986 = vpack.c.b16 %v702, %v698
  %v987 = vpack.c.b16 %v707, %v703
  %v988 = vpack.c.b16 %v708, %v704
  %v989 = vpack.c.b16 %v709, %v705
  %v990 = vpack.c.b16 %v710, %v706
  %v991 = vpack.c.b16 %v715, %v711
  %v992 = vpack.c.b16 %v716, %v712
  %v993 = vpack.c.b16 %v717, %v713
  %v994 = vpack.c.b16 %v718, %v714
  %v995 = vpack.c.b16 %v723, %v719
  %v996 = vpack.c.b16 %v724, %v720
  %v997 = vpack.c.b16 %v725, %v721
  %v998 = vpack.c.b16 %v726, %v722
  %v999 = vpack.c.b16 %v731, %v727
  %v1000 = vpack.c.b16 %v732, %v728
  %v1001 = vpack.c.b16 %v733, %v729
  %v1002 = vpack.c.b16 %v734, %v730
  %v1003 = vpack.c.b16 %v739, %v735
  %v1004 = vpack.c.b16 %v740, %v736
  %v1005 = vpack.c.b16 %v741, %v737
  %v1006 = vpack.c.b16 %v742, %v738
  %v1007 = vpack.c.b16 %v747, %v743
  %v1008 = vpack.c.b16 %v748, %v744
  %v1009 = vpack.c.b16 %v749, %v745
  %v1010 = vpack.c.b16 %v750, %v746
  %v1011 = vpack.c.b16 %v755, %v751
  %v1012 = vpack.c.b16 %v756, %v752
  %v1013 = vpack.c.b16 %v757, %v753
  %v1014 = vpack.c.b16 %v758, %v754
  %v1015 = vpack.c.b16 %v763, %v759
  %v1016 = vpack.c.b16 %v764, %v760
  %v1017 = vpack.c.b16 %v765, %v761
  %v1018 = vpack.c.b16 %v766, %v762
  %v1019 = vpack.c.b16 %v771, %v767
  %v1020 = vpack.c.b16 %v772, %v768
  %v1021 = vpack.c.b16 %v773, %v769
  %v1022 = vpack.c.b16 %v774, %v770
  %v1023 = vpack.c.b16 %v779, %v775
  %v1024 = vpack.c.b16 %v780, %v776
  %v1025 = vpack.c.b16 %v781, %v777
  %v1026 = vpack.c.b16 %v782, %v778
  %v1027 = vpack.c.b16 %v787, %v783
  %v1028 = vpack.c.b16 %v788, %v784
  %v1029 = vpack.c.b16 %v789, %v785
  %v1030 = vpack.c.b16 %v790, %v786
  %v1031 = vpack.c.b16 %v795, %v791
  %v1032 = vpack.c.b16 %v796, %v792
  %v1033 = vpack.c.b16 %v797, %v793
  %v1034 = vpack.c.b16 %v798, %v794
  %v1035 = vpack.c.b16 %v803, %v799
  %v1036 = vpack.c.b16 %v804, %v800
  %v1037 = vpack.c.b16 %v805, %v801
  %v1038 = vpack.c.b16 %v806, %v802
  %v1039 = vpack.c.b16 %v811, %v807
  %v1040 = vpack.c.b16 %v812, %v808
  %v1041 = vpack.c.b16 %v813, %v809
  %v1042 = vpack.c.b16 %v814, %v810
  %v1043 = vpack.c.b16 %v819, %v815
  %v1044 = vpack.c.b16 %v820, %v816
  %v1045 = vpack.c.b16 %v821, %v817
  %v1046 = vpack.c.b16 %v822, %v818
  %v1047 = vpack.c.b16 %v827, %v823
  %v1048 = vpack.c.b16 %v828, %v824
  %v1049 = vpack.c.b16 %v829, %v825
  %v1050 = vpack.c.b16 %v830, %v826
  %v1051 = vpack.c.b16 %v835, %v831
  %v1052 = vpack.c.b16 %v836, %v832
  %v1053 = vpack.c.b16 %v837, %v833
  %v1054 = vpack.c.b16 %v838, %v834
  %v1055 = vpack.c.b16 %v843, %v839
  %v1056 = vpack.c.b16 %v844, %v840
  %v1057 = vpack.c.b16 %v845, %v841
  %v1058 = vpack.c.b16 %v846, %v842
  %v1059 = vpack.c.b16 %v851, %v847
  %v1060 = vpack.c.b16 %v852, %v848
  %v1061 = vpack.c.b16 %v853, %v849
  %v1062 = vpack.c.b16 %v854, %v850
  %v1063 = vpack.c.b16 %v859, %v855
  %v1064 = vpack.c.b16 %v860, %v856
  %v1065 = vpack.c.b16 %v861, %v857
  %v1066 = vpack.c.b16 %v862, %v858
  %v1067 = vpack.c.b16 %v867, %v863
  %v1068 = vpack.c.b16 %v868, %v864
  %v1069 = vpack.c.b16 %v869, %v865
  %v1070 = vpack.c.b16 %v870, %v866
  %vm1271 = vcmask 261120
  %v1273 = vsel %vm1271, %v264, 0
  %1275 = vmatprep.subr.bf16.mxu0 %v872
  %1276 = vmatpush1.bf16.msra.mxu0 %v871
  %1277 = vmatprep.subr.bf16.mxu0 %v876
  %1278 = vmatpush1.bf16.msra.mxu0 %v875
  %1279 = vmatprep.subr.bf16.mxu0 %v880
  %1280 = vmatpush1.bf16.msra.mxu0 %v879
  %1281 = vmatprep.subr.bf16.mxu0 %v884
  %1282 = vmatpush1.bf16.msra.mxu0 %v883
  %1283 = vmatprep.subr.bf16.mxu0 %v888
  %1284 = vmatpush1.bf16.msra.mxu0 %v887
  %1285 = vmatprep.subr.bf16.mxu0 %v892
  %1286 = vmatpush1.bf16.msra.mxu0 %v891
  %1287 = vmatprep.subr.bf16.mxu0 %v896
  %1288 = vmatpush1.bf16.msra.mxu0 %v895
  %1289 = vmatprep.subr.bf16.mxu0 %v900
  %1290 = vmatpush1.bf16.msra.mxu0 %v899
  %1291 = vmatprep.subr.bf16.mxu0 %v904
  %1292 = vmatpush1.bf16.msra.mxu0 %v903
  %1293 = vmatprep.subr.bf16.mxu0 %v908
  %1294 = vmatpush1.bf16.msra.mxu0 %v907
  %1295 = vmatprep.subr.bf16.mxu0 %v912
  %1296 = vmatpush1.bf16.msra.mxu0 %v911
  %1297 = vmatprep.subr.bf16.mxu0 %v916
  %1298 = vmatpush1.bf16.msra.mxu0 %v915
  %1299 = vmatprep.subr.bf16.mxu0 %v920
  %1300 = vmatpush1.bf16.msra.mxu0 %v919
  %1301 = vmatprep.subr.bf16.mxu0 %v924
  %1302 = vmatpush1.bf16.msra.mxu0 %v923
  %1303 = vmatprep.subr.bf16.mxu0 %v928
  %1304 = vmatpush1.bf16.msra.mxu0 %v927
  %1305 = vmatprep.subr.bf16.mxu0 %v932
  %1306 = vmatpush1.bf16.msra.mxu0 %v931
  %1307 = vmatprep.mubr.bf16.mxu0 %v259
  %1308 = vmatmul.mubr.bf16.gmra.mrb[0].mxu0 %v258
  %v1309 = vpop.f32.mrb[0].mxu0
  %v1310 = vadd.f32 %v230, %v1309
  %v1311 = vpop.f32.mrb[0].mxu0
  %v1312 = vadd.f32 %v234, %v1311
  %v1313 = vpop.f32.mrb[0].mxu0
  %v1314 = vpop.f32.mrb[0].mxu0
  %1315 = vdwg.mxu0
  %1316 = vmatprep.subr.bf16.mxu0 %v936
  %1317 = vmatpush1.bf16.msra.mxu0 %v935
  %1318 = vmatprep.subr.bf16.mxu0 %v940
  %1319 = vmatpush1.bf16.msra.mxu0 %v939
  %1320 = vmatprep.subr.bf16.mxu0 %v944
  %1321 = vmatpush1.bf16.msra.mxu0 %v943
  %1322 = vmatprep.subr.bf16.mxu0 %v948
  %1323 = vmatpush1.bf16.msra.mxu0 %v947
  %1324 = vmatprep.subr.bf16.mxu0 %v952
  %1325 = vmatpush1.bf16.msra.mxu0 %v951
  %1326 = vmatprep.subr.bf16.mxu0 %v956
  %1327 = vmatpush1.bf16.msra.mxu0 %v955
  %1328 = vmatprep.subr.bf16.mxu0 %v960
  %1329 = vmatpush1.bf16.msra.mxu0 %v959
  %1330 = vmatprep.subr.bf16.mxu0 %v964
  %1331 = vmatpush1.bf16.msra.mxu0 %v963
  %1332 = vmatprep.subr.bf16.mxu0 %v968
  %1333 = vmatpush1.bf16.msra.mxu0 %v967
  %1334 = vmatprep.subr.bf16.mxu0 %v972
  %1335 = vmatpush1.bf16.msra.mxu0 %v971
  %1336 = vmatprep.subr.bf16.mxu0 %v976
  %1337 = vmatpush1.bf16.msra.mxu0 %v975
  %1338 = vmatprep.subr.bf16.mxu0 %v980
  %1339 = vmatpush1.bf16.msra.mxu0 %v979
  %1340 = vmatprep.subr.bf16.mxu0 %v984
  %1341 = vmatpush1.bf16.msra.mxu0 %v983
  %1342 = vmatprep.subr.bf16.mxu0 %v988
  %1343 = vmatpush1.bf16.msra.mxu0 %v987
  %1344 = vmatprep.subr.bf16.mxu0 %v992
  %1345 = vmatpush1.bf16.msra.mxu0 %v991
  %1346 = vmatprep.subr.bf16.mxu0 %v996
  %1347 = vmatpush1.bf16.msra.mxu0 %v995
  %1348 = vmatprep.mubr.bf16.mxu0 %v261
  %1349 = vmatmul.mubr.bf16.gmra.mrb[0].mxu0 %v260
  %v1350 = vpop.f32.mrb[0].mxu0
  %v1351 = vadd.f32 %v1310, %v1350
  %v1352 = vpop.f32.mrb[0].mxu0
  %v1353 = vadd.f32 %v1312, %v1352
  %v1354 = vpop.f32.mrb[0].mxu0
  %v1355 = vpop.f32.mrb[0].mxu0
  %1356 = vdwg.mxu0
  %1357 = vmatprep.subr.bf16.mxu0 %v1000
  %1358 = vmatpush1.bf16.msra.mxu0 %v999
  %1359 = vmatprep.subr.bf16.mxu0 %v1004
  %1360 = vmatpush1.bf16.msra.mxu0 %v1003
  %1361 = vmatprep.subr.bf16.mxu0 %v1008
  %1362 = vmatpush1.bf16.msra.mxu0 %v1007
  %1363 = vmatprep.subr.bf16.mxu0 %v1012
  %1364 = vmatpush1.bf16.msra.mxu0 %v1011
  %1365 = vmatprep.subr.bf16.mxu0 %v1016
  %1366 = vmatpush1.bf16.msra.mxu0 %v1015
  %1367 = vmatprep.subr.bf16.mxu0 %v1020
  %1368 = vmatpush1.bf16.msra.mxu0 %v1019
  %1369 = vmatprep.subr.bf16.mxu0 %v1024
  %1370 = vmatpush1.bf16.msra.mxu0 %v1023
  %1371 = vmatprep.subr.bf16.mxu0 %v1028
  %1372 = vmatpush1.bf16.msra.mxu0 %v1027
  %1373 = vmatprep.subr.bf16.mxu0 %v1032
  %1374 = vmatpush1.bf16.msra.mxu0 %v1031
  %1375 = vmatprep.subr.bf16.mxu0 %v1036
  %1376 = vmatpush1.bf16.msra.mxu0 %v1035
  %1377 = vmatprep.subr.bf16.mxu0 %v1040
  %1378 = vmatpush1.bf16.msra.mxu0 %v1039
  %1379 = vmatprep.subr.bf16.mxu0 %v1044
  %1380 = vmatpush1.bf16.msra.mxu0 %v1043
  %1381 = vmatprep.subr.bf16.mxu0 %v1048
  %1382 = vmatpush1.bf16.msra.mxu0 %v1047
  %1383 = vmatprep.subr.bf16.mxu0 %v1052
  %1384 = vmatpush1.bf16.msra.mxu0 %v1051
  %1385 = vmatprep.subr.bf16.mxu0 %v1056
  %1386 = vmatpush1.bf16.msra.mxu0 %v1055
  %1387 = vmatprep.subr.bf16.mxu0 %v1060
  %1388 = vmatpush1.bf16.msra.mxu0 %v1059
  %1389 = vmatprep.mubr.bf16.mxu0 %v263
  %1390 = vmatmul.mubr.bf16.gmra.mrb[0].mxu0 %v262
  %v1391 = vpop.f32.mrb[0].mxu0
  %v1392 = vadd.f32 %v1351, %v1391
  %v1393 = vpop.f32.mrb[0].mxu0
  %v1394 = vadd.f32 %v1353, %v1393
  %v1395 = vpop.f32.mrb[0].mxu0
  %v1396 = vpop.f32.mrb[0].mxu0
  %1397 = vdwg.mxu0
  %1398 = vmatprep.subr.bf16.mxu0 %v1064
  %1399 = vmatpush1.bf16.msra.mxu0 %v1063
  %1400 = vmatprep.subr.bf16.mxu0 %v1068
  %1401 = vmatpush1.bf16.msra.mxu0 %v1067
  %1402 = vmatprep.subr.bf16.mxu0 0
  %1403 = vmatpush1.bf16.msra.mxu0 0
  %1404 = vmatprep.subr.bf16.mxu0 0
  %1405 = vmatpush1.bf16.msra.mxu0 0
  %1406 = vmatprep.subr.bf16.mxu0 0
  %1407 = vmatpush1.bf16.msra.mxu0 0
  %1408 = vmatprep.subr.bf16.mxu0 0
  %1409 = vmatpush1.bf16.msra.mxu0 0
  %1410 = vmatprep.subr.bf16.mxu0 0
  %1411 = vmatpush1.bf16.msra.mxu0 0
  %1412 = vmatprep.subr.bf16.mxu0 0
  %1413 = vmatpush1.bf16.msra.mxu0 0
  %1414 = vmatprep.subr.bf16.mxu0 0
  %1415 = vmatpush1.bf16.msra.mxu0 0
  %1416 = vmatprep.subr.bf16.mxu0 0
  %1417 = vmatpush1.bf16.msra.mxu0 0
  %1418 = vmatprep.subr.bf16.mxu0 0
  %1419 = vmatpush1.bf16.msra.mxu0 0
  %1420 = vmatprep.subr.bf16.mxu0 0
  %1421 = vmatpush1.bf16.msra.mxu0 0
  %1422 = vmatprep.subr.bf16.mxu0 0
  %1423 = vmatpush1.bf16.msra.mxu0 0
  %1424 = vmatprep.subr.bf16.mxu0 0
  %1425 = vmatpush1.bf16.msra.mxu0 0
  %1426 = vmatprep.subr.bf16.mxu0 0
  %1427 = vmatpush1.bf16.msra.mxu0 0
  %1428 = vmatprep.subr.bf16.mxu0 0
  %1429 = vmatpush1.bf16.msra.mxu0 0
  %1430 = vmatprep.mubr.bf16.mxu0 0
  %1431 = vmatmul.mubr.bf16.gmra.mrb[0].mxu0 %v1273
  %v1432 = vpop.f32.mrb[0].mxu0
  %v1433 = vadd.f32 %v1392, %v1432
  %v1434 = vpop.f32.mrb[0].mxu0
  %v1435 = vadd.f32 %v1394, %v1434
  %v1436 = vpop.f32.mrb[0].mxu0
  %v1437 = vpop.f32.mrb[0].mxu0
  %1438 = vdwg.mxu0
  %1439 = vmatprep.subr.bf16.mxu0 %v874
  %1440 = vmatpush1.bf16.msra.mxu0 %v873
  %1441 = vmatprep.subr.bf16.mxu0 %v878
  %1442 = vmatpush1.bf16.msra.mxu0 %v877
  %1443 = vmatprep.subr.bf16.mxu0 %v882
  %1444 = vmatpush1.bf16.msra.mxu0 %v881
  %1445 = vmatprep.subr.bf16.mxu0 %v886
  %1446 = vmatpush1.bf16.msra.mxu0 %v885
  %1447 = vmatprep.subr.bf16.mxu0 %v890
  %1448 = vmatpush1.bf16.msra.mxu0 %v889
  %1449 = vmatprep.subr.bf16.mxu0 %v894
  %1450 = vmatpush1.bf16.msra.mxu0 %v893
  %1451 = vmatprep.subr.bf16.mxu0 %v898
  %1452 = vmatpush1.bf16.msra.mxu0 %v897
  %1453 = vmatprep.subr.bf16.mxu0 %v902
  %1454 = vmatpush1.bf16.msra.mxu0 %v901
  %1455 = vmatprep.subr.bf16.mxu0 %v906
  %1456 = vmatpush1.bf16.msra.mxu0 %v905
  %1457 = vmatprep.subr.bf16.mxu0 %v910
  %1458 = vmatpush1.bf16.msra.mxu0 %v909
  %1459 = vmatprep.subr.bf16.mxu0 %v914
  %1460 = vmatpush1.bf16.msra.mxu0 %v913
  %1461 = vmatprep.subr.bf16.mxu0 %v918
  %1462 = vmatpush1.bf16.msra.mxu0 %v917
  %1463 = vmatprep.subr.bf16.mxu0 %v922
  %1464 = vmatpush1.bf16.msra.mxu0 %v921
  %1465 = vmatprep.subr.bf16.mxu0 %v926
  %1466 = vmatpush1.bf16.msra.mxu0 %v925
  %1467 = vmatprep.subr.bf16.mxu0 %v930
  %1468 = vmatpush1.bf16.msra.mxu0 %v929
  %1469 = vmatprep.subr.bf16.mxu0 %v934
  %1470 = vmatpush1.bf16.msra.mxu0 %v933
  %1471 = vmatprep.mubr.bf16.mxu0 %v259
  %1472 = vmatmul.mubr.bf16.gmra.mrb[0].mxu0 %v258
  %v1473 = vpop.f32.mrb[0].mxu0
  %v1474 = vadd.f32 %v238, %v1473
  %v1475 = vpop.f32.mrb[0].mxu0
  %v1476 = vadd.f32 %v242, %v1475
  %v1477 = vpop.f32.mrb[0].mxu0
  %v1478 = vpop.f32.mrb[0].mxu0
  %1479 = vdwg.mxu0
  %1480 = vmatprep.subr.bf16.mxu0 %v938
  %1481 = vmatpush1.bf16.msra.mxu0 %v937
  %1482 = vmatprep.subr.bf16.mxu0 %v942
  %1483 = vmatpush1.bf16.msra.mxu0 %v941
  %1484 = vmatprep.subr.bf16.mxu0 %v946
  %1485 = vmatpush1.bf16.msra.mxu0 %v945
  %1486 = vmatprep.subr.bf16.mxu0 %v950
  %1487 = vmatpush1.bf16.msra.mxu0 %v949
  %1488 = vmatprep.subr.bf16.mxu0 %v954
  %1489 = vmatpush1.bf16.msra.mxu0 %v953
  %1490 = vmatprep.subr.bf16.mxu0 %v958
  %1491 = vmatpush1.bf16.msra.mxu0 %v957
  %1492 = vmatprep.subr.bf16.mxu0 %v962
  %1493 = vmatpush1.bf16.msra.mxu0 %v961
  %1494 = vmatprep.subr.bf16.mxu0 %v966
  %1495 = vmatpush1.bf16.msra.mxu0 %v965
  %1496 = vmatprep.subr.bf16.mxu0 %v970
  %1497 = vmatpush1.bf16.msra.mxu0 %v969
  %1498 = vmatprep.subr.bf16.mxu0 %v974
  %1499 = vmatpush1.bf16.msra.mxu0 %v973
  %1500 = vmatprep.subr.bf16.mxu0 %v978
  %1501 = vmatpush1.bf16.msra.mxu0 %v977
  %1502 = vmatprep.subr.bf16.mxu0 %v982
  %1503 = vmatpush1.bf16.msra.mxu0 %v981
  %1504 = vmatprep.subr.bf16.mxu0 %v986
  %1505 = vmatpush1.bf16.msra.mxu0 %v985
  %1506 = vmatprep.subr.bf16.mxu0 %v990
  %1507 = vmatpush1.bf16.msra.mxu0 %v989
  %1508 = vmatprep.subr.bf16.mxu0 %v994
  %1509 = vmatpush1.bf16.msra.mxu0 %v993
  %1510 = vmatprep.subr.bf16.mxu0 %v998
  %1511 = vmatpush1.bf16.msra.mxu0 %v997
  %1512 = vmatprep.mubr.bf16.mxu0 %v261
  %1513 = vmatmul.mubr.bf16.gmra.mrb[0].mxu0 %v260
  %v1514 = vpop.f32.mrb[0].mxu0
  %v1515 = vadd.f32 %v1474, %v1514
  %v1516 = vpop.f32.mrb[0].mxu0
  %v1517 = vadd.f32 %v1476, %v1516
  %v1518 = vpop.f32.mrb[0].mxu0
  %v1519 = vpop.f32.mrb[0].mxu0
  %1520 = vdwg.mxu0
  %1521 = vmatprep.subr.bf16.mxu0 %v1002
  %1522 = vmatpush1.bf16.msra.mxu0 %v1001
  %1523 = vmatprep.subr.bf16.mxu0 %v1006
  %1524 = vmatpush1.bf16.msra.mxu0 %v1005
  %1525 = vmatprep.subr.bf16.mxu0 %v1010
  %1526 = vmatpush1.bf16.msra.mxu0 %v1009
  %1527 = vmatprep.subr.bf16.mxu0 %v1014
  %1528 = vmatpush1.bf16.msra.mxu0 %v1013
  %1529 = vmatprep.subr.bf16.mxu0 %v1018
  %1530 = vmatpush1.bf16.msra.mxu0 %v1017
  %1531 = vmatprep.subr.bf16.mxu0 %v1022
  %1532 = vmatpush1.bf16.msra.mxu0 %v1021
  %1533 = vmatprep.subr.bf16.mxu0 %v1026
  %1534 = vmatpush1.bf16.msra.mxu0 %v1025
  %1535 = vmatprep.subr.bf16.mxu0 %v1030
  %1536 = vmatpush1.bf16.msra.mxu0 %v1029
  %1537 = vmatprep.subr.bf16.mxu0 %v1034
  %1538 = vmatpush1.bf16.msra.mxu0 %v1033
  %1539 = vmatprep.subr.bf16.mxu0 %v1038
  %1540 = vmatpush1.bf16.msra.mxu0 %v1037
  %1541 = vmatprep.subr.bf16.mxu0 %v1042
  %1542 = vmatpush1.bf16.msra.mxu0 %v1041
  %1543 = vmatprep.subr.bf16.mxu0 %v1046
  %1544 = vmatpush1.bf16.msra.mxu0 %v1045
  %1545 = vmatprep.subr.bf16.mxu0 %v1050
  %1546 = vmatpush1.bf16.msra.mxu0 %v1049
  %1547 = vmatprep.subr.bf16.mxu0 %v1054
  %1548 = vmatpush1.bf16.msra.mxu0 %v1053
  %1549 = vmatprep.subr.bf16.mxu0 %v1058
  %1550 = vmatpush1.bf16.msra.mxu0 %v1057
  %1551 = vmatprep.subr.bf16.mxu0 %v1062
  %1552 = vmatpush1.bf16.msra.mxu0 %v1061
  %1553 = vmatprep.mubr.bf16.mxu0 %v263
  %1554 = vmatmul.mubr.bf16.gmra.mrb[0].mxu0 %v262
  %v1555 = vpop.f32.mrb[0].mxu0
  %v1556 = vadd.f32 %v1515, %v1555
  %v1557 = vpop.f32.mrb[0].mxu0
  %v1558 = vadd.f32 %v1517, %v1557
  %v1559 = vpop.f32.mrb[0].mxu0
  %v1560 = vpop.f32.mrb[0].mxu0
  %1561 = vdwg.mxu0
  %1562 = vmatprep.subr.bf16.mxu0 %v1066
  %1563 = vmatpush1.bf16.msra.mxu0 %v1065
  %1564 = vmatprep.subr.bf16.mxu0 %v1070
  %1565 = vmatpush1.bf16.msra.mxu0 %v1069
  %1566 = vmatprep.subr.bf16.mxu0 0
  %1567 = vmatpush1.bf16.msra.mxu0 0
  %1568 = vmatprep.subr.bf16.mxu0 0
  %1569 = vmatpush1.bf16.msra.mxu0 0
  %1570 = vmatprep.subr.bf16.mxu0 0
  %1571 = vmatpush1.bf16.msra.mxu0 0
  %1572 = vmatprep.subr.bf16.mxu0 0
  %1573 = vmatpush1.bf16.msra.mxu0 0
  %1574 = vmatprep.subr.bf16.mxu0 0
  %1575 = vmatpush1.bf16.msra.mxu0 0
  %1576 = vmatprep.subr.bf16.mxu0 0
  %1577 = vmatpush1.bf16.msra.mxu0 0
  %1578 = vmatprep.subr.bf16.mxu0 0
  %1579 = vmatpush1.bf16.msra.mxu0 0
  %1580 = vmatprep.subr.bf16.mxu0 0
  %1581 = vmatpush1.bf16.msra.mxu0 0
  %1582 = vmatprep.subr.bf16.mxu0 0
  %1583 = vmatpush1.bf16.msra.mxu0 0
  %1584 = vmatprep.subr.bf16.mxu0 0
  %1585 = vmatpush1.bf16.msra.mxu0 0
  %1586 = vmatprep.subr.bf16.mxu0 0
  %1587 = vmatpush1.bf16.msra.mxu0 0
  %1588 = vmatprep.subr.bf16.mxu0 0
  %1589 = vmatpush1.bf16.msra.mxu0 0
  %1590 = vmatprep.subr.bf16.mxu0 0
  %1591 = vmatpush1.bf16.msra.mxu0 0
  %1592 = vmatprep.subr.bf16.mxu0 0
  %1593 = vmatpush1.bf16.msra.mxu0 0
  %1594 = vmatprep.mubr.bf16.mxu0 0
  %1595 = vmatmul.mubr.bf16.gmra.mrb[0].mxu0 %v1273
  %v1596 = vpop.f32.mrb[0].mxu0
  %v1597 = vadd.f32 %v1556, %v1596
  %v1598 = vpop.f32.mrb[0].mxu0
  %v1599 = vadd.f32 %v1558, %v1598
  %v1600 = vpop.f32.mrb[0].mxu0
  %v1601 = vpop.f32.mrb[0].mxu0
  %1602 = vdwg.mxu0
  %v1603 = vmax.f32 %v1433, 0.0
  %v1604 = vmax.f32 %v1435, 0.0
  %v1605 = vmax.f32 %v1597, 0.0
  %v1606 = vmax.f32 %v1599, 0.0
  %v1607 = vpack.c.bf16 %v1603, %v1603
  %v1608 = vpack.c.bf16 %v1604, %v1604
  %v1609 = vpack.c.bf16 %v1605, %v1605
  %v1610 = vpack.c.bf16 %v1606, %v1606
  %v1611 = vld [vmem:[%s3] sm:$0xf]
  %v1612 = vld [vmem:[%s3 + $0x4] sm:$0xf]
  %v1613 = vld [vmem:[%s3 + $0x8] sm:$0xf]
  %v1614 = vld [vmem:[%s3 + $0xc] sm:$0xf]
  %v1615 = vld [vmem:[%s3 + $0x10] sm:$0xf]
  %v1616 = vld [vmem:[%s3 + $0x14] sm:$0xf]
  %v1617 = vld [vmem:[%s3 + $0x18] sm:$0xf]
  %v1618 = vld [vmem:[%s3 + $0x1c] sm:$0xf]
  %v1619 = vld [vmem:[%s3 + $0x20] sm:$0xf]
  %v1620 = vld [vmem:[%s3 + $0x24] sm:$0xf]
  %v1621 = vld [vmem:[%s3 + $0x28] sm:$0xf]
  %v1622 = vld [vmem:[%s3 + $0x2c] sm:$0xf]
  %v1623 = vld [vmem:[%s3 + $0x30] sm:$0xf]
  %v1624 = vld [vmem:[%s3 + $0x34] sm:$0xf]
  %v1625 = vld [vmem:[%s3 + $0x38] sm:$0xf]
  %v1626 = vld [vmem:[%s3 + $0x3c] sm:$0xf]
  %v1627 = vld [vmem:[%s3 + $0x40] sm:$0xf]
  %v1628 = vld [vmem:[%s3 + $0x44] sm:$0xf]
  %v1629 = vld [vmem:[%s3 + $0x48] sm:$0xf]
  %v1630 = vld [vmem:[%s3 + $0x4c] sm:$0xf]
  %v1631 = vld [vmem:[%s3 + $0x50] sm:$0xf]
  %v1632 = vld [vmem:[%s3 + $0x54] sm:$0xf]
  %v1633 = vld [vmem:[%s3 + $0x58] sm:$0xf]
  %v1634 = vld [vmem:[%s3 + $0x5c] sm:$0xf]
  %v1635 = vld [vmem:[%s3 + $0x60] sm:$0xf]
  %v1636 = vld [vmem:[%s3 + $0x64] sm:$0xf]
  %v1637 = vld [vmem:[%s3 + $0x68] sm:$0xf]
  %v1638 = vld [vmem:[%s3 + $0x6c] sm:$0xf]
  %v1639 = vld [vmem:[%s3 + $0x70] sm:$0xf]
  %v1640 = vld [vmem:[%s3 + $0x74] sm:$0xf]
  %v1641 = vld [vmem:[%s3 + $0x78] sm:$0xf]
  %v1642 = vld [vmem:[%s3 + $0x7c] sm:$0xf]
  %v1643 = vld [vmem:[%s3 + $0x80] sm:$0xf]
  %v1644 = vld [vmem:[%s3 + $0x84] sm:$0xf]
  %v1645 = vld [vmem:[%s3 + $0x88] sm:$0xf]
  %v1646 = vld [vmem:[%s3 + $0x8c] sm:$0xf]
  %v1647 = vld [vmem:[%s3 + $0x90] sm:$0xf]
  %v1648 = vld [vmem:[%s3 + $0x94] sm:$0xf]
  %v1649 = vld [vmem:[%s3 + $0x98] sm:$0xf]
  %v1650 = vld [vmem:[%s3 + $0x9c] sm:$0xf]
  %v1651 = vld [vmem:[%s3 + $0xa0] sm:$0xf]
  %v1652 = vld [vmem:[%s3 + $0xa4] sm:$0xf]
  %v1653 = vld [vmem:[%s3 + $0xa8] sm:$0xf]
  %v1654 = vld [vmem:[%s3 + $0xac] sm:$0xf]
  %v1655 = vld [vmem:[%s3 + $0xb0] sm:$0xf]
  %v1656 = vld [vmem:[%s3 + $0xb4] sm:$0xf]
  %v1657 = vld [vmem:[%s3 + $0xb8] sm:$0xf]
  %v1658 = vld [vmem:[%s3 + $0xbc] sm:$0xf]
  %v1659 = vld [vmem:[%s3 + $0xc0] sm:$0xf]
  %v1660 = vld [vmem:[%s3 + $0xc4] sm:$0xf]
  %v1661 = vld [vmem:[%s3 + $0xc8] sm:$0xf]
  %v1662 = vld [vmem:[%s3 + $0xcc] sm:$0xf]
  %v1663 = vld [vmem:[%s3 + $0xd0] sm:$0xf]
  %v1664 = vld [vmem:[%s3 + $0xd4] sm:$0xf]
  %v1665 = vld [vmem:[%s3 + $0xd8] sm:$0xf]
  %v1666 = vld [vmem:[%s3 + $0xdc] sm:$0xf]
  %v1667 = vld [vmem:[%s3 + $0xe0] sm:$0xf]
  %v1668 = vld [vmem:[%s3 + $0xe4] sm:$0xf]
  %v1669 = vld [vmem:[%s3 + $0xe8] sm:$0xf]
  %v1670 = vld [vmem:[%s3 + $0xec] sm:$0xf]
  %v1671 = vld [vmem:[%s3 + $0xf0] sm:$0xf]
  %v1672 = vld [vmem:[%s3 + $0xf4] sm:$0xf]
  %v1673 = vld [vmem:[%s3 + $0xf8] sm:$0x3]
  %v1674 = vld [vmem:[%s4] sm:$0x1]
  %v1676 = vlaneseq
  %v1677 = vshrl.u32 %v1676, 7
  %v1678 = vsub.s32 0, %v1677
  %v1679 = vrot.slane %v1674, %v1678
  %v1744 = vunpack.c.l.b16 %v1611
  %v1745 = vunpack.c.l.b16 %v1612
  %v1746 = vunpack.c.l.b16 %v1613
  %v1747 = vunpack.c.l.b16 %v1614
  %v1748 = vunpack.c.l.b16 %v1615
  %v1749 = vunpack.c.l.b16 %v1616
  %v1750 = vunpack.c.l.b16 %v1617
  %v1751 = vunpack.c.l.b16 %v1618
  %v1752 = vunpack.c.l.b16 %v1619
  %v1753 = vunpack.c.l.b16 %v1620
  %v1754 = vunpack.c.l.b16 %v1621
  %v1755 = vunpack.c.l.b16 %v1622
  %v1756 = vunpack.c.l.b16 %v1623
  %v1757 = vunpack.c.l.b16 %v1624
  %v1758 = vunpack.c.l.b16 %v1625
  %v1759 = vunpack.c.l.b16 %v1626
  %v1760 = vunpack.c.l.b16 %v1627
  %v1761 = vunpack.c.l.b16 %v1628
  %v1762 = vunpack.c.l.b16 %v1629
  %v1763 = vunpack.c.l.b16 %v1630
  %v1764 = vunpack.c.l.b16 %v1631
  %v1765 = vunpack.c.l.b16 %v1632
  %v1766 = vunpack.c.l.b16 %v1633
  %v1767 = vunpack.c.l.b16 %v1634
  %v1768 = vunpack.c.l.b16 %v1635
  %v1769 = vunpack.c.l.b16 %v1636
  %v1770 = vunpack.c.l.b16 %v1637
  %v1771 = vunpack.c.l.b16 %v1638
  %v1772 = vunpack.c.l.b16 %v1639
  %v1773 = vunpack.c.l.b16 %v1640
  %v1774 = vunpack.c.l.b16 %v1641
  %v1775 = vunpack.c.l.b16 %v1642
  %v1776 = vunpack.c.l.b16 %v1643
  %v1777 = vunpack.c.l.b16 %v1644
  %v1778 = vunpack.c.l.b16 %v1645
  %v1779 = vunpack.c.l.b16 %v1646
  %v1780 = vunpack.c.l.b16 %v1647
  %v1781 = vunpack.c.l.b16 %v1648
  %v1782 = vunpack.c.l.b16 %v1649
  %v1783 = vunpack.c.l.b16 %v1650
  %v1784 = vunpack.c.l.b16 %v1651
  %v1785 = vunpack.c.l.b16 %v1652
  %v1786 = vunpack.c.l.b16 %v1653
  %v1787 = vunpack.c.l.b16 %v1654
  %v1788 = vunpack.c.l.b16 %v1655
  %v1789 = vunpack.c.l.b16 %v1656
  %v1790 = vunpack.c.l.b16 %v1657
  %v1791 = vunpack.c.l.b16 %v1658
  %v1792 = vunpack.c.l.b16 %v1659
  %v1793 = vunpack.c.l.b16 %v1660
  %v1794 = vunpack.c.l.b16 %v1661
  %v1795 = vunpack.c.l.b16 %v1662
  %v1796 = vunpack.c.l.b16 %v1663
  %v1797 = vunpack.c.l.b16 %v1664
  %v1798 = vunpack.c.l.b16 %v1665
  %v1799 = vunpack.c.l.b16 %v1666
  %v1800 = vunpack.c.l.b16 %v1667
  %v1801 = vunpack.c.l.b16 %v1668
  %v1802 = vunpack.c.l.b16 %v1669
  %v1803 = vunpack.c.l.b16 %v1670
  %v1804 = vunpack.c.l.b16 %v1671
  %v1805 = vunpack.c.l.b16 %v1672
  %v1806 = vunpack.c.l.b16 %v1673
  %v1807 = vpack.c.b16 %v1745, %v1744
  %v1808 = vpack.c.b16 %v1747, %v1746
  %v1809 = vpack.c.b16 %v1749, %v1748
  %v1810 = vpack.c.b16 %v1751, %v1750
  %v1811 = vpack.c.b16 %v1753, %v1752
  %v1812 = vpack.c.b16 %v1755, %v1754
  %v1813 = vpack.c.b16 %v1757, %v1756
  %v1814 = vpack.c.b16 %v1759, %v1758
  %v1815 = vpack.c.b16 %v1761, %v1760
  %v1816 = vpack.c.b16 %v1763, %v1762
  %v1817 = vpack.c.b16 %v1765, %v1764
  %v1818 = vpack.c.b16 %v1767, %v1766
  %v1819 = vpack.c.b16 %v1769, %v1768
  %v1820 = vpack.c.b16 %v1771, %v1770
  %v1821 = vpack.c.b16 %v1773, %v1772
  %v1822 = vpack.c.b16 %v1775, %v1774
  %v1823 = vpack.c.b16 %v1777, %v1776
  %v1824 = vpack.c.b16 %v1779, %v1778
  %v1825 = vpack.c.b16 %v1781, %v1780
  %v1826 = vpack.c.b16 %v1783, %v1782
  %v1827 = vpack.c.b16 %v1785, %v1784
  %v1828 = vpack.c.b16 %v1787, %v1786
  %v1829 = vpack.c.b16 %v1789, %v1788
  %v1830 = vpack.c.b16 %v1791, %v1790
  %v1831 = vpack.c.b16 %v1793, %v1792
  %v1832 = vpack.c.b16 %v1795, %v1794
  %v1833 = vpack.c.b16 %v1797, %v1796
  %v1834 = vpack.c.b16 %v1799, %v1798
  %v1835 = vpack.c.b16 %v1801, %v1800
  %v1836 = vpack.c.b16 %v1803, %v1802
  %v1837 = vpack.c.b16 %v1805, %v1804
  %v1838 = vpack.c.b16 %v1806, %v1806
  %vm1870 = vcmask 949248
  %v1872 = vsel %vm1870, %v1610, 0
  %vm1874 = vcmask 1041408
  %v1876 = vsel %vm1874, %v1838, 0
  %1878 = vmatprep.subr.bf16.mxu0 0
  %1879 = vmatpush1.bf16.msra.mxu0 %v1807
  %1880 = vmatprep.subr.bf16.mxu0 0
  %1881 = vmatpush1.bf16.msra.mxu0 %v1808
  %1882 = vmatprep.subr.bf16.mxu0 0
  %1883 = vmatpush1.bf16.msra.mxu0 %v1809
  %1884 = vmatprep.subr.bf16.mxu0 0
  %1885 = vmatpush1.bf16.msra.mxu0 %v1810
  %1886 = vmatprep.subr.bf16.mxu0 0
  %1887 = vmatpush1.bf16.msra.mxu0 %v1811
  %1888 = vmatprep.subr.bf16.mxu0 0
  %1889 = vmatpush1.bf16.msra.mxu0 %v1812
  %1890 = vmatprep.subr.bf16.mxu0 0
  %1891 = vmatpush1.bf16.msra.mxu0 %v1813
  %1892 = vmatprep.subr.bf16.mxu0 0
  %1893 = vmatpush1.bf16.msra.mxu0 %v1814
  %1894 = vmatprep.subr.bf16.mxu0 0
  %1895 = vmatpush1.bf16.msra.mxu0 %v1815
  %1896 = vmatprep.subr.bf16.mxu0 0
  %1897 = vmatpush1.bf16.msra.mxu0 %v1816
  %1898 = vmatprep.subr.bf16.mxu0 0
  %1899 = vmatpush1.bf16.msra.mxu0 %v1817
  %1900 = vmatprep.subr.bf16.mxu0 0
  %1901 = vmatpush1.bf16.msra.mxu0 %v1818
  %1902 = vmatprep.subr.bf16.mxu0 0
  %1903 = vmatpush1.bf16.msra.mxu0 %v1819
  %1904 = vmatprep.subr.bf16.mxu0 0
  %1905 = vmatpush1.bf16.msra.mxu0 %v1820
  %1906 = vmatprep.subr.bf16.mxu0 0
  %1907 = vmatpush1.bf16.msra.mxu0 %v1821
  %1908 = vmatprep.subr.bf16.mxu0 0
  %1909 = vmatpush1.bf16.msra.mxu0 %v1822
  %1910 = vmatprep.mubr.bf16.mxu0 %v1608
  %1911 = vmatmul.mubr.bf16.gmra.mrb[0].mxu0 %v1607
  %v1912 = vpop.f32.mrb[0].mxu0
  %v1913 = vadd.f32 %v1679, %v1912
  %v1914 = vpop.f32.mrb[0].mxu0
  %v1915 = vpop.f32.mrb[0].mxu0
  %v1916 = vpop.f32.mrb[0].mxu0
  %1917 = vdwg.mxu0
  %1918 = vmatprep.subr.bf16.mxu0 0
  %1919 = vmatpush1.bf16.msra.mxu0 %v1823
  %1920 = vmatprep.subr.bf16.mxu0 0
  %1921 = vmatpush1.bf16.msra.mxu0 %v1824
  %1922 = vmatprep.subr.bf16.mxu0 0
  %1923 = vmatpush1.bf16.msra.mxu0 %v1825
  %1924 = vmatprep.subr.bf16.mxu0 0
  %1925 = vmatpush1.bf16.msra.mxu0 %v1826
  %1926 = vmatprep.subr.bf16.mxu0 0
  %1927 = vmatpush1.bf16.msra.mxu0 %v1827
  %1928 = vmatprep.subr.bf16.mxu0 0
  %1929 = vmatpush1.bf16.msra.mxu0 %v1828
  %1930 = vmatprep.subr.bf16.mxu0 0
  %1931 = vmatpush1.bf16.msra.mxu0 %v1829
  %1932 = vmatprep.subr.bf16.mxu0 0
  %1933 = vmatpush1.bf16.msra.mxu0 %v1830
  %1934 = vmatprep.subr.bf16.mxu0 0
  %1935 = vmatpush1.bf16.msra.mxu0 %v1831
  %1936 = vmatprep.subr.bf16.mxu0 0
  %1937 = vmatpush1.bf16.msra.mxu0 %v1832
  %1938 = vmatprep.subr.bf16.mxu0 0
  %1939 = vmatpush1.bf16.msra.mxu0 %v1833
  %1940 = vmatprep.subr.bf16.mxu0 0
  %1941 = vmatpush1.bf16.msra.mxu0 %v1834
  %1942 = vmatprep.subr.bf16.mxu0 0
  %1943 = vmatpush1.bf16.msra.mxu0 %v1835
  %1944 = vmatprep.subr.bf16.mxu0 0
  %1945 = vmatpush1.bf16.msra.mxu0 %v1836
  %1946 = vmatprep.subr.bf16.mxu0 0
  %1947 = vmatpush1.bf16.msra.mxu0 %v1837
  %1948 = vmatprep.subr.bf16.mxu0 0
  %1949 = vmatpush1.bf16.msra.mxu0 %v1876
  %1950 = vmatprep.mubr.bf16.mxu0 %v1872
  %1951 = vmatmul.mubr.bf16.gmra.mrb[0].mxu0 %v1609
  %v1952 = vpop.f32.mrb[0].mxu0
  %v1953 = vadd.f32 %v1913, %v1952
  %v1954 = vpop.f32.mrb[0].mxu0
  %v1955 = vpop.f32.mrb[0].mxu0
  %v1956 = vpop.f32.mrb[0].mxu0
  %1957 = vdwg.mxu0
  %v1958 = vmax.f32 %v1953, 0.0
  %1959 = vst [vmem:[%s5] sm:$0xff] %v1958
  // Predicated region
  $region22: #{lenet_forward.5} parent=0 // pred_check
    _
  $region23: #{lenet_forward.5} parent=0 // pred_check_branch
    %1961 = sbr.rel (0) target = $region25
  $region24: #{lenet_forward.5} parent=0 // pred_region
    _
  $region25: #{lenet_forward.5} parent=0 // pred_fallthru
    _
  // Predicated region
  $region26: #{lenet_forward.5} parent=0 // pred_check
    _
  $region27: #{lenet_forward.5} parent=0 // pred_check_branch
    %1963 = sbr.rel (0) target = $region29
  $region28: #{lenet_forward.5} parent=0 // pred_region
    _
  $region29: #{lenet_forward.5} parent=0 // pred_fallthru
    _

</llo_original>
